<compile_context>
chip_gen: v7x
topology: tpu7x:2x2x1
jax: 0.10.0
libtpu: 0.0.40
codegen_flags: <defaults>
</compile_context>

<pallas_src>
import math

import jax
import jax.numpy as jnp
from jax import lax
from jax.experimental import pallas as pl
from jax.experimental.pallas import tpu as pltpu

B = 2                               # batch
IMG_C, IMG_H, IMG_W = 3, 28, 28     # 28 -> conv5 -> 24 -> pool -> 12 -> conv5 -> 8 -> pool -> 4
KSZ = 5
C1, C2 = 5, 5
H1, W1 = IMG_H - KSZ + 1, IMG_W - KSZ + 1      # 24, 24
HP1, WP1 = H1 // 2, W1 // 2                    # 12, 12
H2, W2 = HP1 - KSZ + 1, WP1 - KSZ + 1          # 8, 8
HP2, WP2 = H2 // 2, W2 // 2                    # 4, 4
CONV1_W = (B - 1) * IMG_W + W1                 # 52 (batch folded into lanes)
CONV2_W = (B - 1) * WP1 + W2                   # 20
F32 = jnp.float32


# ------------------------- host-side operand packing -------------------------

def _band_conv_weight(w, hin):
    """OIHW conv weight -> (K, cout*hout, cin*hin) banded matrices, one per kw.

    band[kw, co*hout+ho, ci*hin+h] = w[co, ci, h-ho, kw]  for 0 <= h-ho < K.
    """
    cout, cin, k, _ = w.shape
    hout = hin - k + 1
    kh = jnp.arange(hin)[None, :] - jnp.arange(hout)[:, None]     # (hout, hin)
    valid = ((kh >= 0) & (kh < k)).astype(F32)
    kh_c = jnp.clip(kh, 0, k - 1)
    wt = jnp.transpose(w, (3, 0, 1, 2)).astype(F32)               # (kw, cout, cin, kh)
    band = wt[:, :, :, kh_c] * valid[None, None, None]            # (kw, cout, cin, hout, hin)
    band = jnp.transpose(band, (0, 1, 3, 2, 4))                   # (kw, cout, hout, cin, hin)
    return band.reshape(k, cout * hout, cin * hin)


def _pool_sel_w(nrows, stride, wout):
    """0/1 lane-decimation matrix: column (b,wp) selects pair-max lane b*stride+2*wp."""
    col = jnp.arange(B * wout)
    src = (col // wout) * stride + 2 * (col % wout)
    return (jnp.arange(nrows)[:, None] == src[None, :]).astype(F32)


def _pool_sel_h(c, hin):
    """0/1 row-decimation matrix: row (co,hp) selects pair-max row co*hin+2*hp."""
    hout = hin // 2
    row = jnp.arange(c * hout)
    src = (row // hout) * hin + 2 * (row % hout)
    return (src[:, None] == jnp.arange(c * hin - 1)[None, :]).astype(F32)


def _build_blocks(img, s1, a_tgt, p):
    blocks = []

    def add(name, arr):
        blocks.append((name, arr.astype(F32)))

    # x[0]: NCHW -> (Cin*H, B*W)  [rows = (ci, h), lanes = (b, w)]
    add("x1", jnp.transpose(img, (1, 2, 0, 3)).reshape(IMG_C * IMG_H, B * IMG_W))

    a1 = _band_conv_weight(p["c1w"], IMG_H)              # (5, 120, 84)
    for kw in range(KSZ):
        add(f"a1_{kw}", a1[kw])
    add("b1e", jnp.repeat(p["c1b"], H1).reshape(C1 * H1, 1))

    a2 = _band_conv_weight(p["c2w"], HP1)                # (5, 40, 60)
    for kw in range(KSZ):
        add(f"a2_{kw}", a2[kw])
    add("b2e", jnp.repeat(p["c2b"], H2).reshape(C2 * H2, 1))

    add("selw1", _pool_sel_w(CONV1_W - 1, IMG_W, WP1))   # (51, 24)
    add("selh1", _pool_sel_h(C1, H1))                    # (60, 119)
    add("selw2", _pool_sel_w(CONV2_W - 1, WP1, WP2))     # (19, 8)
    add("selh2", _pool_sel_h(C2, H2))                    # (20, 39)

    # fc1 with the torch flatten (c,h,w order) folded into column-strided blocks:
    # feat[4r+w] = p2[r, 4b+w]  ->  h1 = sum_w fc1w[:, w::4] @ (p2 @ selb_w)
    for w in range(WP2):
        add(f"fc1w_{w}", p["fc1w"][:, w::WP2])           # (20, 20)
        add(f"selb_{w}", (jnp.arange(B * WP2)[:, None]
                          == (WP2 * jnp.arange(B)[None, :] + w)).astype(F32))  # (8, 2)
    add("fc1b", p["fc1b"].reshape(-1, 1))
    add("fc2w", p["fc2w"]); add("fc2b", p["fc2b"].reshape(-1, 1))
    add("fc3w", p["fc3w"]); add("fc3b", p["fc3b"].reshape(-1, 1))

    # encoder / decoder: concatenation folded into weight splits
    add("e1w_img", p["e1w"][:, 0:6]); add("e1w_s1", p["e1w"][:, 6:13]); add("e1w_at", p["e1w"][:, 13:20])
    add("e1b", p["e1b"].reshape(-1, 1))
    add("e2w", p["e2w"]); add("e2b", p["e2b"].reshape(-1, 1))
    add("e3w", p["e3w"]); add("e3b", p["e3b"].reshape(-1, 1))

    add("d1w_img", p["d1w"][:, 0:6]); add("d1w_s1", p["d1w"][:, 6:13]); add("d1w_z", p["d1w"][:, 13:14])
    add("d1b", p["d1b"].reshape(-1, 1))
    add("d2w", p["d2w"]); add("d2b", p["d2b"].reshape(-1, 1))
    add("d3w", p["d3w"]); add("d3b", p["d3b"].reshape(-1, 1))

    add("s1T", s1.T)       # (7, B)
    add("atT", a_tgt.T)    # (7, B)
    return blocks


def _pack(blocks):
    """Pack all 2-D operands into one (rows, 128) f32 slab (8-row aligned)."""
    layout = {}
    padded = []
    off = 0
    for name, arr in blocks:
        r, c = arr.shape
        rpad = -(-r // 8) * 8
        layout[name] = (off, r, c)
        padded.append(jnp.pad(arr, ((0, rpad - r), (0, 128 - c))))
        off += rpad
    return jnp.concatenate(padded, axis=0), layout


# --------------------------------- kernel -----------------------------------

def _make_kernel(layout):
    def ld_from(ref, name):
        off, r, c = layout[name]
        return ref[pl.ds(off, r), pl.ds(0, c)]

    def kernel(slab_ref, out_ref):
        ld = lambda name: ld_from(slab_ref, name)
        dot = lambda a, b: jnp.dot(a, b, preferred_element_type=F32)

        # ---------- conv1 + relu (banded-weight MXU matmul, batch on lanes) ----------
        x1 = ld("x1")                                            # (84, 56)
        acc = dot(ld("a1_0"), x1[:, 0:CONV1_W])
        for kw in range(1, KSZ):
            acc = acc + dot(ld(f"a1_{kw}"), x1[:, kw:kw + CONV1_W])
        c1 = jnp.maximum(acc + ld("b1e"), 0.0)                   # (120, 52)

        # ---------- maxpool 2x2 (pairwise max + decimation matmuls) ----------
        m = jnp.maximum(c1[:, 0:CONV1_W - 1], c1[:, 1:CONV1_W])  # (120, 51)
        pw = dot(m, ld("selw1"))                                 # (120, 24)
        mh = jnp.maximum(pw[0:C1 * H1 - 1, :], pw[1:C1 * H1, :]) # (119, 24)
        p1 = dot(ld("selh1"), mh)                                # (60, 24)  rows=(ci,h) lanes=(b,w)

        # ---------- conv2 + relu ----------
        acc2 = dot(ld("a2_0"), p1[:, 0:CONV2_W])
        for kw in range(1, KSZ):
            acc2 = acc2 + dot(ld(f"a2_{kw}"), p1[:, kw:kw + CONV2_W])
        c2 = jnp.maximum(acc2 + ld("b2e"), 0.0)                  # (40, 20)

        # ---------- maxpool 2x2 ----------
        m2 = jnp.maximum(c2[:, 0:CONV2_W - 1], c2[:, 1:CONV2_W]) # (40, 19)
        pw2 = dot(m2, ld("selw2"))                               # (40, 8)
        mh2 = jnp.maximum(pw2[0:C2 * H2 - 1, :], pw2[1:C2 * H2, :])  # (39, 8)
        p2 = dot(ld("selh2"), mh2)                               # (20, 8)  rows=(c,hp) lanes=(b,wp)

        # ---------- image fc head (features x batch; flatten folded into fc1) ----------
        h1 = dot(ld("fc1w_0"), dot(p2, ld("selb_0")))
        for w in range(1, WP2):
            h1 = h1 + dot(ld(f"fc1w_{w}"), dot(p2, ld(f"selb_{w}")))
        h1 = jnp.maximum(h1 + ld("fc1b"), 0.0)                   # (20, B)
        h2 = jnp.maximum(dot(ld("fc2w"), h1) + ld("fc2b"), 0.0)  # (10, B)
        img_feat = dot(ld("fc3w"), h2) + ld("fc3b")              # (6, B)

        s1 = ld("s1T")                                           # (7, B)
        at = ld("atT")                                           # (7, B)

        # ---------- encoder (concat folded into split weights) ----------
        e1 = jnp.tanh(dot(ld("e1w_img"), img_feat) + dot(ld("e1w_s1"), s1)
                      + dot(ld("e1w_at"), at) + ld("e1b"))       # (30, B)
        e2 = jnp.tanh(dot(ld("e2w"), e1) + ld("e2b"))            # (30, B)
        z = dot(ld("e3w"), e2) + ld("e3b")                       # (1, B)

        # ---------- decoder (image(x0) reused; identical input) ----------
        d1 = jnp.tanh(dot(ld("d1w_img"), img_feat) + dot(ld("d1w_s1"), s1)
                      + ld("d1w_z") * z + ld("d1b"))             # (30, B)
        d2 = jnp.tanh(dot(ld("d2w"), d1) + ld("d2b"))            # (30, B)
        a = dot(ld("d3w"), d2) + ld("d3b")                       # (7, B)

        # ---------- MSE(a, x[2]) ----------
        diff = a - at
        sq = diff * diff
        tot = jnp.sum(jnp.sum(sq, axis=1, keepdims=True), axis=0, keepdims=True)
        out_ref[...] = tot * (1.0 / float(B * 7))

    return kernel


# --------------------------------- wrapper ----------------------------------

@jax.jit
def cae_forward(img, s1, a_tgt, params):
    blocks = _build_blocks(img.astype(F32), s1.astype(F32), a_tgt.astype(F32), params)
    slab, layout = _pack(blocks)
    out = pl.pallas_call(
        _make_kernel(layout),
        out_shape=jax.ShapeDtypeStruct((1, 1), F32),
        in_specs=[pl.BlockSpec(memory_space=pltpu.MemorySpace.VMEM)],
        out_specs=pl.BlockSpec(memory_space=pltpu.MemorySpace.VMEM),
    )(slab)
    return out[0, 0]


# ----------------------- deterministic parameter init -----------------------

def init_params(key):
    keys = jax.random.split(key, 22)

    def lin(kw, kb, out_f, in_f):
        bound = 1.0 / math.sqrt(in_f)
        w = jax.random.uniform(kw, (out_f, in_f), F32, -bound, bound)
        b = jax.random.uniform(kb, (out_f,), F32, -bound, bound)
        return w, b

    def convp(kw, kb, out_c, in_c, k):
        bound = 1.0 / math.sqrt(in_c * k * k)
        w = jax.random.uniform(kw, (out_c, in_c, k, k), F32, -bound, bound)
        b = jax.random.uniform(kb, (out_c,), F32, -bound, bound)
        return w, b

    p = {}
    p["c1w"], p["c1b"] = convp(keys[0], keys[1], 5, 3, 5)
    p["c2w"], p["c2b"] = convp(keys[2], keys[3], 5, 5, 5)
    p["fc1w"], p["fc1b"] = lin(keys[4], keys[5], 20, 80)
    p["fc2w"], p["fc2b"] = lin(keys[6], keys[7], 10, 20)
    p["fc3w"], p["fc3b"] = lin(keys[8], keys[9], 6, 10)
    p["e1w"], p["e1b"] = lin(keys[10], keys[11], 30, 20)
    p["e2w"], p["e2b"] = lin(keys[12], keys[13], 30, 30)
    p["e3w"], p["e3b"] = lin(keys[14], keys[15], 1, 30)
    p["d1w"], p["d1b"] = lin(keys[16], keys[17], 30, 14)
    p["d2w"], p["d2b"] = lin(keys[18], keys[19], 30, 30)
    p["d3w"], p["d3b"] = lin(keys[20], keys[21], 7, 30)
    return p


# --------------------------- plain-JAX reference ----------------------------

def ref_forward(img, s1, a_tgt, p):
    hi = lax.Precision.HIGHEST

    def conv(x, w, b):
        y = lax.conv_general_dilated(x, w, window_strides=(1, 1), padding="VALID",
                                     dimension_numbers=("NCHW", "OIHW", "NCHW"),
                                     precision=hi)
        return y + b[None, :, None, None]

    def pool(x):
        return lax.reduce_window(x, -jnp.inf, lax.max, (1, 1, 2, 2), (1, 1, 2, 2), "VALID")

    def dense(x, w, b):
        return jnp.dot(x, w.T, precision=hi) + b

    h = pool(jax.nn.relu(conv(img, p["c1w"], p["c1b"])))
    h = pool(jax.nn.relu(conv(h, p["c2w"], p["c2b"])))
    f = h.reshape(h.shape[0], -1)
    f = jax.nn.relu(dense(f, p["fc1w"], p["fc1b"]))
    f = jax.nn.relu(dense(f, p["fc2w"], p["fc2b"]))
    img_feat = dense(f, p["fc3w"], p["fc3b"])

    xe = jnp.concatenate([img_feat, s1, a_tgt], axis=1)
    e1 = jnp.tanh(dense(xe, p["e1w"], p["e1b"]))
    e2 = jnp.tanh(dense(e1, p["e2w"], p["e2b"]))
    z = dense(e2, p["e3w"], p["e3b"])

    xd = jnp.concatenate([img_feat, s1, z], axis=1)
    d1 = jnp.tanh(dense(xd, p["d1w"], p["d1b"]))
    d2 = jnp.tanh(dense(d1, p["d2w"], p["d2b"]))
    a = dense(d2, p["d3w"], p["d3b"])
    return jnp.mean((a - a_tgt) ** 2)


# ----------------------------------- main ------------------------------------

if __name__ == "__main__":
    key = jax.random.PRNGKey(0)
    kimg, ks, ka, kp = jax.random.split(key, 4)
    img = jax.random.normal(kimg, (B, IMG_C, IMG_H, IMG_W), F32)   # x[0]
    s1 = jax.random.normal(ks, (B, 7), F32)                        # x[1]
    a_tgt = jax.random.normal(ka, (B, 7), F32)                     # x[2]
    params = init_params(kp)

    loss = cae_forward(img, s1, a_tgt, params)
    jax.block_until_ready(loss)

    ref = ref_forward(img, s1, a_tgt, params)
    assert bool(jnp.isfinite(loss)), "non-finite loss from kernel"
    # tolerance accounts for MXU default-precision matmuls vs HIGHEST-precision reference
    if abs(float(loss) - float(ref)) > 3e-2 * max(1.0, abs(float(ref))):
        raise AssertionError(f"mismatch: kernel={float(loss)} ref={float(ref)}")
    print("KERNEL_OK")
</pallas_src>

<mosaic_0001>
module attributes {stable_mosaic.version = 11 : i64} {
  func.func @kernel(%arg0: memref<1848x128xf32, #tpu.memory_space<vmem>>, %arg1: memref<1x1xf32, #tpu.memory_space<vmem>>) attributes {dimension_semantics = [], scalar_prefetch = 0 : i64, scratch_operands = 0 : i64, tpu.core_type = #tpu.core_type<tc>} {
    %c0 = arith.constant 0 : index
    %c0_0 = arith.constant 0 : index
    %0 = vector.load %arg0[%c0, %c0_0] : memref<1848x128xf32, #tpu.memory_space<vmem>>, vector<84x56xf32>
    %c88 = arith.constant 88 : index
    %c0_1 = arith.constant 0 : index
    %1 = vector.load %arg0[%c88, %c0_1] : memref<1848x128xf32, #tpu.memory_space<vmem>>, vector<120x84xf32>
    %2 = vector.extract_strided_slice %0 {offsets = [0, 0], sizes = [84, 52], strides = [1, 1]} : vector<84x56xf32> to vector<84x52xf32>
    %cst = arith.constant dense<0.000000e+00> : vector<120x52xf32>
    %3 = tpu.matmul %1, %2, %cst {dimension_numbers = #tpu.dot_dimension_numbers<[1], [0], [0], [1], [0, 0, 1, 1], [], []>} : vector<120x84xf32>, vector<84x52xf32>, vector<120x52xf32> -> vector<120x52xf32>
    %c208 = arith.constant 208 : index
    %c0_2 = arith.constant 0 : index
    %4 = vector.load %arg0[%c208, %c0_2] : memref<1848x128xf32, #tpu.memory_space<vmem>>, vector<120x84xf32>
    %5 = vector.extract_strided_slice %0 {offsets = [0, 1], sizes = [84, 52], strides = [1, 1]} : vector<84x56xf32> to vector<84x52xf32>
    %cst_3 = arith.constant dense<0.000000e+00> : vector<120x52xf32>
    %6 = tpu.matmul %4, %5, %cst_3 {dimension_numbers = #tpu.dot_dimension_numbers<[1], [0], [0], [1], [0, 0, 1, 1], [], []>} : vector<120x84xf32>, vector<84x52xf32>, vector<120x52xf32> -> vector<120x52xf32>
    %7 = arith.addf %3, %6 : vector<120x52xf32>
    %c328 = arith.constant 328 : index
    %c0_4 = arith.constant 0 : index
    %8 = vector.load %arg0[%c328, %c0_4] : memref<1848x128xf32, #tpu.memory_space<vmem>>, vector<120x84xf32>
    %9 = vector.extract_strided_slice %0 {offsets = [0, 2], sizes = [84, 52], strides = [1, 1]} : vector<84x56xf32> to vector<84x52xf32>
    %cst_5 = arith.constant dense<0.000000e+00> : vector<120x52xf32>
    %10 = tpu.matmul %8, %9, %cst_5 {dimension_numbers = #tpu.dot_dimension_numbers<[1], [0], [0], [1], [0, 0, 1, 1], [], []>} : vector<120x84xf32>, vector<84x52xf32>, vector<120x52xf32> -> vector<120x52xf32>
    %11 = arith.addf %7, %10 : vector<120x52xf32>
    %c448 = arith.constant 448 : index
    %c0_6 = arith.constant 0 : index
    %12 = vector.load %arg0[%c448, %c0_6] : memref<1848x128xf32, #tpu.memory_space<vmem>>, vector<120x84xf32>
    %13 = vector.extract_strided_slice %0 {offsets = [0, 3], sizes = [84, 52], strides = [1, 1]} : vector<84x56xf32> to vector<84x52xf32>
    %cst_7 = arith.constant dense<0.000000e+00> : vector<120x52xf32>
    %14 = tpu.matmul %12, %13, %cst_7 {dimension_numbers = #tpu.dot_dimension_numbers<[1], [0], [0], [1], [0, 0, 1, 1], [], []>} : vector<120x84xf32>, vector<84x52xf32>, vector<120x52xf32> -> vector<120x52xf32>
    %15 = arith.addf %11, %14 : vector<120x52xf32>
    %c568 = arith.constant 568 : index
    %c0_8 = arith.constant 0 : index
    %16 = vector.load %arg0[%c568, %c0_8] : memref<1848x128xf32, #tpu.memory_space<vmem>>, vector<120x84xf32>
    %17 = vector.extract_strided_slice %0 {offsets = [0, 4], sizes = [84, 52], strides = [1, 1]} : vector<84x56xf32> to vector<84x52xf32>
    %cst_9 = arith.constant dense<0.000000e+00> : vector<120x52xf32>
    %18 = tpu.matmul %16, %17, %cst_9 {dimension_numbers = #tpu.dot_dimension_numbers<[1], [0], [0], [1], [0, 0, 1, 1], [], []>} : vector<120x84xf32>, vector<84x52xf32>, vector<120x52xf32> -> vector<120x52xf32>
    %19 = arith.addf %15, %18 : vector<120x52xf32>
    %c688 = arith.constant 688 : index
    %c0_10 = arith.constant 0 : index
    %20 = vector.load %arg0[%c688, %c0_10] : memref<1848x128xf32, #tpu.memory_space<vmem>>, vector<120x1xf32>
    %21 = vector.broadcast %20 : vector<120x1xf32> to vector<120x52xf32>
    %22 = arith.addf %19, %21 : vector<120x52xf32>
    %cst_11 = arith.constant 0.000000e+00 : f32
    %23 = vector.broadcast %cst_11 : f32 to vector<120x52xf32>
    %24 = arith.maximumf %22, %23 : vector<120x52xf32>
    %25 = vector.extract_strided_slice %24 {offsets = [0, 0], sizes = [120, 51], strides = [1, 1]} : vector<120x52xf32> to vector<120x51xf32>
    %26 = vector.extract_strided_slice %24 {offsets = [0, 1], sizes = [120, 51], strides = [1, 1]} : vector<120x52xf32> to vector<120x51xf32>
    %27 = arith.maximumf %25, %26 : vector<120x51xf32>
    %c1048 = arith.constant 1048 : index
    %c0_12 = arith.constant 0 : index
    %28 = vector.load %arg0[%c1048, %c0_12] : memref<1848x128xf32, #tpu.memory_space<vmem>>, vector<51x24xf32>
    %cst_13 = arith.constant dense<0.000000e+00> : vector<120x24xf32>
    %29 = tpu.matmul %27, %28, %cst_13 {dimension_numbers = #tpu.dot_dimension_numbers<[1], [0], [0], [1], [0, 0, 1, 1], [], []>} : vector<120x51xf32>, vector<51x24xf32>, vector<120x24xf32> -> vector<120x24xf32>
    %30 = vector.extract_strided_slice %29 {offsets = [0, 0], sizes = [119, 24], strides = [1, 1]} : vector<120x24xf32> to vector<119x24xf32>
    %31 = vector.extract_strided_slice %29 {offsets = [1, 0], sizes = [119, 24], strides = [1, 1]} : vector<120x24xf32> to vector<119x24xf32>
    %32 = arith.maximumf %30, %31 : vector<119x24xf32>
    %c1104 = arith.constant 1104 : index
    %c0_14 = arith.constant 0 : index
    %33 = vector.load %arg0[%c1104, %c0_14] : memref<1848x128xf32, #tpu.memory_space<vmem>>, vector<60x119xf32>
    %cst_15 = arith.constant dense<0.000000e+00> : vector<60x24xf32>
    %34 = tpu.matmul %33, %32, %cst_15 {dimension_numbers = #tpu.dot_dimension_numbers<[1], [0], [0], [1], [0, 0, 1, 1], [], []>} : vector<60x119xf32>, vector<119x24xf32>, vector<60x24xf32> -> vector<60x24xf32>
    %c808 = arith.constant 808 : index
    %c0_16 = arith.constant 0 : index
    %35 = vector.load %arg0[%c808, %c0_16] : memref<1848x128xf32, #tpu.memory_space<vmem>>, vector<40x60xf32>
    %36 = vector.extract_strided_slice %34 {offsets = [0, 0], sizes = [60, 20], strides = [1, 1]} : vector<60x24xf32> to vector<60x20xf32>
    %cst_17 = arith.constant dense<0.000000e+00> : vector<40x20xf32>
    %37 = tpu.matmul %35, %36, %cst_17 {dimension_numbers = #tpu.dot_dimension_numbers<[1], [0], [0], [1], [0, 0, 1, 1], [], []>} : vector<40x60xf32>, vector<60x20xf32>, vector<40x20xf32> -> vector<40x20xf32>
    %c848 = arith.constant 848 : index
    %c0_18 = arith.constant 0 : index
    %38 = vector.load %arg0[%c848, %c0_18] : memref<1848x128xf32, #tpu.memory_space<vmem>>, vector<40x60xf32>
    %39 = vector.extract_strided_slice %34 {offsets = [0, 1], sizes = [60, 20], strides = [1, 1]} : vector<60x24xf32> to vector<60x20xf32>
    %cst_19 = arith.constant dense<0.000000e+00> : vector<40x20xf32>
    %40 = tpu.matmul %38, %39, %cst_19 {dimension_numbers = #tpu.dot_dimension_numbers<[1], [0], [0], [1], [0, 0, 1, 1], [], []>} : vector<40x60xf32>, vector<60x20xf32>, vector<40x20xf32> -> vector<40x20xf32>
    %41 = arith.addf %37, %40 : vector<40x20xf32>
    %c888 = arith.constant 888 : index
    %c0_20 = arith.constant 0 : index
    %42 = vector.load %arg0[%c888, %c0_20] : memref<1848x128xf32, #tpu.memory_space<vmem>>, vector<40x60xf32>
    %43 = vector.extract_strided_slice %34 {offsets = [0, 2], sizes = [60, 20], strides = [1, 1]} : vector<60x24xf32> to vector<60x20xf32>
    %cst_21 = arith.constant dense<0.000000e+00> : vector<40x20xf32>
    %44 = tpu.matmul %42, %43, %cst_21 {dimension_numbers = #tpu.dot_dimension_numbers<[1], [0], [0], [1], [0, 0, 1, 1], [], []>} : vector<40x60xf32>, vector<60x20xf32>, vector<40x20xf32> -> vector<40x20xf32>
    %45 = arith.addf %41, %44 : vector<40x20xf32>
    %c928 = arith.constant 928 : index
    %c0_22 = arith.constant 0 : index
    %46 = vector.load %arg0[%c928, %c0_22] : memref<1848x128xf32, #tpu.memory_space<vmem>>, vector<40x60xf32>
    %47 = vector.extract_strided_slice %34 {offsets = [0, 3], sizes = [60, 20], strides = [1, 1]} : vector<60x24xf32> to vector<60x20xf32>
    %cst_23 = arith.constant dense<0.000000e+00> : vector<40x20xf32>
    %48 = tpu.matmul %46, %47, %cst_23 {dimension_numbers = #tpu.dot_dimension_numbers<[1], [0], [0], [1], [0, 0, 1, 1], [], []>} : vector<40x60xf32>, vector<60x20xf32>, vector<40x20xf32> -> vector<40x20xf32>
    %49 = arith.addf %45, %48 : vector<40x20xf32>
    %c968 = arith.constant 968 : index
    %c0_24 = arith.constant 0 : index
    %50 = vector.load %arg0[%c968, %c0_24] : memref<1848x128xf32, #tpu.memory_space<vmem>>, vector<40x60xf32>
    %51 = vector.extract_strided_slice %34 {offsets = [0, 4], sizes = [60, 20], strides = [1, 1]} : vector<60x24xf32> to vector<60x20xf32>
    %cst_25 = arith.constant dense<0.000000e+00> : vector<40x20xf32>
    %52 = tpu.matmul %50, %51, %cst_25 {dimension_numbers = #tpu.dot_dimension_numbers<[1], [0], [0], [1], [0, 0, 1, 1], [], []>} : vector<40x60xf32>, vector<60x20xf32>, vector<40x20xf32> -> vector<40x20xf32>
    %53 = arith.addf %49, %52 : vector<40x20xf32>
    %c1008 = arith.constant 1008 : index
    %c0_26 = arith.constant 0 : index
    %54 = vector.load %arg0[%c1008, %c0_26] : memref<1848x128xf32, #tpu.memory_space<vmem>>, vector<40x1xf32>
    %55 = vector.broadcast %54 : vector<40x1xf32> to vector<40x20xf32>
    %56 = arith.addf %53, %55 : vector<40x20xf32>
    %cst_27 = arith.constant 0.000000e+00 : f32
    %57 = vector.broadcast %cst_27 : f32 to vector<40x20xf32>
    %58 = arith.maximumf %56, %57 : vector<40x20xf32>
    %59 = vector.extract_strided_slice %58 {offsets = [0, 0], sizes = [40, 19], strides = [1, 1]} : vector<40x20xf32> to vector<40x19xf32>
    %60 = vector.extract_strided_slice %58 {offsets = [0, 1], sizes = [40, 19], strides = [1, 1]} : vector<40x20xf32> to vector<40x19xf32>
    %61 = arith.maximumf %59, %60 : vector<40x19xf32>
    %c1168 = arith.constant 1168 : index
    %c0_28 = arith.constant 0 : index
    %62 = vector.load %arg0[%c1168, %c0_28] : memref<1848x128xf32, #tpu.memory_space<vmem>>, vector<19x8xf32>
    %cst_29 = arith.constant dense<0.000000e+00> : vector<40x8xf32>
    %63 = tpu.matmul %61, %62, %cst_29 {dimension_numbers = #tpu.dot_dimension_numbers<[1], [0], [0], [1], [0, 0, 1, 1], [], []>} : vector<40x19xf32>, vector<19x8xf32>, vector<40x8xf32> -> vector<40x8xf32>
    %64 = vector.extract_strided_slice %63 {offsets = [0, 0], sizes = [39, 8], strides = [1, 1]} : vector<40x8xf32> to vector<39x8xf32>
    %65 = vector.extract_strided_slice %63 {offsets = [1, 0], sizes = [39, 8], strides = [1, 1]} : vector<40x8xf32> to vector<39x8xf32>
    %66 = arith.maximumf %64, %65 : vector<39x8xf32>
    %c1192 = arith.constant 1192 : index
    %c0_30 = arith.constant 0 : index
    %67 = vector.load %arg0[%c1192, %c0_30] : memref<1848x128xf32, #tpu.memory_space<vmem>>, vector<20x39xf32>
    %cst_31 = arith.constant dense<0.000000e+00> : vector<20x8xf32>
    %68 = tpu.matmul %67, %66, %cst_31 {dimension_numbers = #tpu.dot_dimension_numbers<[1], [0], [0], [1], [0, 0, 1, 1], [], []>} : vector<20x39xf32>, vector<39x8xf32>, vector<20x8xf32> -> vector<20x8xf32>
    %c1216 = arith.constant 1216 : index
    %c0_32 = arith.constant 0 : index
    %69 = vector.load %arg0[%c1216, %c0_32] : memref<1848x128xf32, #tpu.memory_space<vmem>>, vector<20x20xf32>
    %c1240 = arith.constant 1240 : index
    %c0_33 = arith.constant 0 : index
    %70 = vector.load %arg0[%c1240, %c0_33] : memref<1848x128xf32, #tpu.memory_space<vmem>>, vector<8x2xf32>
    %cst_34 = arith.constant dense<0.000000e+00> : vector<20x2xf32>
    %71 = tpu.matmul %68, %70, %cst_34 {dimension_numbers = #tpu.dot_dimension_numbers<[1], [0], [0], [1], [0, 0, 1, 1], [], []>} : vector<20x8xf32>, vector<8x2xf32>, vector<20x2xf32> -> vector<20x2xf32>
    %cst_35 = arith.constant dense<0.000000e+00> : vector<20x2xf32>
    %72 = tpu.matmul %69, %71, %cst_35 {dimension_numbers = #tpu.dot_dimension_numbers<[1], [0], [0], [1], [0, 0, 1, 1], [], []>} : vector<20x20xf32>, vector<20x2xf32>, vector<20x2xf32> -> vector<20x2xf32>
    %c1248 = arith.constant 1248 : index
    %c0_36 = arith.constant 0 : index
    %73 = vector.load %arg0[%c1248, %c0_36] : memref<1848x128xf32, #tpu.memory_space<vmem>>, vector<20x20xf32>
    %c1272 = arith.constant 1272 : index
    %c0_37 = arith.constant 0 : index
    %74 = vector.load %arg0[%c1272, %c0_37] : memref<1848x128xf32, #tpu.memory_space<vmem>>, vector<8x2xf32>
    %cst_38 = arith.constant dense<0.000000e+00> : vector<20x2xf32>
    %75 = tpu.matmul %68, %74, %cst_38 {dimension_numbers = #tpu.dot_dimension_numbers<[1], [0], [0], [1], [0, 0, 1, 1], [], []>} : vector<20x8xf32>, vector<8x2xf32>, vector<20x2xf32> -> vector<20x2xf32>
    %cst_39 = arith.constant dense<0.000000e+00> : vector<20x2xf32>
    %76 = tpu.matmul %73, %75, %cst_39 {dimension_numbers = #tpu.dot_dimension_numbers<[1], [0], [0], [1], [0, 0, 1, 1], [], []>} : vector<20x20xf32>, vector<20x2xf32>, vector<20x2xf32> -> vector<20x2xf32>
    %77 = arith.addf %72, %76 : vector<20x2xf32>
    %c1280 = arith.constant 1280 : index
    %c0_40 = arith.constant 0 : index
    %78 = vector.load %arg0[%c1280, %c0_40] : memref<1848x128xf32, #tpu.memory_space<vmem>>, vector<20x20xf32>
    %c1304 = arith.constant 1304 : index
    %c0_41 = arith.constant 0 : index
    %79 = vector.load %arg0[%c1304, %c0_41] : memref<1848x128xf32, #tpu.memory_space<vmem>>, vector<8x2xf32>
    %cst_42 = arith.constant dense<0.000000e+00> : vector<20x2xf32>
    %80 = tpu.matmul %68, %79, %cst_42 {dimension_numbers = #tpu.dot_dimension_numbers<[1], [0], [0], [1], [0, 0, 1, 1], [], []>} : vector<20x8xf32>, vector<8x2xf32>, vector<20x2xf32> -> vector<20x2xf32>
    %cst_43 = arith.constant dense<0.000000e+00> : vector<20x2xf32>
    %81 = tpu.matmul %78, %80, %cst_43 {dimension_numbers = #tpu.dot_dimension_numbers<[1], [0], [0], [1], [0, 0, 1, 1], [], []>} : vector<20x20xf32>, vector<20x2xf32>, vector<20x2xf32> -> vector<20x2xf32>
    %82 = arith.addf %77, %81 : vector<20x2xf32>
    %c1312 = arith.constant 1312 : index
    %c0_44 = arith.constant 0 : index
    %83 = vector.load %arg0[%c1312, %c0_44] : memref<1848x128xf32, #tpu.memory_space<vmem>>, vector<20x20xf32>
    %c1336 = arith.constant 1336 : index
    %c0_45 = arith.constant 0 : index
    %84 = vector.load %arg0[%c1336, %c0_45] : memref<1848x128xf32, #tpu.memory_space<vmem>>, vector<8x2xf32>
    %cst_46 = arith.constant dense<0.000000e+00> : vector<20x2xf32>
    %85 = tpu.matmul %68, %84, %cst_46 {dimension_numbers = #tpu.dot_dimension_numbers<[1], [0], [0], [1], [0, 0, 1, 1], [], []>} : vector<20x8xf32>, vector<8x2xf32>, vector<20x2xf32> -> vector<20x2xf32>
    %cst_47 = arith.constant dense<0.000000e+00> : vector<20x2xf32>
    %86 = tpu.matmul %83, %85, %cst_47 {dimension_numbers = #tpu.dot_dimension_numbers<[1], [0], [0], [1], [0, 0, 1, 1], [], []>} : vector<20x20xf32>, vector<20x2xf32>, vector<20x2xf32> -> vector<20x2xf32>
    %87 = arith.addf %82, %86 : vector<20x2xf32>
    %c1344 = arith.constant 1344 : index
    %c0_48 = arith.constant 0 : index
    %88 = vector.load %arg0[%c1344, %c0_48] : memref<1848x128xf32, #tpu.memory_space<vmem>>, vector<20x1xf32>
    %89 = vector.broadcast %88 : vector<20x1xf32> to vector<20x2xf32>
    %90 = arith.addf %87, %89 : vector<20x2xf32>
    %cst_49 = arith.constant 0.000000e+00 : f32
    %91 = vector.broadcast %cst_49 : f32 to vector<20x2xf32>
    %92 = arith.maximumf %90, %91 : vector<20x2xf32>
    %c1368 = arith.constant 1368 : index
    %c0_50 = arith.constant 0 : index
    %93 = vector.load %arg0[%c1368, %c0_50] : memref<1848x128xf32, #tpu.memory_space<vmem>>, vector<10x20xf32>
    %cst_51 = arith.constant dense<0.000000e+00> : vector<10x2xf32>
    %94 = tpu.matmul %93, %92, %cst_51 {dimension_numbers = #tpu.dot_dimension_numbers<[1], [0], [0], [1], [0, 0, 1, 1], [], []>} : vector<10x20xf32>, vector<20x2xf32>, vector<10x2xf32> -> vector<10x2xf32>
    %c1384 = arith.constant 1384 : index
    %c0_52 = arith.constant 0 : index
    %95 = vector.load %arg0[%c1384, %c0_52] : memref<1848x128xf32, #tpu.memory_space<vmem>>, vector<10x1xf32>
    %96 = vector.broadcast %95 : vector<10x1xf32> to vector<10x2xf32>
    %97 = arith.addf %94, %96 : vector<10x2xf32>
    %cst_53 = arith.constant 0.000000e+00 : f32
    %98 = vector.broadcast %cst_53 : f32 to vector<10x2xf32>
    %99 = arith.maximumf %97, %98 : vector<10x2xf32>
    %c1400 = arith.constant 1400 : index
    %c0_54 = arith.constant 0 : index
    %100 = vector.load %arg0[%c1400, %c0_54] : memref<1848x128xf32, #tpu.memory_space<vmem>>, vector<6x10xf32>
    %cst_55 = arith.constant dense<0.000000e+00> : vector<6x2xf32>
    %101 = tpu.matmul %100, %99, %cst_55 {dimension_numbers = #tpu.dot_dimension_numbers<[1], [0], [0], [1], [0, 0, 1, 1], [], []>} : vector<6x10xf32>, vector<10x2xf32>, vector<6x2xf32> -> vector<6x2xf32>
    %c1408 = arith.constant 1408 : index
    %c0_56 = arith.constant 0 : index
    %102 = vector.load %arg0[%c1408, %c0_56] : memref<1848x128xf32, #tpu.memory_space<vmem>>, vector<6x1xf32>
    %103 = vector.broadcast %102 : vector<6x1xf32> to vector<6x2xf32>
    %104 = arith.addf %101, %103 : vector<6x2xf32>
    %c1832 = arith.constant 1832 : index
    %c0_57 = arith.constant 0 : index
    %105 = vector.load %arg0[%c1832, %c0_57] : memref<1848x128xf32, #tpu.memory_space<vmem>>, vector<7x2xf32>
    %c1840 = arith.constant 1840 : index
    %c0_58 = arith.constant 0 : index
    %106 = vector.load %arg0[%c1840, %c0_58] : memref<1848x128xf32, #tpu.memory_space<vmem>>, vector<7x2xf32>
    %c1416 = arith.constant 1416 : index
    %c0_59 = arith.constant 0 : index
    %107 = vector.load %arg0[%c1416, %c0_59] : memref<1848x128xf32, #tpu.memory_space<vmem>>, vector<30x6xf32>
    %cst_60 = arith.constant dense<0.000000e+00> : vector<30x2xf32>
    %108 = tpu.matmul %107, %104, %cst_60 {dimension_numbers = #tpu.dot_dimension_numbers<[1], [0], [0], [1], [0, 0, 1, 1], [], []>} : vector<30x6xf32>, vector<6x2xf32>, vector<30x2xf32> -> vector<30x2xf32>
    %c1448 = arith.constant 1448 : index
    %c0_61 = arith.constant 0 : index
    %109 = vector.load %arg0[%c1448, %c0_61] : memref<1848x128xf32, #tpu.memory_space<vmem>>, vector<30x7xf32>
    %cst_62 = arith.constant dense<0.000000e+00> : vector<30x2xf32>
    %110 = tpu.matmul %109, %105, %cst_62 {dimension_numbers = #tpu.dot_dimension_numbers<[1], [0], [0], [1], [0, 0, 1, 1], [], []>} : vector<30x7xf32>, vector<7x2xf32>, vector<30x2xf32> -> vector<30x2xf32>
    %111 = arith.addf %108, %110 : vector<30x2xf32>
    %c1480 = arith.constant 1480 : index
    %c0_63 = arith.constant 0 : index
    %112 = vector.load %arg0[%c1480, %c0_63] : memref<1848x128xf32, #tpu.memory_space<vmem>>, vector<30x7xf32>
    %cst_64 = arith.constant dense<0.000000e+00> : vector<30x2xf32>
    %113 = tpu.matmul %112, %106, %cst_64 {dimension_numbers = #tpu.dot_dimension_numbers<[1], [0], [0], [1], [0, 0, 1, 1], [], []>} : vector<30x7xf32>, vector<7x2xf32>, vector<30x2xf32> -> vector<30x2xf32>
    %114 = arith.addf %111, %113 : vector<30x2xf32>
    %c1512 = arith.constant 1512 : index
    %c0_65 = arith.constant 0 : index
    %115 = vector.load %arg0[%c1512, %c0_65] : memref<1848x128xf32, #tpu.memory_space<vmem>>, vector<30x1xf32>
    %116 = vector.broadcast %115 : vector<30x1xf32> to vector<30x2xf32>
    %117 = arith.addf %114, %116 : vector<30x2xf32>
    %118 = math.tanh %117 : vector<30x2xf32>
    %c1544 = arith.constant 1544 : index
    %c0_66 = arith.constant 0 : index
    %119 = vector.load %arg0[%c1544, %c0_66] : memref<1848x128xf32, #tpu.memory_space<vmem>>, vector<30x30xf32>
    %cst_67 = arith.constant dense<0.000000e+00> : vector<30x2xf32>
    %120 = tpu.matmul %119, %118, %cst_67 {dimension_numbers = #tpu.dot_dimension_numbers<[1], [0], [0], [1], [0, 0, 1, 1], [], []>} : vector<30x30xf32>, vector<30x2xf32>, vector<30x2xf32> -> vector<30x2xf32>
    %c1576 = arith.constant 1576 : index
    %c0_68 = arith.constant 0 : index
    %121 = vector.load %arg0[%c1576, %c0_68] : memref<1848x128xf32, #tpu.memory_space<vmem>>, vector<30x1xf32>
    %122 = vector.broadcast %121 : vector<30x1xf32> to vector<30x2xf32>
    %123 = arith.addf %120, %122 : vector<30x2xf32>
    %124 = math.tanh %123 : vector<30x2xf32>
    %c1608 = arith.constant 1608 : index
    %c0_69 = arith.constant 0 : index
    %125 = vector.load %arg0[%c1608, %c0_69] : memref<1848x128xf32, #tpu.memory_space<vmem>>, vector<1x30xf32>
    %cst_70 = arith.constant dense<0.000000e+00> : vector<1x2xf32>
    %126 = tpu.matmul %125, %124, %cst_70 {dimension_numbers = #tpu.dot_dimension_numbers<[1], [0], [0], [1], [0, 0, 1, 1], [], []>} : vector<1x30xf32>, vector<30x2xf32>, vector<1x2xf32> -> vector<1x2xf32>
    %c1616 = arith.constant 1616 : index
    %c0_71 = arith.constant 0 : index
    %127 = vector.load %arg0[%c1616, %c0_71] : memref<1848x128xf32, #tpu.memory_space<vmem>>, vector<1x1xf32>
    %128 = vector.broadcast %127 : vector<1x1xf32> to vector<1x2xf32>
    %129 = arith.addf %126, %128 : vector<1x2xf32>
    %c1624 = arith.constant 1624 : index
    %c0_72 = arith.constant 0 : index
    %130 = vector.load %arg0[%c1624, %c0_72] : memref<1848x128xf32, #tpu.memory_space<vmem>>, vector<30x6xf32>
    %cst_73 = arith.constant dense<0.000000e+00> : vector<30x2xf32>
    %131 = tpu.matmul %130, %104, %cst_73 {dimension_numbers = #tpu.dot_dimension_numbers<[1], [0], [0], [1], [0, 0, 1, 1], [], []>} : vector<30x6xf32>, vector<6x2xf32>, vector<30x2xf32> -> vector<30x2xf32>
    %c1656 = arith.constant 1656 : index
    %c0_74 = arith.constant 0 : index
    %132 = vector.load %arg0[%c1656, %c0_74] : memref<1848x128xf32, #tpu.memory_space<vmem>>, vector<30x7xf32>
    %cst_75 = arith.constant dense<0.000000e+00> : vector<30x2xf32>
    %133 = tpu.matmul %132, %105, %cst_75 {dimension_numbers = #tpu.dot_dimension_numbers<[1], [0], [0], [1], [0, 0, 1, 1], [], []>} : vector<30x7xf32>, vector<7x2xf32>, vector<30x2xf32> -> vector<30x2xf32>
    %134 = arith.addf %131, %133 : vector<30x2xf32>
    %c1688 = arith.constant 1688 : index
    %c0_76 = arith.constant 0 : index
    %135 = vector.load %arg0[%c1688, %c0_76] : memref<1848x128xf32, #tpu.memory_space<vmem>>, vector<30x1xf32>
    %136 = vector.broadcast %135 : vector<30x1xf32> to vector<30x2xf32>
    %137 = vector.broadcast %129 : vector<1x2xf32> to vector<30x2xf32>
    %138 = arith.mulf %136, %137 : vector<30x2xf32>
    %139 = arith.addf %134, %138 : vector<30x2xf32>
    %c1720 = arith.constant 1720 : index
    %c0_77 = arith.constant 0 : index
    %140 = vector.load %arg0[%c1720, %c0_77] : memref<1848x128xf32, #tpu.memory_space<vmem>>, vector<30x1xf32>
    %141 = vector.broadcast %140 : vector<30x1xf32> to vector<30x2xf32>
    %142 = arith.addf %139, %141 : vector<30x2xf32>
    %143 = math.tanh %142 : vector<30x2xf32>
    %c1752 = arith.constant 1752 : index
    %c0_78 = arith.constant 0 : index
    %144 = vector.load %arg0[%c1752, %c0_78] : memref<1848x128xf32, #tpu.memory_space<vmem>>, vector<30x30xf32>
    %cst_79 = arith.constant dense<0.000000e+00> : vector<30x2xf32>
    %145 = tpu.matmul %144, %143, %cst_79 {dimension_numbers = #tpu.dot_dimension_numbers<[1], [0], [0], [1], [0, 0, 1, 1], [], []>} : vector<30x30xf32>, vector<30x2xf32>, vector<30x2xf32> -> vector<30x2xf32>
    %c1784 = arith.constant 1784 : index
    %c0_80 = arith.constant 0 : index
    %146 = vector.load %arg0[%c1784, %c0_80] : memref<1848x128xf32, #tpu.memory_space<vmem>>, vector<30x1xf32>
    %147 = vector.broadcast %146 : vector<30x1xf32> to vector<30x2xf32>
    %148 = arith.addf %145, %147 : vector<30x2xf32>
    %149 = math.tanh %148 : vector<30x2xf32>
    %c1816 = arith.constant 1816 : index
    %c0_81 = arith.constant 0 : index
    %150 = vector.load %arg0[%c1816, %c0_81] : memref<1848x128xf32, #tpu.memory_space<vmem>>, vector<7x30xf32>
    %cst_82 = arith.constant dense<0.000000e+00> : vector<7x2xf32>
    %151 = tpu.matmul %150, %149, %cst_82 {dimension_numbers = #tpu.dot_dimension_numbers<[1], [0], [0], [1], [0, 0, 1, 1], [], []>} : vector<7x30xf32>, vector<30x2xf32>, vector<7x2xf32> -> vector<7x2xf32>
    %c1824 = arith.constant 1824 : index
    %c0_83 = arith.constant 0 : index
    %152 = vector.load %arg0[%c1824, %c0_83] : memref<1848x128xf32, #tpu.memory_space<vmem>>, vector<7x1xf32>
    %153 = vector.broadcast %152 : vector<7x1xf32> to vector<7x2xf32>
    %154 = arith.addf %151, %153 : vector<7x2xf32>
    %155 = arith.subf %154, %106 : vector<7x2xf32>
    %156 = arith.mulf %155, %155 : vector<7x2xf32>
    %cst_84 = arith.constant dense<0.000000e+00> : vector<7xf32>
    %157 = vector.multi_reduction <add>, %156, %cst_84 [1] : vector<7x2xf32> to vector<7xf32>
    %158 = vector.shape_cast %157 : vector<7xf32> to vector<7x1xf32>
    %cst_85 = arith.constant dense<0.000000e+00> : vector<1xf32>
    %159 = vector.multi_reduction <add>, %158, %cst_85 [0] : vector<7x1xf32> to vector<1xf32>
    %160 = vector.shape_cast %159 : vector<1xf32> to vector<1x1xf32>
    %cst_86 = arith.constant 0.0714285746 : f32
    %161 = vector.broadcast %cst_86 : f32 to vector<1x1xf32>
    %162 = arith.mulf %160, %161 : vector<1x1xf32>
    %c0_87 = arith.constant 0 : index
    %c0_88 = arith.constant 0 : index
    %163 = vector.load %arg1[%c0_87, %c0_88] : memref<1x1xf32, #tpu.memory_space<vmem>>, vector<1x1xf32>
    tpu.vector_store %arg1[%c0_87, %c0_88], %162 {strides = array<i32>} : memref<1x1xf32, #tpu.memory_space<vmem>>, vector<1x1xf32>,
    return
  }
}

</mosaic_0001>

<llo_original>
// kernel: squeeze.11
$region0: #{squeeze.11}
  %s0 = inlined_call_operand.vmem [shape: f32[1,5,24,3,28], index: 0, kind: input, shape index: {}]
  %s1 = inlined_call_operand.vmem [shape: f32[120,84], index: 1, kind: output, shape index: {}]
  $region1: #{squeeze.11} parent=0
    #allocation0 [shape = 'u8[491520]{0}', space=vmem, size = 0x78000, scoped, tag = 'scoped mem for input reshape']
    %s3 = sshllo.u32 0, 4
    %s4 = smul.addr 4, 119
    %s5 = scalar_lea.vmem %s0, %s4
    %v6 = vld [vmem:[%s5] sm:%s3]
    %s7 = scalar_lea.vmem [#allocation0], 952
    %8 = vst [vmem:[%s7] sm:%s3] %v6
    %s9 = smul.addr 4, 118
    %s10 = scalar_lea.vmem %s0, %s9
    %v11 = vld [vmem:[%s10] sm:%s3]
    %s12 = scalar_lea.vmem [#allocation0], 944
    %13 = vst [vmem:[%s12] sm:%s3] %v11
    %s14 = smul.addr 4, 117
    %s15 = scalar_lea.vmem %s0, %s14
    %v16 = vld [vmem:[%s15] sm:%s3]
    %s17 = scalar_lea.vmem [#allocation0], 936
    %18 = vst [vmem:[%s17] sm:%s3] %v16
    %s19 = smul.addr 4, 116
    %s20 = scalar_lea.vmem %s0, %s19
    %v21 = vld [vmem:[%s20] sm:%s3]
    %s22 = scalar_lea.vmem [#allocation0], 928
    %23 = vst [vmem:[%s22] sm:%s3] %v21
    %s24 = smul.addr 4, 115
    %s25 = scalar_lea.vmem %s0, %s24
    %v26 = vld [vmem:[%s25] sm:%s3]
    %s27 = scalar_lea.vmem [#allocation0], 920
    %28 = vst [vmem:[%s27] sm:%s3] %v26
    %s29 = smul.addr 4, 114
    %s30 = scalar_lea.vmem %s0, %s29
    %v31 = vld [vmem:[%s30] sm:%s3]
    %s32 = scalar_lea.vmem [#allocation0], 912
    %33 = vst [vmem:[%s32] sm:%s3] %v31
    %s34 = smul.addr 4, 113
    %s35 = scalar_lea.vmem %s0, %s34
    %v36 = vld [vmem:[%s35] sm:%s3]
    %s37 = scalar_lea.vmem [#allocation0], 904
    %38 = vst [vmem:[%s37] sm:%s3] %v36
    %s39 = smul.addr 4, 112
    %s40 = scalar_lea.vmem %s0, %s39
    %v41 = vld [vmem:[%s40] sm:%s3]
    %s42 = scalar_lea.vmem [#allocation0], 896
    %43 = vst [vmem:[%s42] sm:%s3] %v41
    %s44 = smul.addr 4, 111
    %s45 = scalar_lea.vmem %s0, %s44
    %v46 = vld [vmem:[%s45] sm:%s3]
    %s47 = scalar_lea.vmem [#allocation0], 888
    %48 = vst [vmem:[%s47] sm:%s3] %v46
    %s49 = smul.addr 4, 110
    %s50 = scalar_lea.vmem %s0, %s49
    %v51 = vld [vmem:[%s50] sm:%s3]
    %s52 = scalar_lea.vmem [#allocation0], 880
    %53 = vst [vmem:[%s52] sm:%s3] %v51
    %s54 = smul.addr 4, 109
    %s55 = scalar_lea.vmem %s0, %s54
    %v56 = vld [vmem:[%s55] sm:%s3]
    %s57 = scalar_lea.vmem [#allocation0], 872
    %58 = vst [vmem:[%s57] sm:%s3] %v56
    %s59 = smul.addr 4, 108
    %s60 = scalar_lea.vmem %s0, %s59
    %v61 = vld [vmem:[%s60] sm:%s3]
    %s62 = scalar_lea.vmem [#allocation0], 864
    %63 = vst [vmem:[%s62] sm:%s3] %v61
    %s64 = smul.addr 4, 107
    %s65 = scalar_lea.vmem %s0, %s64
    %v66 = vld [vmem:[%s65] sm:%s3]
    %s67 = scalar_lea.vmem [#allocation0], 856
    %68 = vst [vmem:[%s67] sm:%s3] %v66
    %s69 = smul.addr 4, 106
    %s70 = scalar_lea.vmem %s0, %s69
    %v71 = vld [vmem:[%s70] sm:%s3]
    %s72 = scalar_lea.vmem [#allocation0], 848
    %73 = vst [vmem:[%s72] sm:%s3] %v71
    %s74 = smul.addr 4, 105
    %s75 = scalar_lea.vmem %s0, %s74
    %v76 = vld [vmem:[%s75] sm:%s3]
    %s77 = scalar_lea.vmem [#allocation0], 840
    %78 = vst [vmem:[%s77] sm:%s3] %v76
    %s79 = smul.addr 4, 104
    %s80 = scalar_lea.vmem %s0, %s79
    %v81 = vld [vmem:[%s80] sm:%s3]
    %s82 = scalar_lea.vmem [#allocation0], 832
    %83 = vst [vmem:[%s82] sm:%s3] %v81
    %s84 = smul.addr 4, 103
    %s85 = scalar_lea.vmem %s0, %s84
    %v86 = vld [vmem:[%s85] sm:%s3]
    %s87 = scalar_lea.vmem [#allocation0], 824
    %88 = vst [vmem:[%s87] sm:%s3] %v86
    %s89 = smul.addr 4, 102
    %s90 = scalar_lea.vmem %s0, %s89
    %v91 = vld [vmem:[%s90] sm:%s3]
    %s92 = scalar_lea.vmem [#allocation0], 816
    %93 = vst [vmem:[%s92] sm:%s3] %v91
    %s94 = smul.addr 4, 101
    %s95 = scalar_lea.vmem %s0, %s94
    %v96 = vld [vmem:[%s95] sm:%s3]
    %s97 = scalar_lea.vmem [#allocation0], 808
    %98 = vst [vmem:[%s97] sm:%s3] %v96
    %s99 = smul.addr 4, 100
    %s100 = scalar_lea.vmem %s0, %s99
    %v101 = vld [vmem:[%s100] sm:%s3]
    %s102 = scalar_lea.vmem [#allocation0], 800
    %103 = vst [vmem:[%s102] sm:%s3] %v101
    %s104 = smul.addr 4, 99
    %s105 = scalar_lea.vmem %s0, %s104
    %v106 = vld [vmem:[%s105] sm:%s3]
    %s107 = scalar_lea.vmem [#allocation0], 792
    %108 = vst [vmem:[%s107] sm:%s3] %v106
    %s109 = smul.addr 4, 98
    %s110 = scalar_lea.vmem %s0, %s109
    %v111 = vld [vmem:[%s110] sm:%s3]
    %s112 = scalar_lea.vmem [#allocation0], 784
    %113 = vst [vmem:[%s112] sm:%s3] %v111
    %s114 = smul.addr 4, 97
    %s115 = scalar_lea.vmem %s0, %s114
    %v116 = vld [vmem:[%s115] sm:%s3]
    %s117 = scalar_lea.vmem [#allocation0], 776
    %118 = vst [vmem:[%s117] sm:%s3] %v116
    %s119 = smul.addr 4, 96
    %s120 = scalar_lea.vmem %s0, %s119
    %v121 = vld [vmem:[%s120] sm:%s3]
    %s122 = scalar_lea.vmem [#allocation0], 768
    %123 = vst [vmem:[%s122] sm:%s3] %v121
    %s124 = smul.addr 4, 95
    %s125 = scalar_lea.vmem %s0, %s124
    %v126 = vld [vmem:[%s125] sm:%s3]
    %s127 = scalar_lea.vmem [#allocation0], 760
    %128 = vst [vmem:[%s127] sm:%s3] %v126
    %s129 = smul.addr 4, 94
    %s130 = scalar_lea.vmem %s0, %s129
    %v131 = vld [vmem:[%s130] sm:%s3]
    %s132 = scalar_lea.vmem [#allocation0], 752
    %133 = vst [vmem:[%s132] sm:%s3] %v131
    %s134 = smul.addr 4, 93
    %s135 = scalar_lea.vmem %s0, %s134
    %v136 = vld [vmem:[%s135] sm:%s3]
    %s137 = scalar_lea.vmem [#allocation0], 744
    %138 = vst [vmem:[%s137] sm:%s3] %v136
    %s139 = smul.addr 4, 92
    %s140 = scalar_lea.vmem %s0, %s139
    %v141 = vld [vmem:[%s140] sm:%s3]
    %s142 = scalar_lea.vmem [#allocation0], 736
    %143 = vst [vmem:[%s142] sm:%s3] %v141
    %s144 = smul.addr 4, 91
    %s145 = scalar_lea.vmem %s0, %s144
    %v146 = vld [vmem:[%s145] sm:%s3]
    %s147 = scalar_lea.vmem [#allocation0], 728
    %148 = vst [vmem:[%s147] sm:%s3] %v146
    %s149 = smul.addr 4, 90
    %s150 = scalar_lea.vmem %s0, %s149
    %v151 = vld [vmem:[%s150] sm:%s3]
    %s152 = scalar_lea.vmem [#allocation0], 720
    %153 = vst [vmem:[%s152] sm:%s3] %v151
    %s154 = smul.addr 4, 89
    %s155 = scalar_lea.vmem %s0, %s154
    %v156 = vld [vmem:[%s155] sm:%s3]
    %s157 = scalar_lea.vmem [#allocation0], 712
    %158 = vst [vmem:[%s157] sm:%s3] %v156
    %s159 = smul.addr 4, 88
    %s160 = scalar_lea.vmem %s0, %s159
    %v161 = vld [vmem:[%s160] sm:%s3]
    %s162 = scalar_lea.vmem [#allocation0], 704
    %163 = vst [vmem:[%s162] sm:%s3] %v161
    %s164 = smul.addr 4, 87
    %s165 = scalar_lea.vmem %s0, %s164
    %v166 = vld [vmem:[%s165] sm:%s3]
    %s167 = scalar_lea.vmem [#allocation0], 696
    %168 = vst [vmem:[%s167] sm:%s3] %v166
    %s169 = smul.addr 4, 86
    %s170 = scalar_lea.vmem %s0, %s169
    %v171 = vld [vmem:[%s170] sm:%s3]
    %s172 = scalar_lea.vmem [#allocation0], 688
    %173 = vst [vmem:[%s172] sm:%s3] %v171
    %s174 = smul.addr 4, 85
    %s175 = scalar_lea.vmem %s0, %s174
    %v176 = vld [vmem:[%s175] sm:%s3]
    %s177 = scalar_lea.vmem [#allocation0], 680
    %178 = vst [vmem:[%s177] sm:%s3] %v176
    %s179 = smul.addr 4, 84
    %s180 = scalar_lea.vmem %s0, %s179
    %v181 = vld [vmem:[%s180] sm:%s3]
    %s182 = scalar_lea.vmem [#allocation0], 672
    %183 = vst [vmem:[%s182] sm:%s3] %v181
    %s184 = smul.addr 4, 83
    %s185 = scalar_lea.vmem %s0, %s184
    %v186 = vld [vmem:[%s185] sm:%s3]
    %s187 = scalar_lea.vmem [#allocation0], 664
    %188 = vst [vmem:[%s187] sm:%s3] %v186
    %s189 = smul.addr 4, 82
    %s190 = scalar_lea.vmem %s0, %s189
    %v191 = vld [vmem:[%s190] sm:%s3]
    %s192 = scalar_lea.vmem [#allocation0], 656
    %193 = vst [vmem:[%s192] sm:%s3] %v191
    %s194 = smul.addr 4, 81
    %s195 = scalar_lea.vmem %s0, %s194
    %v196 = vld [vmem:[%s195] sm:%s3]
    %s197 = scalar_lea.vmem [#allocation0], 648
    %198 = vst [vmem:[%s197] sm:%s3] %v196
    %s199 = smul.addr 4, 80
    %s200 = scalar_lea.vmem %s0, %s199
    %v201 = vld [vmem:[%s200] sm:%s3]
    %s202 = scalar_lea.vmem [#allocation0], 640
    %203 = vst [vmem:[%s202] sm:%s3] %v201
    %s204 = smul.addr 4, 79
    %s205 = scalar_lea.vmem %s0, %s204
    %v206 = vld [vmem:[%s205] sm:%s3]
    %s207 = scalar_lea.vmem [#allocation0], 632
    %208 = vst [vmem:[%s207] sm:%s3] %v206
    %s209 = smul.addr 4, 78
    %s210 = scalar_lea.vmem %s0, %s209
    %v211 = vld [vmem:[%s210] sm:%s3]
    %s212 = scalar_lea.vmem [#allocation0], 624
    %213 = vst [vmem:[%s212] sm:%s3] %v211
    %s214 = smul.addr 4, 77
    %s215 = scalar_lea.vmem %s0, %s214
    %v216 = vld [vmem:[%s215] sm:%s3]
    %s217 = scalar_lea.vmem [#allocation0], 616
    %218 = vst [vmem:[%s217] sm:%s3] %v216
    %s219 = smul.addr 4, 76
    %s220 = scalar_lea.vmem %s0, %s219
    %v221 = vld [vmem:[%s220] sm:%s3]
    %s222 = scalar_lea.vmem [#allocation0], 608
    %223 = vst [vmem:[%s222] sm:%s3] %v221
    %s224 = smul.addr 4, 75
    %s225 = scalar_lea.vmem %s0, %s224
    %v226 = vld [vmem:[%s225] sm:%s3]
    %s227 = scalar_lea.vmem [#allocation0], 600
    %228 = vst [vmem:[%s227] sm:%s3] %v226
    %s229 = smul.addr 4, 74
    %s230 = scalar_lea.vmem %s0, %s229
    %v231 = vld [vmem:[%s230] sm:%s3]
    %s232 = scalar_lea.vmem [#allocation0], 592
    %233 = vst [vmem:[%s232] sm:%s3] %v231
    %s234 = smul.addr 4, 73
    %s235 = scalar_lea.vmem %s0, %s234
    %v236 = vld [vmem:[%s235] sm:%s3]
    %s237 = scalar_lea.vmem [#allocation0], 584
    %238 = vst [vmem:[%s237] sm:%s3] %v236
    %s239 = smul.addr 4, 72
    %s240 = scalar_lea.vmem %s0, %s239
    %v241 = vld [vmem:[%s240] sm:%s3]
    %s242 = scalar_lea.vmem [#allocation0], 576
    %243 = vst [vmem:[%s242] sm:%s3] %v241
    %s244 = smul.addr 4, 71
    %s245 = scalar_lea.vmem %s0, %s244
    %v246 = vld [vmem:[%s245] sm:%s3]
    %s247 = scalar_lea.vmem [#allocation0], 568
    %248 = vst [vmem:[%s247] sm:%s3] %v246
    %s249 = smul.addr 4, 70
    %s250 = scalar_lea.vmem %s0, %s249
    %v251 = vld [vmem:[%s250] sm:%s3]
    %s252 = scalar_lea.vmem [#allocation0], 560
    %253 = vst [vmem:[%s252] sm:%s3] %v251
    %s254 = smul.addr 4, 69
    %s255 = scalar_lea.vmem %s0, %s254
    %v256 = vld [vmem:[%s255] sm:%s3]
    %s257 = scalar_lea.vmem [#allocation0], 552
    %258 = vst [vmem:[%s257] sm:%s3] %v256
    %s259 = smul.addr 4, 68
    %s260 = scalar_lea.vmem %s0, %s259
    %v261 = vld [vmem:[%s260] sm:%s3]
    %s262 = scalar_lea.vmem [#allocation0], 544
    %263 = vst [vmem:[%s262] sm:%s3] %v261
    %s264 = smul.addr 4, 67
    %s265 = scalar_lea.vmem %s0, %s264
    %v266 = vld [vmem:[%s265] sm:%s3]
    %s267 = scalar_lea.vmem [#allocation0], 536
    %268 = vst [vmem:[%s267] sm:%s3] %v266
    %s269 = smul.addr 4, 66
    %s270 = scalar_lea.vmem %s0, %s269
    %v271 = vld [vmem:[%s270] sm:%s3]
    %s272 = scalar_lea.vmem [#allocation0], 528
    %273 = vst [vmem:[%s272] sm:%s3] %v271
    %s274 = smul.addr 4, 65
    %s275 = scalar_lea.vmem %s0, %s274
    %v276 = vld [vmem:[%s275] sm:%s3]
    %s277 = scalar_lea.vmem [#allocation0], 520
    %278 = vst [vmem:[%s277] sm:%s3] %v276
    %s279 = smul.addr 4, 64
    %s280 = scalar_lea.vmem %s0, %s279
    %v281 = vld [vmem:[%s280] sm:%s3]
    %s282 = scalar_lea.vmem [#allocation0], 512
    %283 = vst [vmem:[%s282] sm:%s3] %v281
    %s284 = smul.addr 4, 63
    %s285 = scalar_lea.vmem %s0, %s284
    %v286 = vld [vmem:[%s285] sm:%s3]
    %s287 = scalar_lea.vmem [#allocation0], 504
    %288 = vst [vmem:[%s287] sm:%s3] %v286
    %s289 = smul.addr 4, 62
    %s290 = scalar_lea.vmem %s0, %s289
    %v291 = vld [vmem:[%s290] sm:%s3]
    %s292 = scalar_lea.vmem [#allocation0], 496
    %293 = vst [vmem:[%s292] sm:%s3] %v291
    %s294 = smul.addr 4, 61
    %s295 = scalar_lea.vmem %s0, %s294
    %v296 = vld [vmem:[%s295] sm:%s3]
    %s297 = scalar_lea.vmem [#allocation0], 488
    %298 = vst [vmem:[%s297] sm:%s3] %v296
    %s299 = smul.addr 4, 60
    %s300 = scalar_lea.vmem %s0, %s299
    %v301 = vld [vmem:[%s300] sm:%s3]
    %s302 = scalar_lea.vmem [#allocation0], 480
    %303 = vst [vmem:[%s302] sm:%s3] %v301
    %s304 = smul.addr 4, 59
    %s305 = scalar_lea.vmem %s0, %s304
    %v306 = vld [vmem:[%s305] sm:%s3]
    %s307 = scalar_lea.vmem [#allocation0], 472
    %308 = vst [vmem:[%s307] sm:%s3] %v306
    %s309 = smul.addr 4, 58
    %s310 = scalar_lea.vmem %s0, %s309
    %v311 = vld [vmem:[%s310] sm:%s3]
    %s312 = scalar_lea.vmem [#allocation0], 464
    %313 = vst [vmem:[%s312] sm:%s3] %v311
    %s314 = smul.addr 4, 57
    %s315 = scalar_lea.vmem %s0, %s314
    %v316 = vld [vmem:[%s315] sm:%s3]
    %s317 = scalar_lea.vmem [#allocation0], 456
    %318 = vst [vmem:[%s317] sm:%s3] %v316
    %s319 = smul.addr 4, 56
    %s320 = scalar_lea.vmem %s0, %s319
    %v321 = vld [vmem:[%s320] sm:%s3]
    %s322 = scalar_lea.vmem [#allocation0], 448
    %323 = vst [vmem:[%s322] sm:%s3] %v321
    %s324 = smul.addr 4, 55
    %s325 = scalar_lea.vmem %s0, %s324
    %v326 = vld [vmem:[%s325] sm:%s3]
    %s327 = scalar_lea.vmem [#allocation0], 440
    %328 = vst [vmem:[%s327] sm:%s3] %v326
    %s329 = smul.addr 4, 54
    %s330 = scalar_lea.vmem %s0, %s329
    %v331 = vld [vmem:[%s330] sm:%s3]
    %s332 = scalar_lea.vmem [#allocation0], 432
    %333 = vst [vmem:[%s332] sm:%s3] %v331
    %s334 = smul.addr 4, 53
    %s335 = scalar_lea.vmem %s0, %s334
    %v336 = vld [vmem:[%s335] sm:%s3]
    %s337 = scalar_lea.vmem [#allocation0], 424
    %338 = vst [vmem:[%s337] sm:%s3] %v336
    %s339 = smul.addr 4, 52
    %s340 = scalar_lea.vmem %s0, %s339
    %v341 = vld [vmem:[%s340] sm:%s3]
    %s342 = scalar_lea.vmem [#allocation0], 416
    %343 = vst [vmem:[%s342] sm:%s3] %v341
    %s344 = smul.addr 4, 51
    %s345 = scalar_lea.vmem %s0, %s344
    %v346 = vld [vmem:[%s345] sm:%s3]
    %s347 = scalar_lea.vmem [#allocation0], 408
    %348 = vst [vmem:[%s347] sm:%s3] %v346
    %s349 = smul.addr 4, 50
    %s350 = scalar_lea.vmem %s0, %s349
    %v351 = vld [vmem:[%s350] sm:%s3]
    %s352 = scalar_lea.vmem [#allocation0], 400
    %353 = vst [vmem:[%s352] sm:%s3] %v351
    %s354 = smul.addr 4, 49
    %s355 = scalar_lea.vmem %s0, %s354
    %v356 = vld [vmem:[%s355] sm:%s3]
    %s357 = scalar_lea.vmem [#allocation0], 392
    %358 = vst [vmem:[%s357] sm:%s3] %v356
    %s359 = smul.addr 4, 48
    %s360 = scalar_lea.vmem %s0, %s359
    %v361 = vld [vmem:[%s360] sm:%s3]
    %s362 = scalar_lea.vmem [#allocation0], 384
    %363 = vst [vmem:[%s362] sm:%s3] %v361
    %s364 = smul.addr 4, 47
    %s365 = scalar_lea.vmem %s0, %s364
    %v366 = vld [vmem:[%s365] sm:%s3]
    %s367 = scalar_lea.vmem [#allocation0], 376
    %368 = vst [vmem:[%s367] sm:%s3] %v366
    %s369 = smul.addr 4, 46
    %s370 = scalar_lea.vmem %s0, %s369
    %v371 = vld [vmem:[%s370] sm:%s3]
    %s372 = scalar_lea.vmem [#allocation0], 368
    %373 = vst [vmem:[%s372] sm:%s3] %v371
    %s374 = smul.addr 4, 45
    %s375 = scalar_lea.vmem %s0, %s374
    %v376 = vld [vmem:[%s375] sm:%s3]
    %s377 = scalar_lea.vmem [#allocation0], 360
    %378 = vst [vmem:[%s377] sm:%s3] %v376
    %s379 = smul.addr 4, 44
    %s380 = scalar_lea.vmem %s0, %s379
    %v381 = vld [vmem:[%s380] sm:%s3]
    %s382 = scalar_lea.vmem [#allocation0], 352
    %383 = vst [vmem:[%s382] sm:%s3] %v381
    %s384 = smul.addr 4, 43
    %s385 = scalar_lea.vmem %s0, %s384
    %v386 = vld [vmem:[%s385] sm:%s3]
    %s387 = scalar_lea.vmem [#allocation0], 344
    %388 = vst [vmem:[%s387] sm:%s3] %v386
    %s389 = smul.addr 4, 42
    %s390 = scalar_lea.vmem %s0, %s389
    %v391 = vld [vmem:[%s390] sm:%s3]
    %s392 = scalar_lea.vmem [#allocation0], 336
    %393 = vst [vmem:[%s392] sm:%s3] %v391
    %s394 = smul.addr 4, 41
    %s395 = scalar_lea.vmem %s0, %s394
    %v396 = vld [vmem:[%s395] sm:%s3]
    %s397 = scalar_lea.vmem [#allocation0], 328
    %398 = vst [vmem:[%s397] sm:%s3] %v396
    %s399 = smul.addr 4, 40
    %s400 = scalar_lea.vmem %s0, %s399
    %v401 = vld [vmem:[%s400] sm:%s3]
    %s402 = scalar_lea.vmem [#allocation0], 320
    %403 = vst [vmem:[%s402] sm:%s3] %v401
    %s404 = smul.addr 4, 39
    %s405 = scalar_lea.vmem %s0, %s404
    %v406 = vld [vmem:[%s405] sm:%s3]
    %s407 = scalar_lea.vmem [#allocation0], 312
    %408 = vst [vmem:[%s407] sm:%s3] %v406
    %s409 = smul.addr 4, 38
    %s410 = scalar_lea.vmem %s0, %s409
    %v411 = vld [vmem:[%s410] sm:%s3]
    %s412 = scalar_lea.vmem [#allocation0], 304
    %413 = vst [vmem:[%s412] sm:%s3] %v411
    %s414 = smul.addr 4, 37
    %s415 = scalar_lea.vmem %s0, %s414
    %v416 = vld [vmem:[%s415] sm:%s3]
    %s417 = scalar_lea.vmem [#allocation0], 296
    %418 = vst [vmem:[%s417] sm:%s3] %v416
    %s419 = smul.addr 4, 36
    %s420 = scalar_lea.vmem %s0, %s419
    %v421 = vld [vmem:[%s420] sm:%s3]
    %s422 = scalar_lea.vmem [#allocation0], 288
    %423 = vst [vmem:[%s422] sm:%s3] %v421
    %s424 = smul.addr 4, 35
    %s425 = scalar_lea.vmem %s0, %s424
    %v426 = vld [vmem:[%s425] sm:%s3]
    %s427 = scalar_lea.vmem [#allocation0], 280
    %428 = vst [vmem:[%s427] sm:%s3] %v426
    %s429 = smul.addr 4, 34
    %s430 = scalar_lea.vmem %s0, %s429
    %v431 = vld [vmem:[%s430] sm:%s3]
    %s432 = scalar_lea.vmem [#allocation0], 272
    %433 = vst [vmem:[%s432] sm:%s3] %v431
    %s434 = smul.addr 4, 33
    %s435 = scalar_lea.vmem %s0, %s434
    %v436 = vld [vmem:[%s435] sm:%s3]
    %s437 = scalar_lea.vmem [#allocation0], 264
    %438 = vst [vmem:[%s437] sm:%s3] %v436
    %s439 = smul.addr 4, 32
    %s440 = scalar_lea.vmem %s0, %s439
    %v441 = vld [vmem:[%s440] sm:%s3]
    %s442 = scalar_lea.vmem [#allocation0], 256
    %443 = vst [vmem:[%s442] sm:%s3] %v441
    %s444 = smul.addr 4, 31
    %s445 = scalar_lea.vmem %s0, %s444
    %v446 = vld [vmem:[%s445] sm:%s3]
    %s447 = scalar_lea.vmem [#allocation0], 248
    %448 = vst [vmem:[%s447] sm:%s3] %v446
    %s449 = smul.addr 4, 30
    %s450 = scalar_lea.vmem %s0, %s449
    %v451 = vld [vmem:[%s450] sm:%s3]
    %s452 = scalar_lea.vmem [#allocation0], 240
    %453 = vst [vmem:[%s452] sm:%s3] %v451
    %s454 = smul.addr 4, 29
    %s455 = scalar_lea.vmem %s0, %s454
    %v456 = vld [vmem:[%s455] sm:%s3]
    %s457 = scalar_lea.vmem [#allocation0], 232
    %458 = vst [vmem:[%s457] sm:%s3] %v456
    %s459 = smul.addr 4, 28
    %s460 = scalar_lea.vmem %s0, %s459
    %v461 = vld [vmem:[%s460] sm:%s3]
    %s462 = scalar_lea.vmem [#allocation0], 224
    %463 = vst [vmem:[%s462] sm:%s3] %v461
    %s464 = smul.addr 4, 27
    %s465 = scalar_lea.vmem %s0, %s464
    %v466 = vld [vmem:[%s465] sm:%s3]
    %s467 = scalar_lea.vmem [#allocation0], 216
    %468 = vst [vmem:[%s467] sm:%s3] %v466
    %s469 = smul.addr 4, 26
    %s470 = scalar_lea.vmem %s0, %s469
    %v471 = vld [vmem:[%s470] sm:%s3]
    %s472 = scalar_lea.vmem [#allocation0], 208
    %473 = vst [vmem:[%s472] sm:%s3] %v471
    %s474 = smul.addr 4, 25
    %s475 = scalar_lea.vmem %s0, %s474
    %v476 = vld [vmem:[%s475] sm:%s3]
    %s477 = scalar_lea.vmem [#allocation0], 200
    %478 = vst [vmem:[%s477] sm:%s3] %v476
    %s479 = smul.addr 4, 24
    %s480 = scalar_lea.vmem %s0, %s479
    %v481 = vld [vmem:[%s480] sm:%s3]
    %s482 = scalar_lea.vmem [#allocation0], 192
    %483 = vst [vmem:[%s482] sm:%s3] %v481
    %s484 = smul.addr 4, 23
    %s485 = scalar_lea.vmem %s0, %s484
    %v486 = vld [vmem:[%s485] sm:%s3]
    %s487 = scalar_lea.vmem [#allocation0], 184
    %488 = vst [vmem:[%s487] sm:%s3] %v486
    %s489 = smul.addr 4, 22
    %s490 = scalar_lea.vmem %s0, %s489
    %v491 = vld [vmem:[%s490] sm:%s3]
    %s492 = scalar_lea.vmem [#allocation0], 176
    %493 = vst [vmem:[%s492] sm:%s3] %v491
    %s494 = smul.addr 4, 21
    %s495 = scalar_lea.vmem %s0, %s494
    %v496 = vld [vmem:[%s495] sm:%s3]
    %s497 = scalar_lea.vmem [#allocation0], 168
    %498 = vst [vmem:[%s497] sm:%s3] %v496
    %s499 = smul.addr 4, 20
    %s500 = scalar_lea.vmem %s0, %s499
    %v501 = vld [vmem:[%s500] sm:%s3]
    %s502 = scalar_lea.vmem [#allocation0], 160
    %503 = vst [vmem:[%s502] sm:%s3] %v501
    %s504 = smul.addr 4, 19
    %s505 = scalar_lea.vmem %s0, %s504
    %v506 = vld [vmem:[%s505] sm:%s3]
    %s507 = scalar_lea.vmem [#allocation0], 152
    %508 = vst [vmem:[%s507] sm:%s3] %v506
    %s509 = smul.addr 4, 18
    %s510 = scalar_lea.vmem %s0, %s509
    %v511 = vld [vmem:[%s510] sm:%s3]
    %s512 = scalar_lea.vmem [#allocation0], 144
    %513 = vst [vmem:[%s512] sm:%s3] %v511
    %s514 = smul.addr 4, 17
    %s515 = scalar_lea.vmem %s0, %s514
    %v516 = vld [vmem:[%s515] sm:%s3]
    %s517 = scalar_lea.vmem [#allocation0], 136
    %518 = vst [vmem:[%s517] sm:%s3] %v516
    %s519 = smul.addr 4, 16
    %s520 = scalar_lea.vmem %s0, %s519
    %v521 = vld [vmem:[%s520] sm:%s3]
    %s522 = scalar_lea.vmem [#allocation0], 128
    %523 = vst [vmem:[%s522] sm:%s3] %v521
    %s524 = smul.addr 4, 15
    %s525 = scalar_lea.vmem %s0, %s524
    %v526 = vld [vmem:[%s525] sm:%s3]
    %s527 = scalar_lea.vmem [#allocation0], 120
    %528 = vst [vmem:[%s527] sm:%s3] %v526
    %s529 = smul.addr 4, 14
    %s530 = scalar_lea.vmem %s0, %s529
    %v531 = vld [vmem:[%s530] sm:%s3]
    %s532 = scalar_lea.vmem [#allocation0], 112
    %533 = vst [vmem:[%s532] sm:%s3] %v531
    %s534 = smul.addr 4, 13
    %s535 = scalar_lea.vmem %s0, %s534
    %v536 = vld [vmem:[%s535] sm:%s3]
    %s537 = scalar_lea.vmem [#allocation0], 104
    %538 = vst [vmem:[%s537] sm:%s3] %v536
    %s539 = smul.addr 4, 12
    %s540 = scalar_lea.vmem %s0, %s539
    %v541 = vld [vmem:[%s540] sm:%s3]
    %s542 = scalar_lea.vmem [#allocation0], 96
    %543 = vst [vmem:[%s542] sm:%s3] %v541
    %s544 = smul.addr 4, 11
    %s545 = scalar_lea.vmem %s0, %s544
    %v546 = vld [vmem:[%s545] sm:%s3]
    %s547 = scalar_lea.vmem [#allocation0], 88
    %548 = vst [vmem:[%s547] sm:%s3] %v546
    %s549 = smul.addr 4, 10
    %s550 = scalar_lea.vmem %s0, %s549
    %v551 = vld [vmem:[%s550] sm:%s3]
    %s552 = scalar_lea.vmem [#allocation0], 80
    %553 = vst [vmem:[%s552] sm:%s3] %v551
    %s554 = smul.addr 4, 9
    %s555 = scalar_lea.vmem %s0, %s554
    %v556 = vld [vmem:[%s555] sm:%s3]
    %s557 = scalar_lea.vmem [#allocation0], 72
    %558 = vst [vmem:[%s557] sm:%s3] %v556
    %s559 = smul.addr 4, 8
    %s560 = scalar_lea.vmem %s0, %s559
    %v561 = vld [vmem:[%s560] sm:%s3]
    %s562 = scalar_lea.vmem [#allocation0], 64
    %563 = vst [vmem:[%s562] sm:%s3] %v561
    %s564 = smul.addr 4, 7
    %s565 = scalar_lea.vmem %s0, %s564
    %v566 = vld [vmem:[%s565] sm:%s3]
    %s567 = scalar_lea.vmem [#allocation0], 56
    %568 = vst [vmem:[%s567] sm:%s3] %v566
    %s569 = smul.addr 4, 6
    %s570 = scalar_lea.vmem %s0, %s569
    %v571 = vld [vmem:[%s570] sm:%s3]
    %s572 = scalar_lea.vmem [#allocation0], 48
    %573 = vst [vmem:[%s572] sm:%s3] %v571
    %s574 = smul.addr 4, 5
    %s575 = scalar_lea.vmem %s0, %s574
    %v576 = vld [vmem:[%s575] sm:%s3]
    %s577 = scalar_lea.vmem [#allocation0], 40
    %578 = vst [vmem:[%s577] sm:%s3] %v576
    %s579 = smul.addr 4, 4
    %s580 = scalar_lea.vmem %s0, %s579
    %v581 = vld [vmem:[%s580] sm:%s3]
    %s582 = scalar_lea.vmem [#allocation0], 32
    %583 = vst [vmem:[%s582] sm:%s3] %v581
    %s584 = smul.addr 4, 3
    %s585 = scalar_lea.vmem %s0, %s584
    %v586 = vld [vmem:[%s585] sm:%s3]
    %s587 = scalar_lea.vmem [#allocation0], 24
    %588 = vst [vmem:[%s587] sm:%s3] %v586
    %s589 = smul.addr 4, 2
    %s590 = scalar_lea.vmem %s0, %s589
    %v591 = vld [vmem:[%s590] sm:%s3]
    %s592 = scalar_lea.vmem [#allocation0], 16
    %593 = vst [vmem:[%s592] sm:%s3] %v591
    %s594 = scalar_lea.vmem %s0, 4
    %v595 = vld [vmem:[%s594] sm:%s3]
    %s596 = scalar_lea.vmem [#allocation0], 8
    %597 = vst [vmem:[%s596] sm:%s3] %v595
    %v598 = vld [vmem:[%s0] sm:%s3]
    %599 = vst [vmem:[#allocation0] sm:%s3] %v598
    %v600 = vld [vmem:[#allocation0] ss:$8 sm:$0xf]
    %v601 = vld [vmem:[#allocation0] ss:$8 sm:$0xf0]
    %vm602 = vcmask 1047556
    %v603 = vsel %vm602, %v601, %v600
    %vm604 = vcmask 228352
    %605 = vst.msk [vmem:[%s1] sm:$0xff] %vm604, %v603
    %s606 = scalar_lea.vmem [#allocation0], 64
    %v607 = vld [vmem:[%s606] ss:$8 sm:$0xf]
    %s608 = scalar_lea.vmem [#allocation0], 64
    %v609 = vld [vmem:[%s608] ss:$8 sm:$0xf0]
    %vm610 = vcmask 1047556
    %v611 = vsel %vm610, %v609, %v607
    %vm612 = vcmask 228352
    %s613 = scalar_lea.vmem %s1, 8
    %614 = vst.msk [vmem:[%s613] sm:$0xff] %vm612, %v611
    %s615 = scalar_lea.vmem [#allocation0], 128
    %v616 = vld [vmem:[%s615] ss:$8 sm:$0xf]
    %s617 = scalar_lea.vmem [#allocation0], 128
    %v618 = vld [vmem:[%s617] ss:$8 sm:$0xf0]
    %vm619 = vcmask 1047556
    %v620 = vsel %vm619, %v618, %v616
    %vm621 = vcmask 228352
    %s622 = scalar_lea.vmem %s1, 16
    %623 = vst.msk [vmem:[%s622] sm:$0xff] %vm621, %v620
    %s624 = scalar_lea.vmem [#allocation0], 192
    %v625 = vld [vmem:[%s624] ss:$8 sm:$0xf]
    %s626 = scalar_lea.vmem [#allocation0], 192
    %v627 = vld [vmem:[%s626] ss:$8 sm:$0xf0]
    %vm628 = vcmask 1047556
    %v629 = vsel %vm628, %v627, %v625
    %vm630 = vcmask 228352
    %s631 = scalar_lea.vmem %s1, 24
    %632 = vst.msk [vmem:[%s631] sm:$0xff] %vm630, %v629
    %s633 = scalar_lea.vmem [#allocation0], 256
    %v634 = vld [vmem:[%s633] ss:$8 sm:$0xf]
    %s635 = scalar_lea.vmem [#allocation0], 256
    %v636 = vld [vmem:[%s635] ss:$8 sm:$0xf0]
    %vm637 = vcmask 1047556
    %v638 = vsel %vm637, %v636, %v634
    %vm639 = vcmask 228352
    %s640 = scalar_lea.vmem %s1, 32
    %641 = vst.msk [vmem:[%s640] sm:$0xff] %vm639, %v638
    %s642 = scalar_lea.vmem [#allocation0], 320
    %v643 = vld [vmem:[%s642] ss:$8 sm:$0xf]
    %s644 = scalar_lea.vmem [#allocation0], 320
    %v645 = vld [vmem:[%s644] ss:$8 sm:$0xf0]
    %vm646 = vcmask 1047556
    %v647 = vsel %vm646, %v645, %v643
    %vm648 = vcmask 228352
    %s649 = scalar_lea.vmem %s1, 40
    %650 = vst.msk [vmem:[%s649] sm:$0xff] %vm648, %v647
    %s651 = scalar_lea.vmem [#allocation0], 384
    %v652 = vld [vmem:[%s651] ss:$8 sm:$0xf]
    %s653 = scalar_lea.vmem [#allocation0], 384
    %v654 = vld [vmem:[%s653] ss:$8 sm:$0xf0]
    %vm655 = vcmask 1047556
    %v656 = vsel %vm655, %v654, %v652
    %vm657 = vcmask 228352
    %s658 = scalar_lea.vmem %s1, 48
    %659 = vst.msk [vmem:[%s658] sm:$0xff] %vm657, %v656
    %s660 = scalar_lea.vmem [#allocation0], 448
    %v661 = vld [vmem:[%s660] ss:$8 sm:$0xf]
    %s662 = scalar_lea.vmem [#allocation0], 448
    %v663 = vld [vmem:[%s662] ss:$8 sm:$0xf0]
    %vm664 = vcmask 1047556
    %v665 = vsel %vm664, %v663, %v661
    %vm666 = vcmask 228352
    %s667 = scalar_lea.vmem %s1, 56
    %668 = vst.msk [vmem:[%s667] sm:$0xff] %vm666, %v665
    %s669 = scalar_lea.vmem [#allocation0], 512
    %v670 = vld [vmem:[%s669] ss:$8 sm:$0xf]
    %s671 = scalar_lea.vmem [#allocation0], 512
    %v672 = vld [vmem:[%s671] ss:$8 sm:$0xf0]
    %vm673 = vcmask 1047556
    %v674 = vsel %vm673, %v672, %v670
    %vm675 = vcmask 228352
    %s676 = scalar_lea.vmem %s1, 64
    %677 = vst.msk [vmem:[%s676] sm:$0xff] %vm675, %v674
    %s678 = scalar_lea.vmem [#allocation0], 576
    %v679 = vld [vmem:[%s678] ss:$8 sm:$0xf]
    %s680 = scalar_lea.vmem [#allocation0], 576
    %v681 = vld [vmem:[%s680] ss:$8 sm:$0xf0]
    %vm682 = vcmask 1047556
    %v683 = vsel %vm682, %v681, %v679
    %vm684 = vcmask 228352
    %s685 = scalar_lea.vmem %s1, 72
    %686 = vst.msk [vmem:[%s685] sm:$0xff] %vm684, %v683
    %s687 = scalar_lea.vmem [#allocation0], 640
    %v688 = vld [vmem:[%s687] ss:$8 sm:$0xf]
    %s689 = scalar_lea.vmem [#allocation0], 640
    %v690 = vld [vmem:[%s689] ss:$8 sm:$0xf0]
    %vm691 = vcmask 1047556
    %v692 = vsel %vm691, %v690, %v688
    %vm693 = vcmask 228352
    %s694 = scalar_lea.vmem %s1, 80
    %695 = vst.msk [vmem:[%s694] sm:$0xff] %vm693, %v692
    %s696 = scalar_lea.vmem [#allocation0], 704
    %v697 = vld [vmem:[%s696] ss:$8 sm:$0xf]
    %s698 = scalar_lea.vmem [#allocation0], 704
    %v699 = vld [vmem:[%s698] ss:$8 sm:$0xf0]
    %vm700 = vcmask 1047556
    %v701 = vsel %vm700, %v699, %v697
    %vm702 = vcmask 228352
    %s703 = scalar_lea.vmem %s1, 88
    %704 = vst.msk [vmem:[%s703] sm:$0xff] %vm702, %v701
    %s705 = scalar_lea.vmem [#allocation0], 768
    %v706 = vld [vmem:[%s705] ss:$8 sm:$0xf]
    %s707 = scalar_lea.vmem [#allocation0], 768
    %v708 = vld [vmem:[%s707] ss:$8 sm:$0xf0]
    %vm709 = vcmask 1047556
    %v710 = vsel %vm709, %v708, %v706
    %vm711 = vcmask 228352
    %s712 = scalar_lea.vmem %s1, 96
    %713 = vst.msk [vmem:[%s712] sm:$0xff] %vm711, %v710
    %s714 = scalar_lea.vmem [#allocation0], 832
    %v715 = vld [vmem:[%s714] ss:$8 sm:$0xf]
    %s716 = scalar_lea.vmem [#allocation0], 832
    %v717 = vld [vmem:[%s716] ss:$8 sm:$0xf0]
    %vm718 = vcmask 1047556
    %v719 = vsel %vm718, %v717, %v715
    %vm720 = vcmask 228352
    %s721 = scalar_lea.vmem %s1, 104
    %722 = vst.msk [vmem:[%s721] sm:$0xff] %vm720, %v719
    %s723 = scalar_lea.vmem [#allocation0], 896
    %v724 = vld [vmem:[%s723] ss:$8 sm:$0xf]
    %s725 = scalar_lea.vmem [#allocation0], 896
    %v726 = vld [vmem:[%s725] ss:$8 sm:$0xf0]
    %vm727 = vcmask 1047556
    %v728 = vsel %vm727, %v726, %v724
    %vm729 = vcmask 228352
    %s730 = scalar_lea.vmem %s1, 112
    %731 = vst.msk [vmem:[%s730] sm:$0xff] %vm729, %v728
    %s732 = scalar_lea.vmem [#allocation0], 2
    %v733 = vld [vmem:[%s732] ss:$8 sm:$0xf]
    %s734 = scalar_lea.vmem [#allocation0], 2
    %v735 = vld [vmem:[%s734] ss:$8 sm:$0xf0]
    %vm736 = vcmask 1047556
    %v737 = vsel %vm736, %v735, %v733
    %738 = vrot.lane.b32.xlu0 %v737, 56
    %v739 = vpop.permute.xlu0 %738
    %vm740 = vcmask 687552
    %741 = vst.msk [vmem:[%s1] sm:$0xff] %vm740, %v739
    %s742 = scalar_lea.vmem [#allocation0], 258
    %v743 = vld [vmem:[%s742] ss:$8 sm:$0xf]
    %s744 = scalar_lea.vmem [#allocation0], 258
    %v745 = vld [vmem:[%s744] ss:$8 sm:$0xf0]
    %vm746 = vcmask 1047556
    %v747 = vsel %vm746, %v745, %v743
    %748 = vrot.lane.b32.xlu0 %v747, 56
    %v749 = vpop.permute.xlu0 %748
    %vm750 = vcmask 687552
    %s751 = scalar_lea.vmem %s1, 32
    %752 = vst.msk [vmem:[%s751] sm:$0xff] %vm750, %v749
    %s753 = scalar_lea.vmem [#allocation0], 514
    %v754 = vld [vmem:[%s753] ss:$8 sm:$0xf]
    %s755 = scalar_lea.vmem [#allocation0], 514
    %v756 = vld [vmem:[%s755] ss:$8 sm:$0xf0]
    %vm757 = vcmask 1047556
    %v758 = vsel %vm757, %v756, %v754
    %759 = vrot.lane.b32.xlu0 %v758, 56
    %v760 = vpop.permute.xlu0 %759
    %vm761 = vcmask 687552
    %s762 = scalar_lea.vmem %s1, 64
    %763 = vst.msk [vmem:[%s762] sm:$0xff] %vm761, %v760
    %s764 = scalar_lea.vmem [#allocation0], 770
    %v765 = vld [vmem:[%s764] ss:$8 sm:$0xf]
    %s766 = scalar_lea.vmem [#allocation0], 770
    %v767 = vld [vmem:[%s766] ss:$8 sm:$0xf0]
    %vm768 = vcmask 1047556
    %v769 = vsel %vm768, %v767, %v765
    %770 = vrot.lane.b32.xlu0 %v769, 56
    %v771 = vpop.permute.xlu0 %770
    %vm772 = vcmask 687552
    %s773 = scalar_lea.vmem %s1, 96
    %774 = vst.msk [vmem:[%s773] sm:$0xff] %vm772, %v771
    %s775 = scalar_lea.vmem [#allocation0], 66
    %v776 = vld [vmem:[%s775] ss:$8 sm:$0xf]
    %s777 = scalar_lea.vmem [#allocation0], 66
    %v778 = vld [vmem:[%s777] ss:$8 sm:$0xf0]
    %vm779 = vcmask 1047556
    %v780 = vsel %vm779, %v778, %v776
    %781 = vrot.lane.b32.xlu0 %v780, 56
    %v782 = vpop.permute.xlu0 %781
    %vm783 = vcmask 687552
    %s784 = scalar_lea.vmem %s1, 8
    %785 = vst.msk [vmem:[%s784] sm:$0xff] %vm783, %v782
    %s786 = scalar_lea.vmem [#allocation0], 322
    %v787 = vld [vmem:[%s786] ss:$8 sm:$0xf]
    %s788 = scalar_lea.vmem [#allocation0], 322
    %v789 = vld [vmem:[%s788] ss:$8 sm:$0xf0]
    %vm790 = vcmask 1047556
    %v791 = vsel %vm790, %v789, %v787
    %792 = vrot.lane.b32.xlu0 %v791, 56
    %v793 = vpop.permute.xlu0 %792
    %vm794 = vcmask 687552
    %s795 = scalar_lea.vmem %s1, 40
    %796 = vst.msk [vmem:[%s795] sm:$0xff] %vm794, %v793
    %s797 = scalar_lea.vmem [#allocation0], 578
    %v798 = vld [vmem:[%s797] ss:$8 sm:$0xf]
    %s799 = scalar_lea.vmem [#allocation0], 578
    %v800 = vld [vmem:[%s799] ss:$8 sm:$0xf0]
    %vm801 = vcmask 1047556
    %v802 = vsel %vm801, %v800, %v798
    %803 = vrot.lane.b32.xlu0 %v802, 56
    %v804 = vpop.permute.xlu0 %803
    %vm805 = vcmask 687552
    %s806 = scalar_lea.vmem %s1, 72
    %807 = vst.msk [vmem:[%s806] sm:$0xff] %vm805, %v804
    %s808 = scalar_lea.vmem [#allocation0], 834
    %v809 = vld [vmem:[%s808] ss:$8 sm:$0xf]
    %s810 = scalar_lea.vmem [#allocation0], 834
    %v811 = vld [vmem:[%s810] ss:$8 sm:$0xf0]
    %vm812 = vcmask 1047556
    %v813 = vsel %vm812, %v811, %v809
    %814 = vrot.lane.b32.xlu0 %v813, 56
    %v815 = vpop.permute.xlu0 %814
    %vm816 = vcmask 687552
    %s817 = scalar_lea.vmem %s1, 104
    %818 = vst.msk [vmem:[%s817] sm:$0xff] %vm816, %v815
    %s819 = scalar_lea.vmem [#allocation0], 130
    %v820 = vld [vmem:[%s819] ss:$8 sm:$0xf]
    %s821 = scalar_lea.vmem [#allocation0], 130
    %v822 = vld [vmem:[%s821] ss:$8 sm:$0xf0]
    %vm823 = vcmask 1047556
    %v824 = vsel %vm823, %v822, %v820
    %825 = vrot.lane.b32.xlu0 %v824, 56
    %v826 = vpop.permute.xlu0 %825
    %vm827 = vcmask 687552
    %s828 = scalar_lea.vmem %s1, 16
    %829 = vst.msk [vmem:[%s828] sm:$0xff] %vm827, %v826
    %s830 = scalar_lea.vmem [#allocation0], 386
    %v831 = vld [vmem:[%s830] ss:$8 sm:$0xf]
    %s832 = scalar_lea.vmem [#allocation0], 386
    %v833 = vld [vmem:[%s832] ss:$8 sm:$0xf0]
    %vm834 = vcmask 1047556
    %v835 = vsel %vm834, %v833, %v831
    %836 = vrot.lane.b32.xlu0 %v835, 56
    %v837 = vpop.permute.xlu0 %836
    %vm838 = vcmask 687552
    %s839 = scalar_lea.vmem %s1, 48
    %840 = vst.msk [vmem:[%s839] sm:$0xff] %vm838, %v837
    %s841 = scalar_lea.vmem [#allocation0], 642
    %v842 = vld [vmem:[%s841] ss:$8 sm:$0xf]
    %s843 = scalar_lea.vmem [#allocation0], 642
    %v844 = vld [vmem:[%s843] ss:$8 sm:$0xf0]
    %vm845 = vcmask 1047556
    %v846 = vsel %vm845, %v844, %v842
    %847 = vrot.lane.b32.xlu0 %v846, 56
    %v848 = vpop.permute.xlu0 %847
    %vm849 = vcmask 687552
    %s850 = scalar_lea.vmem %s1, 80
    %851 = vst.msk [vmem:[%s850] sm:$0xff] %vm849, %v848
    %s852 = scalar_lea.vmem [#allocation0], 898
    %v853 = vld [vmem:[%s852] ss:$8 sm:$0xf]
    %s854 = scalar_lea.vmem [#allocation0], 898
    %v855 = vld [vmem:[%s854] ss:$8 sm:$0xf0]
    %vm856 = vcmask 1047556
    %v857 = vsel %vm856, %v855, %v853
    %858 = vrot.lane.b32.xlu0 %v857, 56
    %v859 = vpop.permute.xlu0 %858
    %vm860 = vcmask 687552
    %s861 = scalar_lea.vmem %s1, 112
    %862 = vst.msk [vmem:[%s861] sm:$0xff] %vm860, %v859
    %s863 = scalar_lea.vmem [#allocation0], 194
    %v864 = vld [vmem:[%s863] ss:$8 sm:$0xf]
    %s865 = scalar_lea.vmem [#allocation0], 194
    %v866 = vld [vmem:[%s865] ss:$8 sm:$0xf0]
    %vm867 = vcmask 1047556
    %v868 = vsel %vm867, %v866, %v864
    %869 = vrot.lane.b32.xlu0 %v868, 56
    %v870 = vpop.permute.xlu0 %869
    %vm871 = vcmask 687552
    %s872 = scalar_lea.vmem %s1, 24
    %873 = vst.msk [vmem:[%s872] sm:$0xff] %vm871, %v870
    %s874 = scalar_lea.vmem [#allocation0], 450
    %v875 = vld [vmem:[%s874] ss:$8 sm:$0xf]
    %s876 = scalar_lea.vmem [#allocation0], 450
    %v877 = vld [vmem:[%s876] ss:$8 sm:$0xf0]
    %vm878 = vcmask 1047556
    %v879 = vsel %vm878, %v877, %v875
    %880 = vrot.lane.b32.xlu0 %v879, 56
    %v881 = vpop.permute.xlu0 %880
    %vm882 = vcmask 687552
    %s883 = scalar_lea.vmem %s1, 56
    %884 = vst.msk [vmem:[%s883] sm:$0xff] %vm882, %v881
    %s885 = scalar_lea.vmem [#allocation0], 706
    %v886 = vld [vmem:[%s885] ss:$8 sm:$0xf]
    %s887 = scalar_lea.vmem [#allocation0], 706
    %v888 = vld [vmem:[%s887] ss:$8 sm:$0xf0]
    %vm889 = vcmask 1047556
    %v890 = vsel %vm889, %v888, %v886
    %891 = vrot.lane.b32.xlu0 %v890, 56
    %v892 = vpop.permute.xlu0 %891
    %vm893 = vcmask 687552
    %s894 = scalar_lea.vmem %s1, 88
    %895 = vst.msk [vmem:[%s894] sm:$0xff] %vm893, %v892
    %s896 = scalar_lea.vmem [#allocation0], 1
    %v897 = vld [vmem:[%s896] ss:$8 sm:$0xf]
    %s898 = scalar_lea.vmem [#allocation0], 1
    %v899 = vld [vmem:[%s898] ss:$8 sm:$0xf0]
    %vm900 = vcmask 1047556
    %v901 = vsel %vm900, %v899, %v897
    %902 = vrot.lane.b32.xlu0 %v901, 28
    %v903 = vpop.permute.xlu0 %902
    %vm904 = vcmask 457952
    %905 = vst.msk [vmem:[%s1] sm:$0xff] %vm904, %v903
    %s906 = scalar_lea.vmem [#allocation0], 257
    %v907 = vld [vmem:[%s906] ss:$8 sm:$0xf]
    %s908 = scalar_lea.vmem [#allocation0], 257
    %v909 = vld [vmem:[%s908] ss:$8 sm:$0xf0]
    %vm910 = vcmask 1047556
    %v911 = vsel %vm910, %v909, %v907
    %912 = vrot.lane.b32.xlu0 %v911, 28
    %v913 = vpop.permute.xlu0 %912
    %vm914 = vcmask 457952
    %s915 = scalar_lea.vmem %s1, 32
    %916 = vst.msk [vmem:[%s915] sm:$0xff] %vm914, %v913
    %s917 = scalar_lea.vmem [#allocation0], 513
    %v918 = vld [vmem:[%s917] ss:$8 sm:$0xf]
    %s919 = scalar_lea.vmem [#allocation0], 513
    %v920 = vld [vmem:[%s919] ss:$8 sm:$0xf0]
    %vm921 = vcmask 1047556
    %v922 = vsel %vm921, %v920, %v918
    %923 = vrot.lane.b32.xlu0 %v922, 28
    %v924 = vpop.permute.xlu0 %923
    %vm925 = vcmask 457952
    %s926 = scalar_lea.vmem %s1, 64
    %927 = vst.msk [vmem:[%s926] sm:$0xff] %vm925, %v924
    %s928 = scalar_lea.vmem [#allocation0], 769
    %v929 = vld [vmem:[%s928] ss:$8 sm:$0xf]
    %s930 = scalar_lea.vmem [#allocation0], 769
    %v931 = vld [vmem:[%s930] ss:$8 sm:$0xf0]
    %vm932 = vcmask 1047556
    %v933 = vsel %vm932, %v931, %v929
    %934 = vrot.lane.b32.xlu0 %v933, 28
    %v935 = vpop.permute.xlu0 %934
    %vm936 = vcmask 457952
    %s937 = scalar_lea.vmem %s1, 96
    %938 = vst.msk [vmem:[%s937] sm:$0xff] %vm936, %v935
    %s939 = scalar_lea.vmem [#allocation0], 65
    %v940 = vld [vmem:[%s939] ss:$8 sm:$0xf]
    %s941 = scalar_lea.vmem [#allocation0], 65
    %v942 = vld [vmem:[%s941] ss:$8 sm:$0xf0]
    %vm943 = vcmask 1047556
    %v944 = vsel %vm943, %v942, %v940
    %945 = vrot.lane.b32.xlu0 %v944, 28
    %v946 = vpop.permute.xlu0 %945
    %vm947 = vcmask 457952
    %s948 = scalar_lea.vmem %s1, 8
    %949 = vst.msk [vmem:[%s948] sm:$0xff] %vm947, %v946
    %s950 = scalar_lea.vmem [#allocation0], 321
    %v951 = vld [vmem:[%s950] ss:$8 sm:$0xf]
    %s952 = scalar_lea.vmem [#allocation0], 321
    %v953 = vld [vmem:[%s952] ss:$8 sm:$0xf0]
    %vm954 = vcmask 1047556
    %v955 = vsel %vm954, %v953, %v951
    %956 = vrot.lane.b32.xlu0 %v955, 28
    %v957 = vpop.permute.xlu0 %956
    %vm958 = vcmask 457952
    %s959 = scalar_lea.vmem %s1, 40
    %960 = vst.msk [vmem:[%s959] sm:$0xff] %vm958, %v957
    %s961 = scalar_lea.vmem [#allocation0], 577
    %v962 = vld [vmem:[%s961] ss:$8 sm:$0xf]
    %s963 = scalar_lea.vmem [#allocation0], 577
    %v964 = vld [vmem:[%s963] ss:$8 sm:$0xf0]
    %vm965 = vcmask 1047556
    %v966 = vsel %vm965, %v964, %v962
    %967 = vrot.lane.b32.xlu0 %v966, 28
    %v968 = vpop.permute.xlu0 %967
    %vm969 = vcmask 457952
    %s970 = scalar_lea.vmem %s1, 72
    %971 = vst.msk [vmem:[%s970] sm:$0xff] %vm969, %v968
    %s972 = scalar_lea.vmem [#allocation0], 833
    %v973 = vld [vmem:[%s972] ss:$8 sm:$0xf]
    %s974 = scalar_lea.vmem [#allocation0], 833
    %v975 = vld [vmem:[%s974] ss:$8 sm:$0xf0]
    %vm976 = vcmask 1047556
    %v977 = vsel %vm976, %v975, %v973
    %978 = vrot.lane.b32.xlu0 %v977, 28
    %v979 = vpop.permute.xlu0 %978
    %vm980 = vcmask 457952
    %s981 = scalar_lea.vmem %s1, 104
    %982 = vst.msk [vmem:[%s981] sm:$0xff] %vm980, %v979
    %s983 = scalar_lea.vmem [#allocation0], 129
    %v984 = vld [vmem:[%s983] ss:$8 sm:$0xf]
    %s985 = scalar_lea.vmem [#allocation0], 129
    %v986 = vld [vmem:[%s985] ss:$8 sm:$0xf0]
    %vm987 = vcmask 1047556
    %v988 = vsel %vm987, %v986, %v984
    %989 = vrot.lane.b32.xlu0 %v988, 28
    %v990 = vpop.permute.xlu0 %989
    %vm991 = vcmask 457952
    %s992 = scalar_lea.vmem %s1, 16
    %993 = vst.msk [vmem:[%s992] sm:$0xff] %vm991, %v990
    %s994 = scalar_lea.vmem [#allocation0], 385
    %v995 = vld [vmem:[%s994] ss:$8 sm:$0xf]
    %s996 = scalar_lea.vmem [#allocation0], 385
    %v997 = vld [vmem:[%s996] ss:$8 sm:$0xf0]
    %vm998 = vcmask 1047556
    %v999 = vsel %vm998, %v997, %v995
    %1000 = vrot.lane.b32.xlu0 %v999, 28
    %v1001 = vpop.permute.xlu0 %1000
    %vm1002 = vcmask 457952
    %s1003 = scalar_lea.vmem %s1, 48
    %1004 = vst.msk [vmem:[%s1003] sm:$0xff] %vm1002, %v1001
    %s1005 = scalar_lea.vmem [#allocation0], 641
    %v1006 = vld [vmem:[%s1005] ss:$8 sm:$0xf]
    %s1007 = scalar_lea.vmem [#allocation0], 641
    %v1008 = vld [vmem:[%s1007] ss:$8 sm:$0xf0]
    %vm1009 = vcmask 1047556
    %v1010 = vsel %vm1009, %v1008, %v1006
    %1011 = vrot.lane.b32.xlu0 %v1010, 28
    %v1012 = vpop.permute.xlu0 %1011
    %vm1013 = vcmask 457952
    %s1014 = scalar_lea.vmem %s1, 80
    %1015 = vst.msk [vmem:[%s1014] sm:$0xff] %vm1013, %v1012
    %s1016 = scalar_lea.vmem [#allocation0], 897
    %v1017 = vld [vmem:[%s1016] ss:$8 sm:$0xf]
    %s1018 = scalar_lea.vmem [#allocation0], 897
    %v1019 = vld [vmem:[%s1018] ss:$8 sm:$0xf0]
    %vm1020 = vcmask 1047556
    %v1021 = vsel %vm1020, %v1019, %v1017
    %1022 = vrot.lane.b32.xlu0 %v1021, 28
    %v1023 = vpop.permute.xlu0 %1022
    %vm1024 = vcmask 457952
    %s1025 = scalar_lea.vmem %s1, 112
    %1026 = vst.msk [vmem:[%s1025] sm:$0xff] %vm1024, %v1023
    %s1027 = scalar_lea.vmem [#allocation0], 193
    %v1028 = vld [vmem:[%s1027] ss:$8 sm:$0xf]
    %s1029 = scalar_lea.vmem [#allocation0], 193
    %v1030 = vld [vmem:[%s1029] ss:$8 sm:$0xf0]
    %vm1031 = vcmask 1047556
    %v1032 = vsel %vm1031, %v1030, %v1028
    %1033 = vrot.lane.b32.xlu0 %v1032, 28
    %v1034 = vpop.permute.xlu0 %1033
    %vm1035 = vcmask 457952
    %s1036 = scalar_lea.vmem %s1, 24
    %1037 = vst.msk [vmem:[%s1036] sm:$0xff] %vm1035, %v1034
    %s1038 = scalar_lea.vmem [#allocation0], 449
    %v1039 = vld [vmem:[%s1038] ss:$8 sm:$0xf]
    %s1040 = scalar_lea.vmem [#allocation0], 449
    %v1041 = vld [vmem:[%s1040] ss:$8 sm:$0xf0]
    %vm1042 = vcmask 1047556
    %v1043 = vsel %vm1042, %v1041, %v1039
    %1044 = vrot.lane.b32.xlu0 %v1043, 28
    %v1045 = vpop.permute.xlu0 %1044
    %vm1046 = vcmask 457952
    %s1047 = scalar_lea.vmem %s1, 56
    %1048 = vst.msk [vmem:[%s1047] sm:$0xff] %vm1046, %v1045
    %s1049 = scalar_lea.vmem [#allocation0], 705
    %v1050 = vld [vmem:[%s1049] ss:$8 sm:$0xf]
    %s1051 = scalar_lea.vmem [#allocation0], 705
    %v1052 = vld [vmem:[%s1051] ss:$8 sm:$0xf0]
    %vm1053 = vcmask 1047556
    %v1054 = vsel %vm1053, %v1052, %v1050
    %1055 = vrot.lane.b32.xlu0 %v1054, 28
    %v1056 = vpop.permute.xlu0 %1055
    %vm1057 = vcmask 457952
    %s1058 = scalar_lea.vmem %s1, 88
    %1059 = vst.msk [vmem:[%s1058] sm:$0xff] %vm1057, %v1056

// kernel: squeeze.16
$region0: #{squeeze.16}
  %s0 = inlined_call_operand.vmem [shape: f32[1,5,8,5,12], index: 0, kind: input, shape index: {}]
  %s1 = inlined_call_operand.vmem [shape: f32[40,60], index: 1, kind: output, shape index: {}]
  %v2 = vld [vmem:[%s0] ss:$8 sm:$0xf]
  %v3 = vld [vmem:[%s0] ss:$8 sm:$0xf0]
  %vm4 = vcmask 1047556
  %v5 = vsel %vm4, %v3, %v2
  %vm6 = vcmask 97280
  %7 = vst.msk [vmem:[%s1] sm:$0xff] %vm6, %v5
  %s8 = scalar_lea.vmem %s0, 64
  %v9 = vld [vmem:[%s8] ss:$8 sm:$0xf]
  %s10 = scalar_lea.vmem %s0, 64
  %v11 = vld [vmem:[%s10] ss:$8 sm:$0xf0]
  %vm12 = vcmask 1047556
  %v13 = vsel %vm12, %v11, %v9
  %vm14 = vcmask 97280
  %s15 = scalar_lea.vmem %s1, 8
  %16 = vst.msk [vmem:[%s15] sm:$0xff] %vm14, %v13
  %s17 = scalar_lea.vmem %s0, 128
  %v18 = vld [vmem:[%s17] ss:$8 sm:$0xf]
  %s19 = scalar_lea.vmem %s0, 128
  %v20 = vld [vmem:[%s19] ss:$8 sm:$0xf0]
  %vm21 = vcmask 1047556
  %v22 = vsel %vm21, %v20, %v18
  %vm23 = vcmask 97280
  %s24 = scalar_lea.vmem %s1, 16
  %25 = vst.msk [vmem:[%s24] sm:$0xff] %vm23, %v22
  %s26 = scalar_lea.vmem %s0, 192
  %v27 = vld [vmem:[%s26] ss:$8 sm:$0xf]
  %s28 = scalar_lea.vmem %s0, 192
  %v29 = vld [vmem:[%s28] ss:$8 sm:$0xf0]
  %vm30 = vcmask 1047556
  %v31 = vsel %vm30, %v29, %v27
  %vm32 = vcmask 97280
  %s33 = scalar_lea.vmem %s1, 24
  %34 = vst.msk [vmem:[%s33] sm:$0xff] %vm32, %v31
  %s35 = scalar_lea.vmem %s0, 256
  %v36 = vld [vmem:[%s35] ss:$8 sm:$0xf]
  %s37 = scalar_lea.vmem %s0, 256
  %v38 = vld [vmem:[%s37] ss:$8 sm:$0xf0]
  %vm39 = vcmask 1047556
  %v40 = vsel %vm39, %v38, %v36
  %vm41 = vcmask 97280
  %s42 = scalar_lea.vmem %s1, 32
  %43 = vst.msk [vmem:[%s42] sm:$0xff] %vm41, %v40
  %s44 = scalar_lea.vmem %s0, 4
  %v45 = vld [vmem:[%s44] ss:$8 sm:$0xf]
  %s46 = scalar_lea.vmem %s0, 4
  %v47 = vld [vmem:[%s46] ss:$8 sm:$0xf0]
  %vm48 = vcmask 1047556
  %v49 = vsel %vm48, %v47, %v45
  %50 = vrot.lane.b32.xlu0 %v49, 48
  %v51 = vpop.permute.xlu0 %50
  %vm52 = vcmask 490880
  %53 = vst.msk [vmem:[%s1] sm:$0xff] %vm52, %v51
  %s54 = scalar_lea.vmem %s0, 260
  %v55 = vld [vmem:[%s54] ss:$8 sm:$0xf]
  %s56 = scalar_lea.vmem %s0, 260
  %v57 = vld [vmem:[%s56] ss:$8 sm:$0xf0]
  %vm58 = vcmask 1047556
  %v59 = vsel %vm58, %v57, %v55
  %60 = vrot.lane.b32.xlu0 %v59, 48
  %v61 = vpop.permute.xlu0 %60
  %vm62 = vcmask 490880
  %s63 = scalar_lea.vmem %s1, 32
  %64 = vst.msk [vmem:[%s63] sm:$0xff] %vm62, %v61
  %s65 = scalar_lea.vmem %s0, 68
  %v66 = vld [vmem:[%s65] ss:$8 sm:$0xf]
  %s67 = scalar_lea.vmem %s0, 68
  %v68 = vld [vmem:[%s67] ss:$8 sm:$0xf0]
  %vm69 = vcmask 1047556
  %v70 = vsel %vm69, %v68, %v66
  %71 = vrot.lane.b32.xlu0 %v70, 48
  %v72 = vpop.permute.xlu0 %71
  %vm73 = vcmask 490880
  %s74 = scalar_lea.vmem %s1, 8
  %75 = vst.msk [vmem:[%s74] sm:$0xff] %vm73, %v72
  %s76 = scalar_lea.vmem %s0, 132
  %v77 = vld [vmem:[%s76] ss:$8 sm:$0xf]
  %s78 = scalar_lea.vmem %s0, 132
  %v79 = vld [vmem:[%s78] ss:$8 sm:$0xf0]
  %vm80 = vcmask 1047556
  %v81 = vsel %vm80, %v79, %v77
  %82 = vrot.lane.b32.xlu0 %v81, 48
  %v83 = vpop.permute.xlu0 %82
  %vm84 = vcmask 490880
  %s85 = scalar_lea.vmem %s1, 16
  %86 = vst.msk [vmem:[%s85] sm:$0xff] %vm84, %v83
  %s87 = scalar_lea.vmem %s0, 196
  %v88 = vld [vmem:[%s87] ss:$8 sm:$0xf]
  %s89 = scalar_lea.vmem %s0, 196
  %v90 = vld [vmem:[%s89] ss:$8 sm:$0xf0]
  %vm91 = vcmask 1047556
  %v92 = vsel %vm91, %v90, %v88
  %93 = vrot.lane.b32.xlu0 %v92, 48
  %v94 = vpop.permute.xlu0 %93
  %vm95 = vcmask 490880
  %s96 = scalar_lea.vmem %s1, 24
  %97 = vst.msk [vmem:[%s96] sm:$0xff] %vm95, %v94
  %s98 = scalar_lea.vmem %s0, 3
  %v99 = vld [vmem:[%s98] ss:$8 sm:$0xf]
  %s100 = scalar_lea.vmem %s0, 3
  %v101 = vld [vmem:[%s100] ss:$8 sm:$0xf0]
  %vm102 = vcmask 1047556
  %v103 = vsel %vm102, %v101, %v99
  %104 = vrot.lane.b32.xlu0 %v103, 36
  %v105 = vpop.permute.xlu0 %104
  %vm106 = vcmask 392480
  %107 = vst.msk [vmem:[%s1] sm:$0xff] %vm106, %v105
  %s108 = scalar_lea.vmem %s0, 259
  %v109 = vld [vmem:[%s108] ss:$8 sm:$0xf]
  %s110 = scalar_lea.vmem %s0, 259
  %v111 = vld [vmem:[%s110] ss:$8 sm:$0xf0]
  %vm112 = vcmask 1047556
  %v113 = vsel %vm112, %v111, %v109
  %114 = vrot.lane.b32.xlu0 %v113, 36
  %v115 = vpop.permute.xlu0 %114
  %vm116 = vcmask 392480
  %s117 = scalar_lea.vmem %s1, 32
  %118 = vst.msk [vmem:[%s117] sm:$0xff] %vm116, %v115
  %s119 = scalar_lea.vmem %s0, 67
  %v120 = vld [vmem:[%s119] ss:$8 sm:$0xf]
  %s121 = scalar_lea.vmem %s0, 67
  %v122 = vld [vmem:[%s121] ss:$8 sm:$0xf0]
  %vm123 = vcmask 1047556
  %v124 = vsel %vm123, %v122, %v120
  %125 = vrot.lane.b32.xlu0 %v124, 36
  %v126 = vpop.permute.xlu0 %125
  %vm127 = vcmask 392480
  %s128 = scalar_lea.vmem %s1, 8
  %129 = vst.msk [vmem:[%s128] sm:$0xff] %vm127, %v126
  %s130 = scalar_lea.vmem %s0, 131
  %v131 = vld [vmem:[%s130] ss:$8 sm:$0xf]
  %s132 = scalar_lea.vmem %s0, 131
  %v133 = vld [vmem:[%s132] ss:$8 sm:$0xf0]
  %vm134 = vcmask 1047556
  %v135 = vsel %vm134, %v133, %v131
  %136 = vrot.lane.b32.xlu0 %v135, 36
  %v137 = vpop.permute.xlu0 %136
  %vm138 = vcmask 392480
  %s139 = scalar_lea.vmem %s1, 16
  %140 = vst.msk [vmem:[%s139] sm:$0xff] %vm138, %v137
  %s141 = scalar_lea.vmem %s0, 195
  %v142 = vld [vmem:[%s141] ss:$8 sm:$0xf]
  %s143 = scalar_lea.vmem %s0, 195
  %v144 = vld [vmem:[%s143] ss:$8 sm:$0xf0]
  %vm145 = vcmask 1047556
  %v146 = vsel %vm145, %v144, %v142
  %147 = vrot.lane.b32.xlu0 %v146, 36
  %v148 = vpop.permute.xlu0 %147
  %vm149 = vcmask 392480
  %s150 = scalar_lea.vmem %s1, 24
  %151 = vst.msk [vmem:[%s150] sm:$0xff] %vm149, %v148
  %s152 = scalar_lea.vmem %s0, 2
  %v153 = vld [vmem:[%s152] ss:$8 sm:$0xf]
  %s154 = scalar_lea.vmem %s0, 2
  %v155 = vld [vmem:[%s154] ss:$8 sm:$0xf0]
  %vm156 = vcmask 1047556
  %v157 = vsel %vm156, %v155, %v153
  %158 = vrot.lane.b32.xlu0 %v157, 24
  %v159 = vpop.permute.xlu0 %158
  %vm160 = vcmask 294080
  %161 = vst.msk [vmem:[%s1] sm:$0xff] %vm160, %v159
  %s162 = scalar_lea.vmem %s0, 258
  %v163 = vld [vmem:[%s162] ss:$8 sm:$0xf]
  %s164 = scalar_lea.vmem %s0, 258
  %v165 = vld [vmem:[%s164] ss:$8 sm:$0xf0]
  %vm166 = vcmask 1047556
  %v167 = vsel %vm166, %v165, %v163
  %168 = vrot.lane.b32.xlu0 %v167, 24
  %v169 = vpop.permute.xlu0 %168
  %vm170 = vcmask 294080
  %s171 = scalar_lea.vmem %s1, 32
  %172 = vst.msk [vmem:[%s171] sm:$0xff] %vm170, %v169
  %s173 = scalar_lea.vmem %s0, 66
  %v174 = vld [vmem:[%s173] ss:$8 sm:$0xf]
  %s175 = scalar_lea.vmem %s0, 66
  %v176 = vld [vmem:[%s175] ss:$8 sm:$0xf0]
  %vm177 = vcmask 1047556
  %v178 = vsel %vm177, %v176, %v174
  %179 = vrot.lane.b32.xlu0 %v178, 24
  %v180 = vpop.permute.xlu0 %179
  %vm181 = vcmask 294080
  %s182 = scalar_lea.vmem %s1, 8
  %183 = vst.msk [vmem:[%s182] sm:$0xff] %vm181, %v180
  %s184 = scalar_lea.vmem %s0, 130
  %v185 = vld [vmem:[%s184] ss:$8 sm:$0xf]
  %s186 = scalar_lea.vmem %s0, 130
  %v187 = vld [vmem:[%s186] ss:$8 sm:$0xf0]
  %vm188 = vcmask 1047556
  %v189 = vsel %vm188, %v187, %v185
  %190 = vrot.lane.b32.xlu0 %v189, 24
  %v191 = vpop.permute.xlu0 %190
  %vm192 = vcmask 294080
  %s193 = scalar_lea.vmem %s1, 16
  %194 = vst.msk [vmem:[%s193] sm:$0xff] %vm192, %v191
  %s195 = scalar_lea.vmem %s0, 194
  %v196 = vld [vmem:[%s195] ss:$8 sm:$0xf]
  %s197 = scalar_lea.vmem %s0, 194
  %v198 = vld [vmem:[%s197] ss:$8 sm:$0xf0]
  %vm199 = vcmask 1047556
  %v200 = vsel %vm199, %v198, %v196
  %201 = vrot.lane.b32.xlu0 %v200, 24
  %v202 = vpop.permute.xlu0 %201
  %vm203 = vcmask 294080
  %s204 = scalar_lea.vmem %s1, 24
  %205 = vst.msk [vmem:[%s204] sm:$0xff] %vm203, %v202
  %s206 = scalar_lea.vmem %s0, 1
  %v207 = vld [vmem:[%s206] ss:$8 sm:$0xf]
  %s208 = scalar_lea.vmem %s0, 1
  %v209 = vld [vmem:[%s208] ss:$8 sm:$0xf0]
  %vm210 = vcmask 1047556
  %v211 = vsel %vm210, %v209, %v207
  %212 = vrot.lane.b32.xlu0 %v211, 12
  %v213 = vpop.permute.xlu0 %212
  %vm214 = vcmask 195680
  %215 = vst.msk [vmem:[%s1] sm:$0xff] %vm214, %v213
  %s216 = scalar_lea.vmem %s0, 257
  %v217 = vld [vmem:[%s216] ss:$8 sm:$0xf]
  %s218 = scalar_lea.vmem %s0, 257
  %v219 = vld [vmem:[%s218] ss:$8 sm:$0xf0]
  %vm220 = vcmask 1047556
  %v221 = vsel %vm220, %v219, %v217
  %222 = vrot.lane.b32.xlu0 %v221, 12
  %v223 = vpop.permute.xlu0 %222
  %vm224 = vcmask 195680
  %s225 = scalar_lea.vmem %s1, 32
  %226 = vst.msk [vmem:[%s225] sm:$0xff] %vm224, %v223
  %s227 = scalar_lea.vmem %s0, 65
  %v228 = vld [vmem:[%s227] ss:$8 sm:$0xf]
  %s229 = scalar_lea.vmem %s0, 65
  %v230 = vld [vmem:[%s229] ss:$8 sm:$0xf0]
  %vm231 = vcmask 1047556
  %v232 = vsel %vm231, %v230, %v228
  %233 = vrot.lane.b32.xlu0 %v232, 12
  %v234 = vpop.permute.xlu0 %233
  %vm235 = vcmask 195680
  %s236 = scalar_lea.vmem %s1, 8
  %237 = vst.msk [vmem:[%s236] sm:$0xff] %vm235, %v234
  %s238 = scalar_lea.vmem %s0, 129
  %v239 = vld [vmem:[%s238] ss:$8 sm:$0xf]
  %s240 = scalar_lea.vmem %s0, 129
  %v241 = vld [vmem:[%s240] ss:$8 sm:$0xf0]
  %vm242 = vcmask 1047556
  %v243 = vsel %vm242, %v241, %v239
  %244 = vrot.lane.b32.xlu0 %v243, 12
  %v245 = vpop.permute.xlu0 %244
  %vm246 = vcmask 195680
  %s247 = scalar_lea.vmem %s1, 16
  %248 = vst.msk [vmem:[%s247] sm:$0xff] %vm246, %v245
  %s249 = scalar_lea.vmem %s0, 193
  %v250 = vld [vmem:[%s249] ss:$8 sm:$0xf]
  %s251 = scalar_lea.vmem %s0, 193
  %v252 = vld [vmem:[%s251] ss:$8 sm:$0xf0]
  %vm253 = vcmask 1047556
  %v254 = vsel %vm253, %v252, %v250
  %255 = vrot.lane.b32.xlu0 %v254, 12
  %v256 = vpop.permute.xlu0 %255
  %vm257 = vcmask 195680
  %s258 = scalar_lea.vmem %s1, 24
  %259 = vst.msk [vmem:[%s258] sm:$0xff] %vm257, %v256

// kernel: cae_forward.1
$region0: #{cae_forward.1}
  #allocation0 [shape = 'u32[]', space=smem, size = 0x4, offset = 0x4, fixed_abs, tag = 'smem constant byte address 0x4 - core index']
  #allocation1 [shape = 'u32[144,128]{1,0:T(1,128)}', space=vmem, size = 0x12000, scoped, tag = 'internal scratch']
  %s0 = inlined_call_operand.vmem [shape: f32[1848,128], index: 0, kind: input, shape index: {}]
  %s1 = inlined_call_operand.hbm [shape: f32[1,1], index: 1, kind: output, shape index: {}]
  %s2 = sld [smem:[#allocation0]]
  $region14: #{cae_forward.1} parent=0
    _
  %s4 = ssub.s32 1, %s2
  %s5 = scalar_select 0, %s4, %s2
  $region1: #{cae_forward.1} parent=0
    #allocation2 [shape = 'u8[512]{0}', space=vmem, size = 0x400, scoped, tag = 'output window, operand 0, single buffered']
    #allocation3 [shape = 's32[1]{0}', space=sflag, size = 0x4, scoped, tag = 'scoped memory for cae_forward.1']
    %6 = vsyncpa [#allocation3], 0
    // Predicated region
    $region2: #{cae_forward.1} parent=1 // pred_check
      _
    $region3: #{cae_forward.1} parent=1 // pred_check_branch
      %8 = sbr.rel (0) target = $region5
    $region4: #{cae_forward.1} parent=1 // pred_region
      _
    $region5: #{cae_forward.1} parent=1 // pred_fallthru
      _
    %v9 = vld [vmem:[%s0] sm:$0xff]
    %v10 = vld [vmem:[%s0 + $0x8] sm:$0xff]
    %v11 = vld [vmem:[%s0 + $0x10] sm:$0xff]
    %v12 = vld [vmem:[%s0 + $0x18] sm:$0xff]
    %v13 = vld [vmem:[%s0 + $0x20] sm:$0xff]
    %v14 = vld [vmem:[%s0 + $0x28] sm:$0xff]
    %v15 = vld [vmem:[%s0 + $0x30] sm:$0xff]
    %v16 = vld [vmem:[%s0 + $0x38] sm:$0xff]
    %v17 = vld [vmem:[%s0 + $0x40] sm:$0xff]
    %v18 = vld [vmem:[%s0 + $0x48] sm:$0xff]
    %v19 = vld [vmem:[%s0 + $0x50] sm:$0xf]
    %v20 = vld [vmem:[%s0 + $0x58] sm:$0xff]
    %v21 = vld [vmem:[%s0 + $0x60] sm:$0xff]
    %v22 = vld [vmem:[%s0 + $0x68] sm:$0xff]
    %v23 = vld [vmem:[%s0 + $0x70] sm:$0xff]
    %v24 = vld [vmem:[%s0 + $0x78] sm:$0xff]
    %v25 = vld [vmem:[%s0 + $0x80] sm:$0xff]
    %v26 = vld [vmem:[%s0 + $0x88] sm:$0xff]
    %v27 = vld [vmem:[%s0 + $0x90] sm:$0xff]
    %v28 = vld [vmem:[%s0 + $0x98] sm:$0xff]
    %v29 = vld [vmem:[%s0 + $0xa0] sm:$0xff]
    %v30 = vld [vmem:[%s0 + $0xa8] sm:$0xff]
    %v31 = vld [vmem:[%s0 + $0xb0] sm:$0xff]
    %v32 = vld [vmem:[%s0 + $0xb8] sm:$0xff]
    %v33 = vld [vmem:[%s0 + $0xc0] sm:$0xff]
    %v34 = vld [vmem:[%s0 + $0xc8] sm:$0xff]
    %v35 = vld [vmem:[%s0 + $0xd0] sm:$0xff]
    %v36 = vld [vmem:[%s0 + $0xd8] sm:$0xff]
    %v37 = vld [vmem:[%s0 + $0xe0] sm:$0xff]
    %v38 = vld [vmem:[%s0 + $0xe8] sm:$0xff]
    %v39 = vld [vmem:[%s0 + $0xf0] sm:$0xff]
    %v40 = vld [vmem:[%s0 + $0xf8] sm:$0xff]
    %v41 = vld [vmem:[%s0 + $0x100] sm:$0xff]
    %v42 = vld [vmem:[%s0 + $0x108] sm:$0xff]
    %v43 = vld [vmem:[%s0 + $0x110] sm:$0xff]
    %v44 = vld [vmem:[%s0 + $0x118] sm:$0xff]
    %v45 = vld [vmem:[%s0 + $0x120] sm:$0xff]
    %v46 = vld [vmem:[%s0 + $0x128] sm:$0xff]
    %v47 = vld [vmem:[%s0 + $0x130] sm:$0xff]
    %v48 = vld [vmem:[%s0 + $0x138] sm:$0xff]
    %v49 = vld [vmem:[%s0 + $0x140] sm:$0xff]
    %61 = vrot.lane.b32.xlu0 %v9, 127
    %v62 = vpop.permute.xlu0 %61
    %63 = vrot.lane.b32.xlu0 %v10, 127
    %v64 = vpop.permute.xlu0 %63
    %65 = vrot.lane.b32.xlu0 %v11, 127
    %v66 = vpop.permute.xlu0 %65
    %67 = vrot.lane.b32.xlu0 %v12, 127
    %v68 = vpop.permute.xlu0 %67
    %69 = vrot.lane.b32.xlu0 %v13, 127
    %v70 = vpop.permute.xlu0 %69
    %71 = vrot.lane.b32.xlu0 %v14, 127
    %v72 = vpop.permute.xlu0 %71
    %73 = vrot.lane.b32.xlu0 %v15, 127
    %v74 = vpop.permute.xlu0 %73
    %75 = vrot.lane.b32.xlu0 %v16, 127
    %v76 = vpop.permute.xlu0 %75
    %77 = vrot.lane.b32.xlu0 %v17, 127
    %v78 = vpop.permute.xlu0 %77
    %79 = vrot.lane.b32.xlu0 %v18, 127
    %v80 = vpop.permute.xlu0 %79
    %81 = vrot.lane.b32.xlu0 %v19, 127
    %v82 = vpop.permute.xlu0 %81
    %vm93 = vcmask 687104
    %v95 = vsel %vm93, %v35, 0
    %v98 = vsel %vm93, %v36, 0
    %v101 = vsel %vm93, %v37, 0
    %v104 = vsel %vm93, %v38, 0
    %v107 = vsel %vm93, %v39, 0
    %v110 = vsel %vm93, %v40, 0
    %v113 = vsel %vm93, %v41, 0
    %v116 = vsel %vm93, %v42, 0
    %v119 = vsel %vm93, %v43, 0
    %v122 = vsel %vm93, %v44, 0
    %v125 = vsel %vm93, %v45, 0
    %v128 = vsel %vm93, %v46, 0
    %v131 = vsel %vm93, %v47, 0
    %v134 = vsel %vm93, %v48, 0
    %v137 = vsel %vm93, %v49, 0
    %vm139 = vcmask 1043456
    %v140 = vsel %vm139, %v82, 0
    %142 = vmatprep.subr.mxu0 0.0
    %143 = vmatpush1.msra.mxu0 %v62
    %144 = vmatprep.subr.mxu0 0.0
    %145 = vmatpush1.msra.mxu0 %v64
    %146 = vmatprep.subr.mxu0 0.0
    %147 = vmatpush1.msra.mxu0 %v66
    %148 = vmatprep.subr.mxu0 0.0
    %149 = vmatpush1.msra.mxu0 %v68
    %150 = vmatprep.subr.mxu0 0.0
    %151 = vmatpush1.msra.mxu0 %v70
    %152 = vmatprep.subr.mxu0 0.0
    %153 = vmatpush1.msra.mxu0 %v72
    %154 = vmatprep.subr.mxu0 0.0
    %155 = vmatpush1.msra.mxu0 %v74
    %156 = vmatprep.subr.mxu0 0.0
    %157 = vmatpush1.msra.mxu0 %v76
    %158 = vmatprep.subr.mxu0 0.0
    %159 = vmatpush1.msra.mxu0 %v78
    %160 = vmatprep.subr.mxu0 0.0
    %161 = vmatpush1.msra.mxu0 %v80
    %162 = vmatprep.subr.mxu0 0.0
    %163 = vmatpush1.msra.mxu0 %v140
    %164 = vmatprep.subr.mxu0 0.0
    %165 = vmatpush1.msra.mxu0 0.0
    %166 = vmatprep.subr.mxu0 0.0
    %167 = vmatpush1.msra.mxu0 0.0
    %168 = vmatprep.subr.mxu0 0.0
    %169 = vmatpush1.msra.mxu0 0.0
    %170 = vmatprep.subr.mxu0 0.0
    %171 = vmatpush1.msra.mxu0 0.0
    %172 = vmatprep.subr.mxu0 0.0
    %173 = vmatpush1.msra.mxu0 0.0
    %174 = vmatprep.subr.mxu0 0.0
    %175 = vmatpush1.msra.mxu0 0.0
    %176 = vmatprep.subr.mxu0 0.0
    %177 = vmatpush1.msra.mxu0 0.0
    %178 = vmatprep.subr.mxu0 0.0
    %179 = vmatpush1.msra.mxu0 0.0
    %180 = vmatprep.subr.mxu0 0.0
    %181 = vmatpush1.msra.mxu0 0.0
    %182 = vmatprep.subr.mxu0 0.0
    %183 = vmatpush1.msra.mxu0 0.0
    %184 = vmatprep.subr.mxu0 0.0
    %185 = vmatpush1.msra.mxu0 0.0
    %186 = vmatprep.subr.mxu0 0.0
    %187 = vmatpush1.msra.mxu0 0.0
    %188 = vmatprep.subr.mxu0 0.0
    %189 = vmatpush1.msra.mxu0 0.0
    %190 = vmatprep.subr.mxu0 0.0
    %191 = vmatpush1.msra.mxu0 0.0
    %192 = vmatprep.subr.mxu0 0.0
    %193 = vmatpush1.msra.mxu0 0.0
    %194 = vmatprep.subr.mxu0 0.0
    %195 = vmatpush1.msra.mxu0 0.0
    %196 = vmatprep.subr.mxu0 0.0
    %197 = vmatpush1.msra.mxu0 0.0
    %198 = vmatprep.subr.mxu0 0.0
    %199 = vmatpush1.msra.mxu0 0.0
    %200 = vmatprep.subr.mxu0 0.0
    %201 = vmatpush1.msra.mxu0 0.0
    %202 = vmatprep.subr.mxu0 0.0
    %203 = vmatpush1.msra.mxu0 0.0
    %204 = vmatprep.subr.mxu0 0.0
    %205 = vmatpush1.msra.mxu0 0.0
    %206 = vmatprep.mubr.f32.mxu0 0.0
    %207 = vmatmul.mubr.f32.gmra.mrb[0].mxu0 %v95
    %v208 = vpop.f32.mrb[0].mxu0
    %v209 = vadd.f32 0.0, %v208
    %v210 = vpop.f32.mrb[0].mxu0
    %211 = vmatprep.mubr.f32.mxu0 0.0
    %212 = vmatmul.mubr.f32.gmra.mrb[0].mxu0 %v98
    %v213 = vpop.f32.mrb[0].mxu0
    %v214 = vadd.f32 0.0, %v213
    %v215 = vpop.f32.mrb[0].mxu0
    %216 = vmatprep.mubr.f32.mxu0 0.0
    %217 = vmatmul.mubr.f32.gmra.mrb[0].mxu0 %v101
    %v218 = vpop.f32.mrb[0].mxu0
    %v219 = vadd.f32 0.0, %v218
    %v220 = vpop.f32.mrb[0].mxu0
    %221 = vmatprep.mubr.f32.mxu0 0.0
    %222 = vmatmul.mubr.f32.gmra.mrb[0].mxu0 %v104
    %v223 = vpop.f32.mrb[0].mxu0
    %v224 = vadd.f32 0.0, %v223
    %v225 = vpop.f32.mrb[0].mxu0
    %226 = vmatprep.mubr.f32.mxu0 0.0
    %227 = vmatmul.mubr.f32.gmra.mrb[0].mxu0 %v107
    %v228 = vpop.f32.mrb[0].mxu0
    %v229 = vadd.f32 0.0, %v228
    %v230 = vpop.f32.mrb[0].mxu0
    %231 = vmatprep.mubr.f32.mxu0 0.0
    %232 = vmatmul.mubr.f32.gmra.mrb[0].mxu0 %v110
    %v233 = vpop.f32.mrb[0].mxu0
    %v234 = vadd.f32 0.0, %v233
    %v235 = vpop.f32.mrb[0].mxu0
    %236 = vmatprep.mubr.f32.mxu0 0.0
    %237 = vmatmul.mubr.f32.gmra.mrb[0].mxu0 %v113
    %v238 = vpop.f32.mrb[0].mxu0
    %v239 = vadd.f32 0.0, %v238
    %v240 = vpop.f32.mrb[0].mxu0
    %241 = vmatprep.mubr.f32.mxu0 0.0
    %242 = vmatmul.mubr.f32.gmra.mrb[0].mxu0 %v116
    %v243 = vpop.f32.mrb[0].mxu0
    %v244 = vadd.f32 0.0, %v243
    %v245 = vpop.f32.mrb[0].mxu0
    %246 = vmatprep.mubr.f32.mxu0 0.0
    %247 = vmatmul.mubr.f32.gmra.mrb[0].mxu0 %v119
    %v248 = vpop.f32.mrb[0].mxu0
    %v249 = vadd.f32 0.0, %v248
    %v250 = vpop.f32.mrb[0].mxu0
    %251 = vmatprep.mubr.f32.mxu0 0.0
    %252 = vmatmul.mubr.f32.gmra.mrb[0].mxu0 %v122
    %v253 = vpop.f32.mrb[0].mxu0
    %v254 = vadd.f32 0.0, %v253
    %v255 = vpop.f32.mrb[0].mxu0
    %256 = vmatprep.mubr.f32.mxu0 0.0
    %257 = vmatmul.mubr.f32.gmra.mrb[0].mxu0 %v125
    %v258 = vpop.f32.mrb[0].mxu0
    %v259 = vadd.f32 0.0, %v258
    %v260 = vpop.f32.mrb[0].mxu0
    %261 = vmatprep.mubr.f32.mxu0 0.0
    %262 = vmatmul.mubr.f32.gmra.mrb[0].mxu0 %v128
    %v263 = vpop.f32.mrb[0].mxu0
    %v264 = vadd.f32 0.0, %v263
    %v265 = vpop.f32.mrb[0].mxu0
    %266 = vmatprep.mubr.f32.mxu0 0.0
    %267 = vmatmul.mubr.f32.gmra.mrb[0].mxu0 %v131
    %v268 = vpop.f32.mrb[0].mxu0
    %v269 = vadd.f32 0.0, %v268
    %v270 = vpop.f32.mrb[0].mxu0
    %271 = vmatprep.mubr.f32.mxu0 0.0
    %272 = vmatmul.mubr.f32.gmra.mrb[0].mxu0 %v134
    %v273 = vpop.f32.mrb[0].mxu0
    %v274 = vadd.f32 0.0, %v273
    %v275 = vpop.f32.mrb[0].mxu0
    %276 = vmatprep.mubr.f32.mxu0 0.0
    %277 = vmatmul.mubr.f32.gmra.mrb[0].mxu0 %v137
    %v278 = vpop.f32.mrb[0].mxu0
    %v279 = vadd.f32 0.0, %v278
    %v280 = vpop.f32.mrb[0].mxu0
    %281 = vdwg.mxu0
    %v283 = vsel %vm93, %v20, 0
    %v286 = vsel %vm93, %v21, 0
    %v289 = vsel %vm93, %v22, 0
    %v292 = vsel %vm93, %v23, 0
    %v295 = vsel %vm93, %v24, 0
    %v298 = vsel %vm93, %v25, 0
    %v301 = vsel %vm93, %v26, 0
    %v304 = vsel %vm93, %v27, 0
    %v307 = vsel %vm93, %v28, 0
    %v310 = vsel %vm93, %v29, 0
    %v313 = vsel %vm93, %v30, 0
    %v316 = vsel %vm93, %v31, 0
    %v319 = vsel %vm93, %v32, 0
    %v322 = vsel %vm93, %v33, 0
    %v325 = vsel %vm93, %v34, 0
    %v327 = vsel %vm139, %v19, 0
    %329 = vmatprep.subr.mxu0 0.0
    %330 = vmatpush1.msra.mxu0 %v9
    %331 = vmatprep.subr.mxu0 0.0
    %332 = vmatpush1.msra.mxu0 %v10
    %333 = vmatprep.subr.mxu0 0.0
    %334 = vmatpush1.msra.mxu0 %v11
    %335 = vmatprep.subr.mxu0 0.0
    %336 = vmatpush1.msra.mxu0 %v12
    %337 = vmatprep.subr.mxu0 0.0
    %338 = vmatpush1.msra.mxu0 %v13
    %339 = vmatprep.subr.mxu0 0.0
    %340 = vmatpush1.msra.mxu0 %v14
    %341 = vmatprep.subr.mxu0 0.0
    %342 = vmatpush1.msra.mxu0 %v15
    %343 = vmatprep.subr.mxu0 0.0
    %344 = vmatpush1.msra.mxu0 %v16
    %345 = vmatprep.subr.mxu0 0.0
    %346 = vmatpush1.msra.mxu0 %v17
    %347 = vmatprep.subr.mxu0 0.0
    %348 = vmatpush1.msra.mxu0 %v18
    %349 = vmatprep.subr.mxu0 0.0
    %350 = vmatpush1.msra.mxu0 %v327
    %351 = vmatprep.subr.mxu0 0.0
    %352 = vmatpush1.msra.mxu0 0.0
    %353 = vmatprep.subr.mxu0 0.0
    %354 = vmatpush1.msra.mxu0 0.0
    %355 = vmatprep.subr.mxu0 0.0
    %356 = vmatpush1.msra.mxu0 0.0
    %357 = vmatprep.subr.mxu0 0.0
    %358 = vmatpush1.msra.mxu0 0.0
    %359 = vmatprep.subr.mxu0 0.0
    %360 = vmatpush1.msra.mxu0 0.0
    %361 = vmatprep.subr.mxu0 0.0
    %362 = vmatpush1.msra.mxu0 0.0
    %363 = vmatprep.subr.mxu0 0.0
    %364 = vmatpush1.msra.mxu0 0.0
    %365 = vmatprep.subr.mxu0 0.0
    %366 = vmatpush1.msra.mxu0 0.0
    %367 = vmatprep.subr.mxu0 0.0
    %368 = vmatpush1.msra.mxu0 0.0
    %369 = vmatprep.subr.mxu0 0.0
    %370 = vmatpush1.msra.mxu0 0.0
    %371 = vmatprep.subr.mxu0 0.0
    %372 = vmatpush1.msra.mxu0 0.0
    %373 = vmatprep.subr.mxu0 0.0
    %374 = vmatpush1.msra.mxu0 0.0
    %375 = vmatprep.subr.mxu0 0.0
    %376 = vmatpush1.msra.mxu0 0.0
    %377 = vmatprep.subr.mxu0 0.0
    %378 = vmatpush1.msra.mxu0 0.0
    %379 = vmatprep.subr.mxu0 0.0
    %380 = vmatpush1.msra.mxu0 0.0
    %381 = vmatprep.subr.mxu0 0.0
    %382 = vmatpush1.msra.mxu0 0.0
    %383 = vmatprep.subr.mxu0 0.0
    %384 = vmatpush1.msra.mxu0 0.0
    %385 = vmatprep.subr.mxu0 0.0
    %386 = vmatpush1.msra.mxu0 0.0
    %387 = vmatprep.subr.mxu0 0.0
    %388 = vmatpush1.msra.mxu0 0.0
    %389 = vmatprep.subr.mxu0 0.0
    %390 = vmatpush1.msra.mxu0 0.0
    %391 = vmatprep.subr.mxu0 0.0
    %392 = vmatpush1.msra.mxu0 0.0
    %393 = vmatprep.mubr.f32.mxu0 0.0
    %394 = vmatmul.mubr.f32.gmra.mrb[0].mxu0 %v283
    %v395 = vpop.f32.mrb[0].mxu0
    %v396 = vadd.f32 %v209, %v395
    %v397 = vpop.f32.mrb[0].mxu0
    %398 = vmatprep.mubr.f32.mxu0 0.0
    %399 = vmatmul.mubr.f32.gmra.mrb[0].mxu0 %v286
    %v400 = vpop.f32.mrb[0].mxu0
    %v401 = vadd.f32 %v214, %v400
    %v402 = vpop.f32.mrb[0].mxu0
    %403 = vmatprep.mubr.f32.mxu0 0.0
    %404 = vmatmul.mubr.f32.gmra.mrb[0].mxu0 %v289
    %v405 = vpop.f32.mrb[0].mxu0
    %v406 = vadd.f32 %v219, %v405
    %v407 = vpop.f32.mrb[0].mxu0
    %408 = vmatprep.mubr.f32.mxu0 0.0
    %409 = vmatmul.mubr.f32.gmra.mrb[0].mxu0 %v292
    %v410 = vpop.f32.mrb[0].mxu0
    %v411 = vadd.f32 %v224, %v410
    %v412 = vpop.f32.mrb[0].mxu0
    %413 = vmatprep.mubr.f32.mxu0 0.0
    %414 = vmatmul.mubr.f32.gmra.mrb[0].mxu0 %v295
    %v415 = vpop.f32.mrb[0].mxu0
    %v416 = vadd.f32 %v229, %v415
    %v417 = vpop.f32.mrb[0].mxu0
    %418 = vmatprep.mubr.f32.mxu0 0.0
    %419 = vmatmul.mubr.f32.gmra.mrb[0].mxu0 %v298
    %v420 = vpop.f32.mrb[0].mxu0
    %v421 = vadd.f32 %v234, %v420
    %v422 = vpop.f32.mrb[0].mxu0
    %423 = vmatprep.mubr.f32.mxu0 0.0
    %424 = vmatmul.mubr.f32.gmra.mrb[0].mxu0 %v301
    %v425 = vpop.f32.mrb[0].mxu0
    %v426 = vadd.f32 %v239, %v425
    %v427 = vpop.f32.mrb[0].mxu0
    %428 = vmatprep.mubr.f32.mxu0 0.0
    %429 = vmatmul.mubr.f32.gmra.mrb[0].mxu0 %v304
    %v430 = vpop.f32.mrb[0].mxu0
    %v431 = vadd.f32 %v244, %v430
    %v432 = vpop.f32.mrb[0].mxu0
    %433 = vmatprep.mubr.f32.mxu0 0.0
    %434 = vmatmul.mubr.f32.gmra.mrb[0].mxu0 %v307
    %v435 = vpop.f32.mrb[0].mxu0
    %v436 = vadd.f32 %v249, %v435
    %v437 = vpop.f32.mrb[0].mxu0
    %438 = vmatprep.mubr.f32.mxu0 0.0
    %439 = vmatmul.mubr.f32.gmra.mrb[0].mxu0 %v310
    %v440 = vpop.f32.mrb[0].mxu0
    %v441 = vadd.f32 %v254, %v440
    %v442 = vpop.f32.mrb[0].mxu0
    %443 = vmatprep.mubr.f32.mxu0 0.0
    %444 = vmatmul.mubr.f32.gmra.mrb[0].mxu0 %v313
    %v445 = vpop.f32.mrb[0].mxu0
    %v446 = vadd.f32 %v259, %v445
    %v447 = vpop.f32.mrb[0].mxu0
    %448 = vmatprep.mubr.f32.mxu0 0.0
    %449 = vmatmul.mubr.f32.gmra.mrb[0].mxu0 %v316
    %v450 = vpop.f32.mrb[0].mxu0
    %v451 = vadd.f32 %v264, %v450
    %v452 = vpop.f32.mrb[0].mxu0
    %453 = vmatprep.mubr.f32.mxu0 0.0
    %454 = vmatmul.mubr.f32.gmra.mrb[0].mxu0 %v319
    %v455 = vpop.f32.mrb[0].mxu0
    %v456 = vadd.f32 %v269, %v455
    %v457 = vpop.f32.mrb[0].mxu0
    %458 = vmatprep.mubr.f32.mxu0 0.0
    %459 = vmatmul.mubr.f32.gmra.mrb[0].mxu0 %v322
    %v460 = vpop.f32.mrb[0].mxu0
    %v461 = vadd.f32 %v274, %v460
    %v462 = vpop.f32.mrb[0].mxu0
    %463 = vmatprep.mubr.f32.mxu0 0.0
    %464 = vmatmul.mubr.f32.gmra.mrb[0].mxu0 %v325
    %v465 = vpop.f32.mrb[0].mxu0
    %v466 = vadd.f32 %v279, %v465
    %v467 = vpop.f32.mrb[0].mxu0
    %468 = vdwg.mxu0
    %v469 = vld [vmem:[%s0 + $0x148] sm:$0xff]
    %v470 = vld [vmem:[%s0 + $0x150] sm:$0xff]
    %v471 = vld [vmem:[%s0 + $0x158] sm:$0xff]
    %v472 = vld [vmem:[%s0 + $0x160] sm:$0xff]
    %v473 = vld [vmem:[%s0 + $0x168] sm:$0xff]
    %v474 = vld [vmem:[%s0 + $0x170] sm:$0xff]
    %v475 = vld [vmem:[%s0 + $0x178] sm:$0xff]
    %v476 = vld [vmem:[%s0 + $0x180] sm:$0xff]
    %v477 = vld [vmem:[%s0 + $0x188] sm:$0xff]
    %v478 = vld [vmem:[%s0 + $0x190] sm:$0xff]
    %v479 = vld [vmem:[%s0 + $0x198] sm:$0xff]
    %v480 = vld [vmem:[%s0 + $0x1a0] sm:$0xff]
    %v481 = vld [vmem:[%s0 + $0x1a8] sm:$0xff]
    %v482 = vld [vmem:[%s0 + $0x1b0] sm:$0xff]
    %v483 = vld [vmem:[%s0 + $0x1b8] sm:$0xff]
    %484 = vrot.lane.b32.xlu0 %v9, 126
    %v485 = vpop.permute.xlu0 %484
    %486 = vrot.lane.b32.xlu0 %v10, 126
    %v487 = vpop.permute.xlu0 %486
    %488 = vrot.lane.b32.xlu0 %v11, 126
    %v489 = vpop.permute.xlu0 %488
    %490 = vrot.lane.b32.xlu0 %v12, 126
    %v491 = vpop.permute.xlu0 %490
    %492 = vrot.lane.b32.xlu0 %v13, 126
    %v493 = vpop.permute.xlu0 %492
    %494 = vrot.lane.b32.xlu0 %v14, 126
    %v495 = vpop.permute.xlu0 %494
    %496 = vrot.lane.b32.xlu0 %v15, 126
    %v497 = vpop.permute.xlu0 %496
    %498 = vrot.lane.b32.xlu0 %v16, 126
    %v499 = vpop.permute.xlu0 %498
    %500 = vrot.lane.b32.xlu0 %v17, 126
    %v501 = vpop.permute.xlu0 %500
    %502 = vrot.lane.b32.xlu0 %v18, 126
    %v503 = vpop.permute.xlu0 %502
    %504 = vrot.lane.b32.xlu0 %v19, 126
    %v505 = vpop.permute.xlu0 %504
    %v517 = vsel %vm93, %v469, 0
    %v520 = vsel %vm93, %v470, 0
    %v523 = vsel %vm93, %v471, 0
    %v526 = vsel %vm93, %v472, 0
    %v529 = vsel %vm93, %v473, 0
    %v532 = vsel %vm93, %v474, 0
    %v535 = vsel %vm93, %v475, 0
    %v538 = vsel %vm93, %v476, 0
    %v541 = vsel %vm93, %v477, 0
    %v544 = vsel %vm93, %v478, 0
    %v547 = vsel %vm93, %v479, 0
    %v550 = vsel %vm93, %v480, 0
    %v553 = vsel %vm93, %v481, 0
    %v556 = vsel %vm93, %v482, 0
    %v559 = vsel %vm93, %v483, 0
    %v561 = vsel %vm139, %v505, 0
    %563 = vmatprep.subr.mxu0 0.0
    %564 = vmatpush1.msra.mxu0 %v485
    %565 = vmatprep.subr.mxu0 0.0
    %566 = vmatpush1.msra.mxu0 %v487
    %567 = vmatprep.subr.mxu0 0.0
    %568 = vmatpush1.msra.mxu0 %v489
    %569 = vmatprep.subr.mxu0 0.0
    %570 = vmatpush1.msra.mxu0 %v491
    %571 = vmatprep.subr.mxu0 0.0
    %572 = vmatpush1.msra.mxu0 %v493
    %573 = vmatprep.subr.mxu0 0.0
    %574 = vmatpush1.msra.mxu0 %v495
    %575 = vmatprep.subr.mxu0 0.0
    %576 = vmatpush1.msra.mxu0 %v497
    %577 = vmatprep.subr.mxu0 0.0
    %578 = vmatpush1.msra.mxu0 %v499
    %579 = vmatprep.subr.mxu0 0.0
    %580 = vmatpush1.msra.mxu0 %v501
    %581 = vmatprep.subr.mxu0 0.0
    %582 = vmatpush1.msra.mxu0 %v503
    %583 = vmatprep.subr.mxu0 0.0
    %584 = vmatpush1.msra.mxu0 %v561
    %585 = vmatprep.subr.mxu0 0.0
    %586 = vmatpush1.msra.mxu0 0.0
    %587 = vmatprep.subr.mxu0 0.0
    %588 = vmatpush1.msra.mxu0 0.0
    %589 = vmatprep.subr.mxu0 0.0
    %590 = vmatpush1.msra.mxu0 0.0
    %591 = vmatprep.subr.mxu0 0.0
    %592 = vmatpush1.msra.mxu0 0.0
    %593 = vmatprep.subr.mxu0 0.0
    %594 = vmatpush1.msra.mxu0 0.0
    %595 = vmatprep.subr.mxu0 0.0
    %596 = vmatpush1.msra.mxu0 0.0
    %597 = vmatprep.subr.mxu0 0.0
    %598 = vmatpush1.msra.mxu0 0.0
    %599 = vmatprep.subr.mxu0 0.0
    %600 = vmatpush1.msra.mxu0 0.0
    %601 = vmatprep.subr.mxu0 0.0
    %602 = vmatpush1.msra.mxu0 0.0
    %603 = vmatprep.subr.mxu0 0.0
    %604 = vmatpush1.msra.mxu0 0.0
    %605 = vmatprep.subr.mxu0 0.0
    %606 = vmatpush1.msra.mxu0 0.0
    %607 = vmatprep.subr.mxu0 0.0
    %608 = vmatpush1.msra.mxu0 0.0
    %609 = vmatprep.subr.mxu0 0.0
    %610 = vmatpush1.msra.mxu0 0.0
    %611 = vmatprep.subr.mxu0 0.0
    %612 = vmatpush1.msra.mxu0 0.0
    %613 = vmatprep.subr.mxu0 0.0
    %614 = vmatpush1.msra.mxu0 0.0
    %615 = vmatprep.subr.mxu0 0.0
    %616 = vmatpush1.msra.mxu0 0.0
    %617 = vmatprep.subr.mxu0 0.0
    %618 = vmatpush1.msra.mxu0 0.0
    %619 = vmatprep.subr.mxu0 0.0
    %620 = vmatpush1.msra.mxu0 0.0
    %621 = vmatprep.subr.mxu0 0.0
    %622 = vmatpush1.msra.mxu0 0.0
    %623 = vmatprep.subr.mxu0 0.0
    %624 = vmatpush1.msra.mxu0 0.0
    %625 = vmatprep.subr.mxu0 0.0
    %626 = vmatpush1.msra.mxu0 0.0
    %627 = vmatprep.mubr.f32.mxu0 0.0
    %628 = vmatmul.mubr.f32.gmra.mrb[0].mxu0 %v517
    %v629 = vpop.f32.mrb[0].mxu0
    %v630 = vadd.f32 0.0, %v629
    %v631 = vpop.f32.mrb[0].mxu0
    %632 = vmatprep.mubr.f32.mxu0 0.0
    %633 = vmatmul.mubr.f32.gmra.mrb[0].mxu0 %v520
    %v634 = vpop.f32.mrb[0].mxu0
    %v635 = vadd.f32 0.0, %v634
    %v636 = vpop.f32.mrb[0].mxu0
    %637 = vmatprep.mubr.f32.mxu0 0.0
    %638 = vmatmul.mubr.f32.gmra.mrb[0].mxu0 %v523
    %v639 = vpop.f32.mrb[0].mxu0
    %v640 = vadd.f32 0.0, %v639
    %v641 = vpop.f32.mrb[0].mxu0
    %642 = vmatprep.mubr.f32.mxu0 0.0
    %643 = vmatmul.mubr.f32.gmra.mrb[0].mxu0 %v526
    %v644 = vpop.f32.mrb[0].mxu0
    %v645 = vadd.f32 0.0, %v644
    %v646 = vpop.f32.mrb[0].mxu0
    %647 = vmatprep.mubr.f32.mxu0 0.0
    %648 = vmatmul.mubr.f32.gmra.mrb[0].mxu0 %v529
    %v649 = vpop.f32.mrb[0].mxu0
    %v650 = vadd.f32 0.0, %v649
    %v651 = vpop.f32.mrb[0].mxu0
    %652 = vmatprep.mubr.f32.mxu0 0.0
    %653 = vmatmul.mubr.f32.gmra.mrb[0].mxu0 %v532
    %v654 = vpop.f32.mrb[0].mxu0
    %v655 = vadd.f32 0.0, %v654
    %v656 = vpop.f32.mrb[0].mxu0
    %657 = vmatprep.mubr.f32.mxu0 0.0
    %658 = vmatmul.mubr.f32.gmra.mrb[0].mxu0 %v535
    %v659 = vpop.f32.mrb[0].mxu0
    %v660 = vadd.f32 0.0, %v659
    %v661 = vpop.f32.mrb[0].mxu0
    %662 = vmatprep.mubr.f32.mxu0 0.0
    %663 = vmatmul.mubr.f32.gmra.mrb[0].mxu0 %v538
    %v664 = vpop.f32.mrb[0].mxu0
    %v665 = vadd.f32 0.0, %v664
    %v666 = vpop.f32.mrb[0].mxu0
    %667 = vmatprep.mubr.f32.mxu0 0.0
    %668 = vmatmul.mubr.f32.gmra.mrb[0].mxu0 %v541
    %v669 = vpop.f32.mrb[0].mxu0
    %v670 = vadd.f32 0.0, %v669
    %v671 = vpop.f32.mrb[0].mxu0
    %672 = vmatprep.mubr.f32.mxu0 0.0
    %673 = vmatmul.mubr.f32.gmra.mrb[0].mxu0 %v544
    %v674 = vpop.f32.mrb[0].mxu0
    %v675 = vadd.f32 0.0, %v674
    %v676 = vpop.f32.mrb[0].mxu0
    %677 = vmatprep.mubr.f32.mxu0 0.0
    %678 = vmatmul.mubr.f32.gmra.mrb[0].mxu0 %v547
    %v679 = vpop.f32.mrb[0].mxu0
    %v680 = vadd.f32 0.0, %v679
    %v681 = vpop.f32.mrb[0].mxu0
    %682 = vmatprep.mubr.f32.mxu0 0.0
    %683 = vmatmul.mubr.f32.gmra.mrb[0].mxu0 %v550
    %v684 = vpop.f32.mrb[0].mxu0
    %v685 = vadd.f32 0.0, %v684
    %v686 = vpop.f32.mrb[0].mxu0
    %687 = vmatprep.mubr.f32.mxu0 0.0
    %688 = vmatmul.mubr.f32.gmra.mrb[0].mxu0 %v553
    %v689 = vpop.f32.mrb[0].mxu0
    %v690 = vadd.f32 0.0, %v689
    %v691 = vpop.f32.mrb[0].mxu0
    %692 = vmatprep.mubr.f32.mxu0 0.0
    %693 = vmatmul.mubr.f32.gmra.mrb[0].mxu0 %v556
    %v694 = vpop.f32.mrb[0].mxu0
    %v695 = vadd.f32 0.0, %v694
    %v696 = vpop.f32.mrb[0].mxu0
    %697 = vmatprep.mubr.f32.mxu0 0.0
    %698 = vmatmul.mubr.f32.gmra.mrb[0].mxu0 %v559
    %v699 = vpop.f32.mrb[0].mxu0
    %v700 = vadd.f32 0.0, %v699
    %v701 = vpop.f32.mrb[0].mxu0
    %702 = vdwg.mxu0
    %v703 = vadd.f32 %v396, %v630
    %v704 = vadd.f32 %v401, %v635
    %v705 = vadd.f32 %v406, %v640
    %v706 = vadd.f32 %v411, %v645
    %v707 = vadd.f32 %v416, %v650
    %v708 = vadd.f32 %v421, %v655
    %v709 = vadd.f32 %v426, %v660
    %v710 = vadd.f32 %v431, %v665
    %v711 = vadd.f32 %v436, %v670
    %v712 = vadd.f32 %v441, %v675
    %v713 = vadd.f32 %v446, %v680
    %v714 = vadd.f32 %v451, %v685
    %v715 = vadd.f32 %v456, %v690
    %v716 = vadd.f32 %v461, %v695
    %v717 = vadd.f32 %v466, %v700
    %v718 = vld [vmem:[%s0 + $0x1c0] sm:$0xff]
    %v719 = vld [vmem:[%s0 + $0x1c8] sm:$0xff]
    %v720 = vld [vmem:[%s0 + $0x1d0] sm:$0xff]
    %v721 = vld [vmem:[%s0 + $0x1d8] sm:$0xff]
    %v722 = vld [vmem:[%s0 + $0x1e0] sm:$0xff]
    %v723 = vld [vmem:[%s0 + $0x1e8] sm:$0xff]
    %v724 = vld [vmem:[%s0 + $0x1f0] sm:$0xff]
    %v725 = vld [vmem:[%s0 + $0x1f8] sm:$0xff]
    %v726 = vld [vmem:[%s0 + $0x200] sm:$0xff]
    %v727 = vld [vmem:[%s0 + $0x208] sm:$0xff]
    %v728 = vld [vmem:[%s0 + $0x210] sm:$0xff]
    %v729 = vld [vmem:[%s0 + $0x218] sm:$0xff]
    %v730 = vld [vmem:[%s0 + $0x220] sm:$0xff]
    %v731 = vld [vmem:[%s0 + $0x228] sm:$0xff]
    %v732 = vld [vmem:[%s0 + $0x230] sm:$0xff]
    %733 = vrot.lane.b32.xlu0 %v9, 125
    %v734 = vpop.permute.xlu0 %733
    %735 = vrot.lane.b32.xlu0 %v10, 125
    %v736 = vpop.permute.xlu0 %735
    %737 = vrot.lane.b32.xlu0 %v11, 125
    %v738 = vpop.permute.xlu0 %737
    %739 = vrot.lane.b32.xlu0 %v12, 125
    %v740 = vpop.permute.xlu0 %739
    %741 = vrot.lane.b32.xlu0 %v13, 125
    %v742 = vpop.permute.xlu0 %741
    %743 = vrot.lane.b32.xlu0 %v14, 125
    %v744 = vpop.permute.xlu0 %743
    %745 = vrot.lane.b32.xlu0 %v15, 125
    %v746 = vpop.permute.xlu0 %745
    %747 = vrot.lane.b32.xlu0 %v16, 125
    %v748 = vpop.permute.xlu0 %747
    %749 = vrot.lane.b32.xlu0 %v17, 125
    %v750 = vpop.permute.xlu0 %749
    %751 = vrot.lane.b32.xlu0 %v18, 125
    %v752 = vpop.permute.xlu0 %751
    %753 = vrot.lane.b32.xlu0 %v19, 125
    %v754 = vpop.permute.xlu0 %753
    %v766 = vsel %vm93, %v718, 0
    %v769 = vsel %vm93, %v719, 0
    %v772 = vsel %vm93, %v720, 0
    %v775 = vsel %vm93, %v721, 0
    %v778 = vsel %vm93, %v722, 0
    %v781 = vsel %vm93, %v723, 0
    %v784 = vsel %vm93, %v724, 0
    %v787 = vsel %vm93, %v725, 0
    %v790 = vsel %vm93, %v726, 0
    %v793 = vsel %vm93, %v727, 0
    %v796 = vsel %vm93, %v728, 0
    %v799 = vsel %vm93, %v729, 0
    %v802 = vsel %vm93, %v730, 0
    %v805 = vsel %vm93, %v731, 0
    %v808 = vsel %vm93, %v732, 0
    %v810 = vsel %vm139, %v754, 0
    %812 = vmatprep.subr.mxu0 0.0
    %813 = vmatpush1.msra.mxu0 %v734
    %814 = vmatprep.subr.mxu0 0.0
    %815 = vmatpush1.msra.mxu0 %v736
    %816 = vmatprep.subr.mxu0 0.0
    %817 = vmatpush1.msra.mxu0 %v738
    %818 = vmatprep.subr.mxu0 0.0
    %819 = vmatpush1.msra.mxu0 %v740
    %820 = vmatprep.subr.mxu0 0.0
    %821 = vmatpush1.msra.mxu0 %v742
    %822 = vmatprep.subr.mxu0 0.0
    %823 = vmatpush1.msra.mxu0 %v744
    %824 = vmatprep.subr.mxu0 0.0
    %825 = vmatpush1.msra.mxu0 %v746
    %826 = vmatprep.subr.mxu0 0.0
    %827 = vmatpush1.msra.mxu0 %v748
    %828 = vmatprep.subr.mxu0 0.0
    %829 = vmatpush1.msra.mxu0 %v750
    %830 = vmatprep.subr.mxu0 0.0
    %831 = vmatpush1.msra.mxu0 %v752
    %832 = vmatprep.subr.mxu0 0.0
    %833 = vmatpush1.msra.mxu0 %v810
    %834 = vmatprep.subr.mxu0 0.0
    %835 = vmatpush1.msra.mxu0 0.0
    %836 = vmatprep.subr.mxu0 0.0
    %837 = vmatpush1.msra.mxu0 0.0
    %838 = vmatprep.subr.mxu0 0.0
    %839 = vmatpush1.msra.mxu0 0.0
    %840 = vmatprep.subr.mxu0 0.0
    %841 = vmatpush1.msra.mxu0 0.0
    %842 = vmatprep.subr.mxu0 0.0
    %843 = vmatpush1.msra.mxu0 0.0
    %844 = vmatprep.subr.mxu0 0.0
    %845 = vmatpush1.msra.mxu0 0.0
    %846 = vmatprep.subr.mxu0 0.0
    %847 = vmatpush1.msra.mxu0 0.0
    %848 = vmatprep.subr.mxu0 0.0
    %849 = vmatpush1.msra.mxu0 0.0
    %850 = vmatprep.subr.mxu0 0.0
    %851 = vmatpush1.msra.mxu0 0.0
    %852 = vmatprep.subr.mxu0 0.0
    %853 = vmatpush1.msra.mxu0 0.0
    %854 = vmatprep.subr.mxu0 0.0
    %855 = vmatpush1.msra.mxu0 0.0
    %856 = vmatprep.subr.mxu0 0.0
    %857 = vmatpush1.msra.mxu0 0.0
    %858 = vmatprep.subr.mxu0 0.0
    %859 = vmatpush1.msra.mxu0 0.0
    %860 = vmatprep.subr.mxu0 0.0
    %861 = vmatpush1.msra.mxu0 0.0
    %862 = vmatprep.subr.mxu0 0.0
    %863 = vmatpush1.msra.mxu0 0.0
    %864 = vmatprep.subr.mxu0 0.0
    %865 = vmatpush1.msra.mxu0 0.0
    %866 = vmatprep.subr.mxu0 0.0
    %867 = vmatpush1.msra.mxu0 0.0
    %868 = vmatprep.subr.mxu0 0.0
    %869 = vmatpush1.msra.mxu0 0.0
    %870 = vmatprep.subr.mxu0 0.0
    %871 = vmatpush1.msra.mxu0 0.0
    %872 = vmatprep.subr.mxu0 0.0
    %873 = vmatpush1.msra.mxu0 0.0
    %874 = vmatprep.subr.mxu0 0.0
    %875 = vmatpush1.msra.mxu0 0.0
    %876 = vmatprep.mubr.f32.mxu0 0.0
    %877 = vmatmul.mubr.f32.gmra.mrb[0].mxu0 %v766
    %v878 = vpop.f32.mrb[0].mxu0
    %v879 = vadd.f32 0.0, %v878
    %v880 = vpop.f32.mrb[0].mxu0
    %881 = vmatprep.mubr.f32.mxu0 0.0
    %882 = vmatmul.mubr.f32.gmra.mrb[0].mxu0 %v769
    %v883 = vpop.f32.mrb[0].mxu0
    %v884 = vadd.f32 0.0, %v883
    %v885 = vpop.f32.mrb[0].mxu0
    %886 = vmatprep.mubr.f32.mxu0 0.0
    %887 = vmatmul.mubr.f32.gmra.mrb[0].mxu0 %v772
    %v888 = vpop.f32.mrb[0].mxu0
    %v889 = vadd.f32 0.0, %v888
    %v890 = vpop.f32.mrb[0].mxu0
    %891 = vmatprep.mubr.f32.mxu0 0.0
    %892 = vmatmul.mubr.f32.gmra.mrb[0].mxu0 %v775
    %v893 = vpop.f32.mrb[0].mxu0
    %v894 = vadd.f32 0.0, %v893
    %v895 = vpop.f32.mrb[0].mxu0
    %896 = vmatprep.mubr.f32.mxu0 0.0
    %897 = vmatmul.mubr.f32.gmra.mrb[0].mxu0 %v778
    %v898 = vpop.f32.mrb[0].mxu0
    %v899 = vadd.f32 0.0, %v898
    %v900 = vpop.f32.mrb[0].mxu0
    %901 = vmatprep.mubr.f32.mxu0 0.0
    %902 = vmatmul.mubr.f32.gmra.mrb[0].mxu0 %v781
    %v903 = vpop.f32.mrb[0].mxu0
    %v904 = vadd.f32 0.0, %v903
    %v905 = vpop.f32.mrb[0].mxu0
    %906 = vmatprep.mubr.f32.mxu0 0.0
    %907 = vmatmul.mubr.f32.gmra.mrb[0].mxu0 %v784
    %v908 = vpop.f32.mrb[0].mxu0
    %v909 = vadd.f32 0.0, %v908
    %v910 = vpop.f32.mrb[0].mxu0
    %911 = vmatprep.mubr.f32.mxu0 0.0
    %912 = vmatmul.mubr.f32.gmra.mrb[0].mxu0 %v787
    %v913 = vpop.f32.mrb[0].mxu0
    %v914 = vadd.f32 0.0, %v913
    %v915 = vpop.f32.mrb[0].mxu0
    %916 = vmatprep.mubr.f32.mxu0 0.0
    %917 = vmatmul.mubr.f32.gmra.mrb[0].mxu0 %v790
    %v918 = vpop.f32.mrb[0].mxu0
    %v919 = vadd.f32 0.0, %v918
    %v920 = vpop.f32.mrb[0].mxu0
    %921 = vmatprep.mubr.f32.mxu0 0.0
    %922 = vmatmul.mubr.f32.gmra.mrb[0].mxu0 %v793
    %v923 = vpop.f32.mrb[0].mxu0
    %v924 = vadd.f32 0.0, %v923
    %v925 = vpop.f32.mrb[0].mxu0
    %926 = vmatprep.mubr.f32.mxu0 0.0
    %927 = vmatmul.mubr.f32.gmra.mrb[0].mxu0 %v796
    %v928 = vpop.f32.mrb[0].mxu0
    %v929 = vadd.f32 0.0, %v928
    %v930 = vpop.f32.mrb[0].mxu0
    %931 = vmatprep.mubr.f32.mxu0 0.0
    %932 = vmatmul.mubr.f32.gmra.mrb[0].mxu0 %v799
    %v933 = vpop.f32.mrb[0].mxu0
    %v934 = vadd.f32 0.0, %v933
    %v935 = vpop.f32.mrb[0].mxu0
    %936 = vmatprep.mubr.f32.mxu0 0.0
    %937 = vmatmul.mubr.f32.gmra.mrb[0].mxu0 %v802
    %v938 = vpop.f32.mrb[0].mxu0
    %v939 = vadd.f32 0.0, %v938
    %v940 = vpop.f32.mrb[0].mxu0
    %941 = vmatprep.mubr.f32.mxu0 0.0
    %942 = vmatmul.mubr.f32.gmra.mrb[0].mxu0 %v805
    %v943 = vpop.f32.mrb[0].mxu0
    %v944 = vadd.f32 0.0, %v943
    %v945 = vpop.f32.mrb[0].mxu0
    %946 = vmatprep.mubr.f32.mxu0 0.0
    %947 = vmatmul.mubr.f32.gmra.mrb[0].mxu0 %v808
    %v948 = vpop.f32.mrb[0].mxu0
    %v949 = vadd.f32 0.0, %v948
    %v950 = vpop.f32.mrb[0].mxu0
    %951 = vdwg.mxu0
    %v952 = vadd.f32 %v703, %v879
    %v953 = vadd.f32 %v704, %v884
    %v954 = vadd.f32 %v705, %v889
    %v955 = vadd.f32 %v706, %v894
    %v956 = vadd.f32 %v707, %v899
    %v957 = vadd.f32 %v708, %v904
    %v958 = vadd.f32 %v709, %v909
    %v959 = vadd.f32 %v710, %v914
    %v960 = vadd.f32 %v711, %v919
    %v961 = vadd.f32 %v712, %v924
    %v962 = vadd.f32 %v713, %v929
    %v963 = vadd.f32 %v714, %v934
    %v964 = vadd.f32 %v715, %v939
    %v965 = vadd.f32 %v716, %v944
    %v966 = vadd.f32 %v717, %v949
    %v967 = vld [vmem:[%s0 + $0x238] sm:$0xff]
    %v968 = vld [vmem:[%s0 + $0x240] sm:$0xff]
    %v969 = vld [vmem:[%s0 + $0x248] sm:$0xff]
    %v970 = vld [vmem:[%s0 + $0x250] sm:$0xff]
    %v971 = vld [vmem:[%s0 + $0x258] sm:$0xff]
    %v972 = vld [vmem:[%s0 + $0x260] sm:$0xff]
    %v973 = vld [vmem:[%s0 + $0x268] sm:$0xff]
    %v974 = vld [vmem:[%s0 + $0x270] sm:$0xff]
    %v975 = vld [vmem:[%s0 + $0x278] sm:$0xff]
    %v976 = vld [vmem:[%s0 + $0x280] sm:$0xff]
    %v977 = vld [vmem:[%s0 + $0x288] sm:$0xff]
    %v978 = vld [vmem:[%s0 + $0x290] sm:$0xff]
    %v979 = vld [vmem:[%s0 + $0x298] sm:$0xff]
    %v980 = vld [vmem:[%s0 + $0x2a0] sm:$0xff]
    %v981 = vld [vmem:[%s0 + $0x2a8] sm:$0xff]
    %982 = vrot.lane.b32.xlu0 %v9, 124
    %v983 = vpop.permute.xlu0 %982
    %984 = vrot.lane.b32.xlu0 %v10, 124
    %v985 = vpop.permute.xlu0 %984
    %986 = vrot.lane.b32.xlu0 %v11, 124
    %v987 = vpop.permute.xlu0 %986
    %988 = vrot.lane.b32.xlu0 %v12, 124
    %v989 = vpop.permute.xlu0 %988
    %990 = vrot.lane.b32.xlu0 %v13, 124
    %v991 = vpop.permute.xlu0 %990
    %992 = vrot.lane.b32.xlu0 %v14, 124
    %v993 = vpop.permute.xlu0 %992
    %994 = vrot.lane.b32.xlu0 %v15, 124
    %v995 = vpop.permute.xlu0 %994
    %996 = vrot.lane.b32.xlu0 %v16, 124
    %v997 = vpop.permute.xlu0 %996
    %998 = vrot.lane.b32.xlu0 %v17, 124
    %v999 = vpop.permute.xlu0 %998
    %1000 = vrot.lane.b32.xlu0 %v18, 124
    %v1001 = vpop.permute.xlu0 %1000
    %1002 = vrot.lane.b32.xlu0 %v19, 124
    %v1003 = vpop.permute.xlu0 %1002
    %v1015 = vsel %vm93, %v967, 0
    %v1018 = vsel %vm93, %v968, 0
    %v1021 = vsel %vm93, %v969, 0
    %v1024 = vsel %vm93, %v970, 0
    %v1027 = vsel %vm93, %v971, 0
    %v1030 = vsel %vm93, %v972, 0
    %v1033 = vsel %vm93, %v973, 0
    %v1036 = vsel %vm93, %v974, 0
    %v1039 = vsel %vm93, %v975, 0
    %v1042 = vsel %vm93, %v976, 0
    %v1045 = vsel %vm93, %v977, 0
    %v1048 = vsel %vm93, %v978, 0
    %v1051 = vsel %vm93, %v979, 0
    %v1054 = vsel %vm93, %v980, 0
    %v1057 = vsel %vm93, %v981, 0
    %v1059 = vsel %vm139, %v1003, 0
    %1061 = vmatprep.subr.mxu0 0.0
    %1062 = vmatpush1.msra.mxu0 %v983
    %1063 = vmatprep.subr.mxu0 0.0
    %1064 = vmatpush1.msra.mxu0 %v985
    %1065 = vmatprep.subr.mxu0 0.0
    %1066 = vmatpush1.msra.mxu0 %v987
    %1067 = vmatprep.subr.mxu0 0.0
    %1068 = vmatpush1.msra.mxu0 %v989
    %1069 = vmatprep.subr.mxu0 0.0
    %1070 = vmatpush1.msra.mxu0 %v991
    %1071 = vmatprep.subr.mxu0 0.0
    %1072 = vmatpush1.msra.mxu0 %v993
    %1073 = vmatprep.subr.mxu0 0.0
    %1074 = vmatpush1.msra.mxu0 %v995
    %1075 = vmatprep.subr.mxu0 0.0
    %1076 = vmatpush1.msra.mxu0 %v997
    %1077 = vmatprep.subr.mxu0 0.0
    %1078 = vmatpush1.msra.mxu0 %v999
    %1079 = vmatprep.subr.mxu0 0.0
    %1080 = vmatpush1.msra.mxu0 %v1001
    %1081 = vmatprep.subr.mxu0 0.0
    %1082 = vmatpush1.msra.mxu0 %v1059
    %1083 = vmatprep.subr.mxu0 0.0
    %1084 = vmatpush1.msra.mxu0 0.0
    %1085 = vmatprep.subr.mxu0 0.0
    %1086 = vmatpush1.msra.mxu0 0.0
    %1087 = vmatprep.subr.mxu0 0.0
    %1088 = vmatpush1.msra.mxu0 0.0
    %1089 = vmatprep.subr.mxu0 0.0
    %1090 = vmatpush1.msra.mxu0 0.0
    %1091 = vmatprep.subr.mxu0 0.0
    %1092 = vmatpush1.msra.mxu0 0.0
    %1093 = vmatprep.subr.mxu0 0.0
    %1094 = vmatpush1.msra.mxu0 0.0
    %1095 = vmatprep.subr.mxu0 0.0
    %1096 = vmatpush1.msra.mxu0 0.0
    %1097 = vmatprep.subr.mxu0 0.0
    %1098 = vmatpush1.msra.mxu0 0.0
    %1099 = vmatprep.subr.mxu0 0.0
    %1100 = vmatpush1.msra.mxu0 0.0
    %1101 = vmatprep.subr.mxu0 0.0
    %1102 = vmatpush1.msra.mxu0 0.0
    %1103 = vmatprep.subr.mxu0 0.0
    %1104 = vmatpush1.msra.mxu0 0.0
    %1105 = vmatprep.subr.mxu0 0.0
    %1106 = vmatpush1.msra.mxu0 0.0
    %1107 = vmatprep.subr.mxu0 0.0
    %1108 = vmatpush1.msra.mxu0 0.0
    %1109 = vmatprep.subr.mxu0 0.0
    %1110 = vmatpush1.msra.mxu0 0.0
    %1111 = vmatprep.subr.mxu0 0.0
    %1112 = vmatpush1.msra.mxu0 0.0
    %1113 = vmatprep.subr.mxu0 0.0
    %1114 = vmatpush1.msra.mxu0 0.0
    %1115 = vmatprep.subr.mxu0 0.0
    %1116 = vmatpush1.msra.mxu0 0.0
    %1117 = vmatprep.subr.mxu0 0.0
    %1118 = vmatpush1.msra.mxu0 0.0
    %1119 = vmatprep.subr.mxu0 0.0
    %1120 = vmatpush1.msra.mxu0 0.0
    %1121 = vmatprep.subr.mxu0 0.0
    %1122 = vmatpush1.msra.mxu0 0.0
    %1123 = vmatprep.subr.mxu0 0.0
    %1124 = vmatpush1.msra.mxu0 0.0
    %1125 = vmatprep.mubr.f32.mxu0 0.0
    %1126 = vmatmul.mubr.f32.gmra.mrb[0].mxu0 %v1015
    %v1127 = vpop.f32.mrb[0].mxu0
    %v1128 = vadd.f32 0.0, %v1127
    %v1129 = vpop.f32.mrb[0].mxu0
    %1130 = vmatprep.mubr.f32.mxu0 0.0
    %1131 = vmatmul.mubr.f32.gmra.mrb[0].mxu0 %v1018
    %v1132 = vpop.f32.mrb[0].mxu0
    %v1133 = vadd.f32 0.0, %v1132
    %v1134 = vpop.f32.mrb[0].mxu0
    %1135 = vmatprep.mubr.f32.mxu0 0.0
    %1136 = vmatmul.mubr.f32.gmra.mrb[0].mxu0 %v1021
    %v1137 = vpop.f32.mrb[0].mxu0
    %v1138 = vadd.f32 0.0, %v1137
    %v1139 = vpop.f32.mrb[0].mxu0
    %1140 = vmatprep.mubr.f32.mxu0 0.0
    %1141 = vmatmul.mubr.f32.gmra.mrb[0].mxu0 %v1024
    %v1142 = vpop.f32.mrb[0].mxu0
    %v1143 = vadd.f32 0.0, %v1142
    %v1144 = vpop.f32.mrb[0].mxu0
    %1145 = vmatprep.mubr.f32.mxu0 0.0
    %1146 = vmatmul.mubr.f32.gmra.mrb[0].mxu0 %v1027
    %v1147 = vpop.f32.mrb[0].mxu0
    %v1148 = vadd.f32 0.0, %v1147
    %v1149 = vpop.f32.mrb[0].mxu0
    %1150 = vmatprep.mubr.f32.mxu0 0.0
    %1151 = vmatmul.mubr.f32.gmra.mrb[0].mxu0 %v1030
    %v1152 = vpop.f32.mrb[0].mxu0
    %v1153 = vadd.f32 0.0, %v1152
    %v1154 = vpop.f32.mrb[0].mxu0
    %1155 = vmatprep.mubr.f32.mxu0 0.0
    %1156 = vmatmul.mubr.f32.gmra.mrb[0].mxu0 %v1033
    %v1157 = vpop.f32.mrb[0].mxu0
    %v1158 = vadd.f32 0.0, %v1157
    %v1159 = vpop.f32.mrb[0].mxu0
    %1160 = vmatprep.mubr.f32.mxu0 0.0
    %1161 = vmatmul.mubr.f32.gmra.mrb[0].mxu0 %v1036
    %v1162 = vpop.f32.mrb[0].mxu0
    %v1163 = vadd.f32 0.0, %v1162
    %v1164 = vpop.f32.mrb[0].mxu0
    %1165 = vmatprep.mubr.f32.mxu0 0.0
    %1166 = vmatmul.mubr.f32.gmra.mrb[0].mxu0 %v1039
    %v1167 = vpop.f32.mrb[0].mxu0
    %v1168 = vadd.f32 0.0, %v1167
    %v1169 = vpop.f32.mrb[0].mxu0
    %1170 = vmatprep.mubr.f32.mxu0 0.0
    %1171 = vmatmul.mubr.f32.gmra.mrb[0].mxu0 %v1042
    %v1172 = vpop.f32.mrb[0].mxu0
    %v1173 = vadd.f32 0.0, %v1172
    %v1174 = vpop.f32.mrb[0].mxu0
    %1175 = vmatprep.mubr.f32.mxu0 0.0
    %1176 = vmatmul.mubr.f32.gmra.mrb[0].mxu0 %v1045
    %v1177 = vpop.f32.mrb[0].mxu0
    %v1178 = vadd.f32 0.0, %v1177
    %v1179 = vpop.f32.mrb[0].mxu0
    %1180 = vmatprep.mubr.f32.mxu0 0.0
    %1181 = vmatmul.mubr.f32.gmra.mrb[0].mxu0 %v1048
    %v1182 = vpop.f32.mrb[0].mxu0
    %v1183 = vadd.f32 0.0, %v1182
    %v1184 = vpop.f32.mrb[0].mxu0
    %1185 = vmatprep.mubr.f32.mxu0 0.0
    %1186 = vmatmul.mubr.f32.gmra.mrb[0].mxu0 %v1051
    %v1187 = vpop.f32.mrb[0].mxu0
    %v1188 = vadd.f32 0.0, %v1187
    %v1189 = vpop.f32.mrb[0].mxu0
    %1190 = vmatprep.mubr.f32.mxu0 0.0
    %1191 = vmatmul.mubr.f32.gmra.mrb[0].mxu0 %v1054
    %v1192 = vpop.f32.mrb[0].mxu0
    %v1193 = vadd.f32 0.0, %v1192
    %v1194 = vpop.f32.mrb[0].mxu0
    %1195 = vmatprep.mubr.f32.mxu0 0.0
    %1196 = vmatmul.mubr.f32.gmra.mrb[0].mxu0 %v1057
    %v1197 = vpop.f32.mrb[0].mxu0
    %v1198 = vadd.f32 0.0, %v1197
    %v1199 = vpop.f32.mrb[0].mxu0
    %1200 = vdwg.mxu0
    %v1201 = vadd.f32 %v952, %v1128
    %v1202 = vadd.f32 %v953, %v1133
    %v1203 = vadd.f32 %v954, %v1138
    %v1204 = vadd.f32 %v955, %v1143
    %v1205 = vadd.f32 %v956, %v1148
    %v1206 = vadd.f32 %v957, %v1153
    %v1207 = vadd.f32 %v958, %v1158
    %v1208 = vadd.f32 %v959, %v1163
    %v1209 = vadd.f32 %v960, %v1168
    %v1210 = vadd.f32 %v961, %v1173
    %v1211 = vadd.f32 %v962, %v1178
    %v1212 = vadd.f32 %v963, %v1183
    %v1213 = vadd.f32 %v964, %v1188
    %v1214 = vadd.f32 %v965, %v1193
    %v1215 = vadd.f32 %v966, %v1198
    %v1216 = vld [vmem:[%s0 + $0x2b0] sm:$0xff]
    %v1217 = vld [vmem:[%s0 + $0x2b8] sm:$0xff]
    %v1218 = vld [vmem:[%s0 + $0x2c0] sm:$0xff]
    %v1219 = vld [vmem:[%s0 + $0x2c8] sm:$0xff]
    %v1220 = vld [vmem:[%s0 + $0x2d0] sm:$0xff]
    %v1221 = vld [vmem:[%s0 + $0x2d8] sm:$0xff]
    %v1222 = vld [vmem:[%s0 + $0x2e0] sm:$0xff]
    %v1223 = vld [vmem:[%s0 + $0x2e8] sm:$0xff]
    %v1224 = vld [vmem:[%s0 + $0x2f0] sm:$0xff]
    %v1225 = vld [vmem:[%s0 + $0x2f8] sm:$0xff]
    %v1226 = vld [vmem:[%s0 + $0x300] sm:$0xff]
    %v1227 = vld [vmem:[%s0 + $0x308] sm:$0xff]
    %v1228 = vld [vmem:[%s0 + $0x310] sm:$0xff]
    %v1229 = vld [vmem:[%s0 + $0x318] sm:$0xff]
    %v1230 = vld [vmem:[%s0 + $0x320] sm:$0xff]
    %1232 = vset.pattern.permute.xlu0 0
    %1233 = vperm.xlu0 %1232, %v1216
    %v1234 = vpop.permute.xlu0 %1233
    %1237 = vset.pattern.permute.xlu0 0
    %1238 = vperm.xlu0 %1237, %v1217
    %v1239 = vpop.permute.xlu0 %1238
    %1242 = vset.pattern.permute.xlu0 0
    %1243 = vperm.xlu0 %1242, %v1218
    %v1244 = vpop.permute.xlu0 %1243
    %1247 = vset.pattern.permute.xlu0 0
    %1248 = vperm.xlu0 %1247, %v1219
    %v1249 = vpop.permute.xlu0 %1248
    %1252 = vset.pattern.permute.xlu0 0
    %1253 = vperm.xlu0 %1252, %v1220
    %v1254 = vpop.permute.xlu0 %1253
    %1257 = vset.pattern.permute.xlu0 0
    %1258 = vperm.xlu0 %1257, %v1221
    %v1259 = vpop.permute.xlu0 %1258
    %1262 = vset.pattern.permute.xlu0 0
    %1263 = vperm.xlu0 %1262, %v1222
    %v1264 = vpop.permute.xlu0 %1263
    %1267 = vset.pattern.permute.xlu0 0
    %1268 = vperm.xlu0 %1267, %v1223
    %v1269 = vpop.permute.xlu0 %1268
    %1272 = vset.pattern.permute.xlu0 0
    %1273 = vperm.xlu0 %1272, %v1224
    %v1274 = vpop.permute.xlu0 %1273
    %1277 = vset.pattern.permute.xlu0 0
    %1278 = vperm.xlu0 %1277, %v1225
    %v1279 = vpop.permute.xlu0 %1278
    %1282 = vset.pattern.permute.xlu0 0
    %1283 = vperm.xlu0 %1282, %v1226
    %v1284 = vpop.permute.xlu0 %1283
    %1287 = vset.pattern.permute.xlu0 0
    %1288 = vperm.xlu0 %1287, %v1227
    %v1289 = vpop.permute.xlu0 %1288
    %1292 = vset.pattern.permute.xlu0 0
    %1293 = vperm.xlu0 %1292, %v1228
    %v1294 = vpop.permute.xlu0 %1293
    %1297 = vset.pattern.permute.xlu0 0
    %1298 = vperm.xlu0 %1297, %v1229
    %v1299 = vpop.permute.xlu0 %1298
    %1302 = vset.pattern.permute.xlu0 0
    %1303 = vperm.xlu0 %1302, %v1230
    %v1304 = vpop.permute.xlu0 %1303
    %v1306 = vadd.f32 %v1201, %v1234
    %v1307 = vadd.f32 %v1202, %v1239
    %v1308 = vadd.f32 %v1203, %v1244
    %v1309 = vadd.f32 %v1204, %v1249
    %v1310 = vadd.f32 %v1205, %v1254
    %v1311 = vadd.f32 %v1206, %v1259
    %v1312 = vadd.f32 %v1207, %v1264
    %v1313 = vadd.f32 %v1208, %v1269
    %v1314 = vadd.f32 %v1209, %v1274
    %v1315 = vadd.f32 %v1210, %v1279
    %v1316 = vadd.f32 %v1211, %v1284
    %v1317 = vadd.f32 %v1212, %v1289
    %v1318 = vadd.f32 %v1213, %v1294
    %v1319 = vadd.f32 %v1214, %v1299
    %v1320 = vadd.f32 %v1215, %v1304
    %v1321 = vmax.f32 %v1306, 0.0
    %v1322 = vmax.f32 %v1307, 0.0
    %v1323 = vmax.f32 %v1308, 0.0
    %v1324 = vmax.f32 %v1309, 0.0
    %v1325 = vmax.f32 %v1310, 0.0
    %v1326 = vmax.f32 %v1311, 0.0
    %v1327 = vmax.f32 %v1312, 0.0
    %v1328 = vmax.f32 %v1313, 0.0
    %v1329 = vmax.f32 %v1314, 0.0
    %v1330 = vmax.f32 %v1315, 0.0
    %v1331 = vmax.f32 %v1316, 0.0
    %v1332 = vmax.f32 %v1317, 0.0
    %v1333 = vmax.f32 %v1318, 0.0
    %v1334 = vmax.f32 %v1319, 0.0
    %v1335 = vmax.f32 %v1320, 0.0
    %1351 = vrot.lane.b32.xlu0 %v1321, 127
    %v1352 = vpop.permute.xlu0 %1351
    %1353 = vrot.lane.b32.xlu0 %v1322, 127
    %v1354 = vpop.permute.xlu0 %1353
    %1355 = vrot.lane.b32.xlu0 %v1323, 127
    %v1356 = vpop.permute.xlu0 %1355
    %1357 = vrot.lane.b32.xlu0 %v1324, 127
    %v1358 = vpop.permute.xlu0 %1357
    %1359 = vrot.lane.b32.xlu0 %v1325, 127
    %v1360 = vpop.permute.xlu0 %1359
    %1361 = vrot.lane.b32.xlu0 %v1326, 127
    %v1362 = vpop.permute.xlu0 %1361
    %1363 = vrot.lane.b32.xlu0 %v1327, 127
    %v1364 = vpop.permute.xlu0 %1363
    %1365 = vrot.lane.b32.xlu0 %v1328, 127
    %v1366 = vpop.permute.xlu0 %1365
    %1367 = vrot.lane.b32.xlu0 %v1329, 127
    %v1368 = vpop.permute.xlu0 %1367
    %1369 = vrot.lane.b32.xlu0 %v1330, 127
    %v1370 = vpop.permute.xlu0 %1369
    %1371 = vrot.lane.b32.xlu0 %v1331, 127
    %v1372 = vpop.permute.xlu0 %1371
    %1373 = vrot.lane.b32.xlu0 %v1332, 127
    %v1374 = vpop.permute.xlu0 %1373
    %1375 = vrot.lane.b32.xlu0 %v1333, 127
    %v1376 = vpop.permute.xlu0 %1375
    %1377 = vrot.lane.b32.xlu0 %v1334, 127
    %v1378 = vpop.permute.xlu0 %1377
    %1379 = vrot.lane.b32.xlu0 %v1335, 127
    %v1380 = vpop.permute.xlu0 %1379
    %v1396 = vmax.f32 %v1321, %v1352
    %v1397 = vmax.f32 %v1322, %v1354
    %v1398 = vmax.f32 %v1323, %v1356
    %v1399 = vmax.f32 %v1324, %v1358
    %v1400 = vmax.f32 %v1325, %v1360
    %v1401 = vmax.f32 %v1326, %v1362
    %v1402 = vmax.f32 %v1327, %v1364
    %v1403 = vmax.f32 %v1328, %v1366
    %v1404 = vmax.f32 %v1329, %v1368
    %v1405 = vmax.f32 %v1330, %v1370
    %v1406 = vmax.f32 %v1331, %v1372
    %v1407 = vmax.f32 %v1332, %v1374
    %v1408 = vmax.f32 %v1333, %v1376
    %v1409 = vmax.f32 %v1334, %v1378
    %v1410 = vmax.f32 %v1335, %v1380
    %v1411 = vld [vmem:[%s0 + $0x418] sm:$0xff]
    %v1412 = vld [vmem:[%s0 + $0x420] sm:$0xff]
    %v1413 = vld [vmem:[%s0 + $0x428] sm:$0xff]
    %v1414 = vld [vmem:[%s0 + $0x430] sm:$0xff]
    %v1415 = vld [vmem:[%s0 + $0x438] sm:$0xff]
    %v1416 = vld [vmem:[%s0 + $0x440] sm:$0xff]
    %v1417 = vld [vmem:[%s0 + $0x448] sm:$0x7]
    %vm1418 = vcmask 416768
    %v1420 = vsel %vm1418, %v1396, 0
    %v1423 = vsel %vm1418, %v1397, 0
    %v1426 = vsel %vm1418, %v1398, 0
    %v1429 = vsel %vm1418, %v1399, 0
    %v1432 = vsel %vm1418, %v1400, 0
    %v1435 = vsel %vm1418, %v1401, 0
    %v1438 = vsel %vm1418, %v1402, 0
    %v1441 = vsel %vm1418, %v1403, 0
    %v1444 = vsel %vm1418, %v1404, 0
    %v1447 = vsel %vm1418, %v1405, 0
    %v1450 = vsel %vm1418, %v1406, 0
    %v1453 = vsel %vm1418, %v1407, 0
    %v1456 = vsel %vm1418, %v1408, 0
    %v1459 = vsel %vm1418, %v1409, 0
    %v1462 = vsel %vm1418, %v1410, 0
    %vm1464 = vcmask 1042432
    %v1466 = vsel %vm1464, %v1417, 0
    %1468 = vmatprep.subr.mxu0 0.0
    %1469 = vmatpush1.msra.mxu0 %v1411
    %1470 = vmatprep.subr.mxu0 0.0
    %1471 = vmatpush1.msra.mxu0 %v1412
    %1472 = vmatprep.subr.mxu0 0.0
    %1473 = vmatpush1.msra.mxu0 %v1413
    %1474 = vmatprep.subr.mxu0 0.0
    %1475 = vmatpush1.msra.mxu0 %v1414
    %1476 = vmatprep.subr.mxu0 0.0
    %1477 = vmatpush1.msra.mxu0 %v1415
    %1478 = vmatprep.subr.mxu0 0.0
    %1479 = vmatpush1.msra.mxu0 %v1416
    %1480 = vmatprep.subr.mxu0 0.0
    %1481 = vmatpush1.msra.mxu0 %v1466
    %1482 = vmatprep.subr.mxu0 0.0
    %1483 = vmatpush1.msra.mxu0 0.0
    %1484 = vmatprep.subr.mxu0 0.0
    %1485 = vmatpush1.msra.mxu0 0.0
    %1486 = vmatprep.subr.mxu0 0.0
    %1487 = vmatpush1.msra.mxu0 0.0
    %1488 = vmatprep.subr.mxu0 0.0
    %1489 = vmatpush1.msra.mxu0 0.0
    %1490 = vmatprep.subr.mxu0 0.0
    %1491 = vmatpush1.msra.mxu0 0.0
    %1492 = vmatprep.subr.mxu0 0.0
    %1493 = vmatpush1.msra.mxu0 0.0
    %1494 = vmatprep.subr.mxu0 0.0
    %1495 = vmatpush1.msra.mxu0 0.0
    %1496 = vmatprep.subr.mxu0 0.0
    %1497 = vmatpush1.msra.mxu0 0.0
    %1498 = vmatprep.subr.mxu0 0.0
    %1499 = vmatpush1.msra.mxu0 0.0
    %1500 = vmatprep.subr.mxu0 0.0
    %1501 = vmatpush1.msra.mxu0 0.0
    %1502 = vmatprep.subr.mxu0 0.0
    %1503 = vmatpush1.msra.mxu0 0.0
    %1504 = vmatprep.subr.mxu0 0.0
    %1505 = vmatpush1.msra.mxu0 0.0
    %1506 = vmatprep.subr.mxu0 0.0
    %1507 = vmatpush1.msra.mxu0 0.0
    %1508 = vmatprep.subr.mxu0 0.0
    %1509 = vmatpush1.msra.mxu0 0.0
    %1510 = vmatprep.subr.mxu0 0.0
    %1511 = vmatpush1.msra.mxu0 0.0
    %1512 = vmatprep.subr.mxu0 0.0
    %1513 = vmatpush1.msra.mxu0 0.0
    %1514 = vmatprep.subr.mxu0 0.0
    %1515 = vmatpush1.msra.mxu0 0.0
    %1516 = vmatprep.subr.mxu0 0.0
    %1517 = vmatpush1.msra.mxu0 0.0
    %1518 = vmatprep.subr.mxu0 0.0
    %1519 = vmatpush1.msra.mxu0 0.0
    %1520 = vmatprep.subr.mxu0 0.0
    %1521 = vmatpush1.msra.mxu0 0.0
    %1522 = vmatprep.subr.mxu0 0.0
    %1523 = vmatpush1.msra.mxu0 0.0
    %1524 = vmatprep.subr.mxu0 0.0
    %1525 = vmatpush1.msra.mxu0 0.0
    %1526 = vmatprep.subr.mxu0 0.0
    %1527 = vmatpush1.msra.mxu0 0.0
    %1528 = vmatprep.subr.mxu0 0.0
    %1529 = vmatpush1.msra.mxu0 0.0
    %1530 = vmatprep.subr.mxu0 0.0
    %1531 = vmatpush1.msra.mxu0 0.0
    %1532 = vmatprep.mubr.f32.mxu0 0.0
    %1533 = vmatmul.mubr.f32.gmra.mrb[0].mxu0 %v1420
    %v1534 = vpop.f32.mrb[0].mxu0
    %v1535 = vadd.f32 0.0, %v1534
    %v1536 = vpop.f32.mrb[0].mxu0
    %1537 = vmatprep.mubr.f32.mxu0 0.0
    %1538 = vmatmul.mubr.f32.gmra.mrb[0].mxu0 %v1423
    %v1539 = vpop.f32.mrb[0].mxu0
    %v1540 = vadd.f32 0.0, %v1539
    %v1541 = vpop.f32.mrb[0].mxu0
    %1542 = vmatprep.mubr.f32.mxu0 0.0
    %1543 = vmatmul.mubr.f32.gmra.mrb[0].mxu0 %v1426
    %v1544 = vpop.f32.mrb[0].mxu0
    %v1545 = vadd.f32 0.0, %v1544
    %v1546 = vpop.f32.mrb[0].mxu0
    %1547 = vmatprep.mubr.f32.mxu0 0.0
    %1548 = vmatmul.mubr.f32.gmra.mrb[0].mxu0 %v1429
    %v1549 = vpop.f32.mrb[0].mxu0
    %v1550 = vadd.f32 0.0, %v1549
    %v1551 = vpop.f32.mrb[0].mxu0
    %1552 = vmatprep.mubr.f32.mxu0 0.0
    %1553 = vmatmul.mubr.f32.gmra.mrb[0].mxu0 %v1432
    %v1554 = vpop.f32.mrb[0].mxu0
    %v1555 = vadd.f32 0.0, %v1554
    %v1556 = vpop.f32.mrb[0].mxu0
    %1557 = vmatprep.mubr.f32.mxu0 0.0
    %1558 = vmatmul.mubr.f32.gmra.mrb[0].mxu0 %v1435
    %v1559 = vpop.f32.mrb[0].mxu0
    %v1560 = vadd.f32 0.0, %v1559
    %v1561 = vpop.f32.mrb[0].mxu0
    %1562 = vmatprep.mubr.f32.mxu0 0.0
    %1563 = vmatmul.mubr.f32.gmra.mrb[0].mxu0 %v1438
    %v1564 = vpop.f32.mrb[0].mxu0
    %v1565 = vadd.f32 0.0, %v1564
    %v1566 = vpop.f32.mrb[0].mxu0
    %1567 = vmatprep.mubr.f32.mxu0 0.0
    %1568 = vmatmul.mubr.f32.gmra.mrb[0].mxu0 %v1441
    %v1569 = vpop.f32.mrb[0].mxu0
    %v1570 = vadd.f32 0.0, %v1569
    %v1571 = vpop.f32.mrb[0].mxu0
    %1572 = vmatprep.mubr.f32.mxu0 0.0
    %1573 = vmatmul.mubr.f32.gmra.mrb[0].mxu0 %v1444
    %v1574 = vpop.f32.mrb[0].mxu0
    %v1575 = vadd.f32 0.0, %v1574
    %v1576 = vpop.f32.mrb[0].mxu0
    %1577 = vmatprep.mubr.f32.mxu0 0.0
    %1578 = vmatmul.mubr.f32.gmra.mrb[0].mxu0 %v1447
    %v1579 = vpop.f32.mrb[0].mxu0
    %v1580 = vadd.f32 0.0, %v1579
    %v1581 = vpop.f32.mrb[0].mxu0
    %1582 = vmatprep.mubr.f32.mxu0 0.0
    %1583 = vmatmul.mubr.f32.gmra.mrb[0].mxu0 %v1450
    %v1584 = vpop.f32.mrb[0].mxu0
    %v1585 = vadd.f32 0.0, %v1584
    %v1586 = vpop.f32.mrb[0].mxu0
    %1587 = vmatprep.mubr.f32.mxu0 0.0
    %1588 = vmatmul.mubr.f32.gmra.mrb[0].mxu0 %v1453
    %v1589 = vpop.f32.mrb[0].mxu0
    %v1590 = vadd.f32 0.0, %v1589
    %v1591 = vpop.f32.mrb[0].mxu0
    %1592 = vmatprep.mubr.f32.mxu0 0.0
    %1593 = vmatmul.mubr.f32.gmra.mrb[0].mxu0 %v1456
    %v1594 = vpop.f32.mrb[0].mxu0
    %v1595 = vadd.f32 0.0, %v1594
    %v1596 = vpop.f32.mrb[0].mxu0
    %1597 = vmatprep.mubr.f32.mxu0 0.0
    %1598 = vmatmul.mubr.f32.gmra.mrb[0].mxu0 %v1459
    %v1599 = vpop.f32.mrb[0].mxu0
    %v1600 = vadd.f32 0.0, %v1599
    %v1601 = vpop.f32.mrb[0].mxu0
    %1602 = vmatprep.mubr.f32.mxu0 0.0
    %1603 = vmatmul.mubr.f32.gmra.mrb[0].mxu0 %v1462
    %v1604 = vpop.f32.mrb[0].mxu0
    %v1605 = vadd.f32 0.0, %v1604
    %v1606 = vpop.f32.mrb[0].mxu0
    %1607 = vdwg.mxu0
    %vm1623 = vcmask 1046528
    %v1624 = vrot.slane %v1535, 1
    %v1625 = vrot.slane %v1540, 1
    %v1626 = vsel %vm1623, %v1624, %v1625
    %v1627 = vrot.slane %v1545, 1
    %v1628 = vsel %vm1623, %v1625, %v1627
    %v1629 = vrot.slane %v1550, 1
    %v1630 = vsel %vm1623, %v1627, %v1629
    %v1631 = vrot.slane %v1555, 1
    %v1632 = vsel %vm1623, %v1629, %v1631
    %v1633 = vrot.slane %v1560, 1
    %v1634 = vsel %vm1623, %v1631, %v1633
    %v1635 = vrot.slane %v1565, 1
    %v1636 = vsel %vm1623, %v1633, %v1635
    %v1637 = vrot.slane %v1570, 1
    %v1638 = vsel %vm1623, %v1635, %v1637
    %v1639 = vrot.slane %v1575, 1
    %v1640 = vsel %vm1623, %v1637, %v1639
    %v1641 = vrot.slane %v1580, 1
    %v1642 = vsel %vm1623, %v1639, %v1641
    %v1643 = vrot.slane %v1585, 1
    %v1644 = vsel %vm1623, %v1641, %v1643
    %v1645 = vrot.slane %v1590, 1
    %v1646 = vsel %vm1623, %v1643, %v1645
    %v1647 = vrot.slane %v1595, 1
    %v1648 = vsel %vm1623, %v1645, %v1647
    %v1649 = vrot.slane %v1600, 1
    %v1650 = vsel %vm1623, %v1647, %v1649
    %v1651 = vrot.slane %v1605, 1
    %v1652 = vsel %vm1623, %v1649, %v1651
    %v1668 = vmax.f32 %v1535, %v1626
    %v1669 = vmax.f32 %v1540, %v1628
    %v1670 = vmax.f32 %v1545, %v1630
    %v1671 = vmax.f32 %v1550, %v1632
    %v1672 = vmax.f32 %v1555, %v1634
    %v1673 = vmax.f32 %v1560, %v1636
    %v1674 = vmax.f32 %v1565, %v1638
    %v1675 = vmax.f32 %v1570, %v1640
    %v1676 = vmax.f32 %v1575, %v1642
    %v1677 = vmax.f32 %v1580, %v1644
    %v1678 = vmax.f32 %v1585, %v1646
    %v1679 = vmax.f32 %v1590, %v1648
    %v1680 = vmax.f32 %v1595, %v1650
    %v1681 = vmax.f32 %v1600, %v1652
    %v1682 = vmax.f32 %v1605, %v1651
    %v1683 = vld [vmem:[%s0 + $0x450] sm:$0xff]
    %v1684 = vld [vmem:[%s0 + $0x458] sm:$0xff]
    %v1685 = vld [vmem:[%s0 + $0x460] sm:$0xff]
    %v1686 = vld [vmem:[%s0 + $0x468] sm:$0xff]
    %v1687 = vld [vmem:[%s0 + $0x470] sm:$0xff]
    %v1688 = vld [vmem:[%s0 + $0x478] sm:$0xff]
    %v1689 = vld [vmem:[%s0 + $0x480] sm:$0xff]
    %v1690 = vld [vmem:[%s0 + $0x488] sm:$0xf]
    %vm1691 = vcmask 973824
    %v1693 = vsel %vm1691, %v1683, 0
    %v1696 = vsel %vm1691, %v1684, 0
    %v1699 = vsel %vm1691, %v1685, 0
    %v1702 = vsel %vm1691, %v1686, 0
    %v1705 = vsel %vm1691, %v1687, 0
    %v1708 = vsel %vm1691, %v1688, 0
    %v1711 = vsel %vm1691, %v1689, 0
    %v1714 = vsel %vm1691, %v1690, 0
    %v1717 = vsel %vm1623, %v1682, 0
    %1719 = vmatprep.subr.mxu0 0.0
    %1720 = vmatpush1.msra.mxu0 %v1668
    %1721 = vmatprep.subr.mxu0 0.0
    %1722 = vmatpush1.msra.mxu0 %v1669
    %1723 = vmatprep.subr.mxu0 0.0
    %1724 = vmatpush1.msra.mxu0 %v1670
    %1725 = vmatprep.subr.mxu0 0.0
    %1726 = vmatpush1.msra.mxu0 %v1671
    %1727 = vmatprep.subr.mxu0 0.0
    %1728 = vmatpush1.msra.mxu0 %v1672
    %1729 = vmatprep.subr.mxu0 0.0
    %1730 = vmatpush1.msra.mxu0 %v1673
    %1731 = vmatprep.subr.mxu0 0.0
    %1732 = vmatpush1.msra.mxu0 %v1674
    %1733 = vmatprep.subr.mxu0 0.0
    %1734 = vmatpush1.msra.mxu0 %v1675
    %1735 = vmatprep.subr.mxu0 0.0
    %1736 = vmatpush1.msra.mxu0 %v1676
    %1737 = vmatprep.subr.mxu0 0.0
    %1738 = vmatpush1.msra.mxu0 %v1677
    %1739 = vmatprep.subr.mxu0 0.0
    %1740 = vmatpush1.msra.mxu0 %v1678
    %1741 = vmatprep.subr.mxu0 0.0
    %1742 = vmatpush1.msra.mxu0 %v1679
    %1743 = vmatprep.subr.mxu0 0.0
    %1744 = vmatpush1.msra.mxu0 %v1680
    %1745 = vmatprep.subr.mxu0 0.0
    %1746 = vmatpush1.msra.mxu0 %v1681
    %1747 = vmatprep.subr.mxu0 0.0
    %1748 = vmatpush1.msra.mxu0 %v1717
    %1749 = vmatprep.subr.mxu0 0.0
    %1750 = vmatpush1.msra.mxu0 0.0
    %1751 = vmatprep.subr.mxu0 0.0
    %1752 = vmatpush1.msra.mxu0 0.0
    %1753 = vmatprep.subr.mxu0 0.0
    %1754 = vmatpush1.msra.mxu0 0.0
    %1755 = vmatprep.subr.mxu0 0.0
    %1756 = vmatpush1.msra.mxu0 0.0
    %1757 = vmatprep.subr.mxu0 0.0
    %1758 = vmatpush1.msra.mxu0 0.0
    %1759 = vmatprep.subr.mxu0 0.0
    %1760 = vmatpush1.msra.mxu0 0.0
    %1761 = vmatprep.subr.mxu0 0.0
    %1762 = vmatpush1.msra.mxu0 0.0
    %1763 = vmatprep.subr.mxu0 0.0
    %1764 = vmatpush1.msra.mxu0 0.0
    %1765 = vmatprep.subr.mxu0 0.0
    %1766 = vmatpush1.msra.mxu0 0.0
    %1767 = vmatprep.subr.mxu0 0.0
    %1768 = vmatpush1.msra.mxu0 0.0
    %1769 = vmatprep.subr.mxu0 0.0
    %1770 = vmatpush1.msra.mxu0 0.0
    %1771 = vmatprep.subr.mxu0 0.0
    %1772 = vmatpush1.msra.mxu0 0.0
    %1773 = vmatprep.subr.mxu0 0.0
    %1774 = vmatpush1.msra.mxu0 0.0
    %1775 = vmatprep.subr.mxu0 0.0
    %1776 = vmatpush1.msra.mxu0 0.0
    %1777 = vmatprep.subr.mxu0 0.0
    %1778 = vmatpush1.msra.mxu0 0.0
    %1779 = vmatprep.subr.mxu0 0.0
    %1780 = vmatpush1.msra.mxu0 0.0
    %1781 = vmatprep.subr.mxu0 0.0
    %1782 = vmatpush1.msra.mxu0 0.0
    %1783 = vmatprep.mubr.f32.mxu0 0.0
    %1784 = vmatmul.mubr.f32.gmra.mrb[0].mxu0 %v1693
    %v1785 = vpop.f32.mrb[0].mxu0
    %v1786 = vadd.f32 0.0, %v1785
    %v1787 = vpop.f32.mrb[0].mxu0
    %1788 = vmatprep.mubr.f32.mxu0 0.0
    %1789 = vmatmul.mubr.f32.gmra.mrb[0].mxu0 %v1696
    %v1790 = vpop.f32.mrb[0].mxu0
    %v1791 = vadd.f32 0.0, %v1790
    %v1792 = vpop.f32.mrb[0].mxu0
    %1793 = vmatprep.mubr.f32.mxu0 0.0
    %1794 = vmatmul.mubr.f32.gmra.mrb[0].mxu0 %v1699
    %v1795 = vpop.f32.mrb[0].mxu0
    %v1796 = vadd.f32 0.0, %v1795
    %v1797 = vpop.f32.mrb[0].mxu0
    %1798 = vmatprep.mubr.f32.mxu0 0.0
    %1799 = vmatmul.mubr.f32.gmra.mrb[0].mxu0 %v1702
    %v1800 = vpop.f32.mrb[0].mxu0
    %v1801 = vadd.f32 0.0, %v1800
    %v1802 = vpop.f32.mrb[0].mxu0
    %1803 = vmatprep.mubr.f32.mxu0 0.0
    %1804 = vmatmul.mubr.f32.gmra.mrb[0].mxu0 %v1705
    %v1805 = vpop.f32.mrb[0].mxu0
    %v1806 = vadd.f32 0.0, %v1805
    %v1807 = vpop.f32.mrb[0].mxu0
    %1808 = vmatprep.mubr.f32.mxu0 0.0
    %1809 = vmatmul.mubr.f32.gmra.mrb[0].mxu0 %v1708
    %v1810 = vpop.f32.mrb[0].mxu0
    %v1811 = vadd.f32 0.0, %v1810
    %v1812 = vpop.f32.mrb[0].mxu0
    %1813 = vmatprep.mubr.f32.mxu0 0.0
    %1814 = vmatmul.mubr.f32.gmra.mrb[0].mxu0 %v1711
    %v1815 = vpop.f32.mrb[0].mxu0
    %v1816 = vadd.f32 0.0, %v1815
    %v1817 = vpop.f32.mrb[0].mxu0
    %1818 = vmatprep.mubr.f32.mxu0 0.0
    %1819 = vmatmul.mubr.f32.gmra.mrb[0].mxu0 %v1714
    %v1820 = vpop.f32.mrb[0].mxu0
    %v1821 = vadd.f32 0.0, %v1820
    %v1822 = vpop.f32.mrb[0].mxu0
    %1823 = vdwg.mxu0
    %v1824 = vld [vmem:[%s0 + $0x328] sm:$0xff]
    %v1825 = vld [vmem:[%s0 + $0x330] sm:$0xff]
    %v1826 = vld [vmem:[%s0 + $0x338] sm:$0xff]
    %v1827 = vld [vmem:[%s0 + $0x340] sm:$0xff]
    %v1828 = vld [vmem:[%s0 + $0x348] sm:$0xff]
    %v1829 = vld [vmem:[%s0 + $0x350] sm:$0xff]
    %v1830 = vld [vmem:[%s0 + $0x358] sm:$0xff]
    %v1831 = vld [vmem:[%s0 + $0x360] sm:$0xff]
    %v1832 = vld [vmem:[%s0 + $0x368] sm:$0xff]
    %v1833 = vld [vmem:[%s0 + $0x370] sm:$0xff]
    %1842 = vrot.lane.b32.xlu0 %v1786, 127
    %v1843 = vpop.permute.xlu0 %1842
    %1844 = vrot.lane.b32.xlu0 %v1791, 127
    %v1845 = vpop.permute.xlu0 %1844
    %1846 = vrot.lane.b32.xlu0 %v1796, 127
    %v1847 = vpop.permute.xlu0 %1846
    %1848 = vrot.lane.b32.xlu0 %v1801, 127
    %v1849 = vpop.permute.xlu0 %1848
    %1850 = vrot.lane.b32.xlu0 %v1806, 127
    %v1851 = vpop.permute.xlu0 %1850
    %1852 = vrot.lane.b32.xlu0 %v1811, 127
    %v1853 = vpop.permute.xlu0 %1852
    %1854 = vrot.lane.b32.xlu0 %v1816, 127
    %v1855 = vpop.permute.xlu0 %1854
    %1856 = vrot.lane.b32.xlu0 %v1821, 127
    %v1857 = vpop.permute.xlu0 %1856
    %vm1865 = vcmask 490496
    %v1867 = vsel %vm1865, %v1829, 0
    %v1870 = vsel %vm1865, %v1830, 0
    %v1873 = vsel %vm1865, %v1831, 0
    %v1876 = vsel %vm1865, %v1832, 0
    %v1879 = vsel %vm1865, %v1833, 0
    %v1881 = vsel %vm139, %v1857, 0
    %1883 = vmatprep.subr.mxu0 0.0
    %1884 = vmatpush1.msra.mxu0 %v1843
    %1885 = vmatprep.subr.mxu0 0.0
    %1886 = vmatpush1.msra.mxu0 %v1845
    %1887 = vmatprep.subr.mxu0 0.0
    %1888 = vmatpush1.msra.mxu0 %v1847
    %1889 = vmatprep.subr.mxu0 0.0
    %1890 = vmatpush1.msra.mxu0 %v1849
    %1891 = vmatprep.subr.mxu0 0.0
    %1892 = vmatpush1.msra.mxu0 %v1851
    %1893 = vmatprep.subr.mxu0 0.0
    %1894 = vmatpush1.msra.mxu0 %v1853
    %1895 = vmatprep.subr.mxu0 0.0
    %1896 = vmatpush1.msra.mxu0 %v1855
    %1897 = vmatprep.subr.mxu0 0.0
    %1898 = vmatpush1.msra.mxu0 %v1881
    %1899 = vmatprep.subr.mxu0 0.0
    %1900 = vmatpush1.msra.mxu0 0.0
    %1901 = vmatprep.subr.mxu0 0.0
    %1902 = vmatpush1.msra.mxu0 0.0
    %1903 = vmatprep.subr.mxu0 0.0
    %1904 = vmatpush1.msra.mxu0 0.0
    %1905 = vmatprep.subr.mxu0 0.0
    %1906 = vmatpush1.msra.mxu0 0.0
    %1907 = vmatprep.subr.mxu0 0.0
    %1908 = vmatpush1.msra.mxu0 0.0
    %1909 = vmatprep.subr.mxu0 0.0
    %1910 = vmatpush1.msra.mxu0 0.0
    %1911 = vmatprep.subr.mxu0 0.0
    %1912 = vmatpush1.msra.mxu0 0.0
    %1913 = vmatprep.subr.mxu0 0.0
    %1914 = vmatpush1.msra.mxu0 0.0
    %1915 = vmatprep.subr.mxu0 0.0
    %1916 = vmatpush1.msra.mxu0 0.0
    %1917 = vmatprep.subr.mxu0 0.0
    %1918 = vmatpush1.msra.mxu0 0.0
    %1919 = vmatprep.subr.mxu0 0.0
    %1920 = vmatpush1.msra.mxu0 0.0
    %1921 = vmatprep.subr.mxu0 0.0
    %1922 = vmatpush1.msra.mxu0 0.0
    %1923 = vmatprep.subr.mxu0 0.0
    %1924 = vmatpush1.msra.mxu0 0.0
    %1925 = vmatprep.subr.mxu0 0.0
    %1926 = vmatpush1.msra.mxu0 0.0
    %1927 = vmatprep.subr.mxu0 0.0
    %1928 = vmatpush1.msra.mxu0 0.0
    %1929 = vmatprep.subr.mxu0 0.0
    %1930 = vmatpush1.msra.mxu0 0.0
    %1931 = vmatprep.subr.mxu0 0.0
    %1932 = vmatpush1.msra.mxu0 0.0
    %1933 = vmatprep.subr.mxu0 0.0
    %1934 = vmatpush1.msra.mxu0 0.0
    %1935 = vmatprep.subr.mxu0 0.0
    %1936 = vmatpush1.msra.mxu0 0.0
    %1937 = vmatprep.subr.mxu0 0.0
    %1938 = vmatpush1.msra.mxu0 0.0
    %1939 = vmatprep.subr.mxu0 0.0
    %1940 = vmatpush1.msra.mxu0 0.0
    %1941 = vmatprep.subr.mxu0 0.0
    %1942 = vmatpush1.msra.mxu0 0.0
    %1943 = vmatprep.subr.mxu0 0.0
    %1944 = vmatpush1.msra.mxu0 0.0
    %1945 = vmatprep.subr.mxu0 0.0
    %1946 = vmatpush1.msra.mxu0 0.0
    %1947 = vmatprep.mubr.f32.mxu0 0.0
    %1948 = vmatmul.mubr.f32.gmra.mrb[0].mxu0 %v1867
    %v1949 = vpop.f32.mrb[0].mxu0
    %v1950 = vadd.f32 0.0, %v1949
    %v1951 = vpop.f32.mrb[0].mxu0
    %1952 = vmatprep.mubr.f32.mxu0 0.0
    %1953 = vmatmul.mubr.f32.gmra.mrb[0].mxu0 %v1870
    %v1954 = vpop.f32.mrb[0].mxu0
    %v1955 = vadd.f32 0.0, %v1954
    %v1956 = vpop.f32.mrb[0].mxu0
    %1957 = vmatprep.mubr.f32.mxu0 0.0
    %1958 = vmatmul.mubr.f32.gmra.mrb[0].mxu0 %v1873
    %v1959 = vpop.f32.mrb[0].mxu0
    %v1960 = vadd.f32 0.0, %v1959
    %v1961 = vpop.f32.mrb[0].mxu0
    %1962 = vmatprep.mubr.f32.mxu0 0.0
    %1963 = vmatmul.mubr.f32.gmra.mrb[0].mxu0 %v1876
    %v1964 = vpop.f32.mrb[0].mxu0
    %v1965 = vadd.f32 0.0, %v1964
    %v1966 = vpop.f32.mrb[0].mxu0
    %1967 = vmatprep.mubr.f32.mxu0 0.0
    %1968 = vmatmul.mubr.f32.gmra.mrb[0].mxu0 %v1879
    %v1969 = vpop.f32.mrb[0].mxu0
    %v1970 = vadd.f32 0.0, %v1969
    %v1971 = vpop.f32.mrb[0].mxu0
    %1972 = vdwg.mxu0
    %v1974 = vsel %vm1865, %v1824, 0
    %v1977 = vsel %vm1865, %v1825, 0
    %v1980 = vsel %vm1865, %v1826, 0
    %v1983 = vsel %vm1865, %v1827, 0
    %v1986 = vsel %vm1865, %v1828, 0
    %v1988 = vsel %vm139, %v1821, 0
    %1990 = vmatprep.subr.mxu0 0.0
    %1991 = vmatpush1.msra.mxu0 %v1786
    %1992 = vmatprep.subr.mxu0 0.0
    %1993 = vmatpush1.msra.mxu0 %v1791
    %1994 = vmatprep.subr.mxu0 0.0
    %1995 = vmatpush1.msra.mxu0 %v1796
    %1996 = vmatprep.subr.mxu0 0.0
    %1997 = vmatpush1.msra.mxu0 %v1801
    %1998 = vmatprep.subr.mxu0 0.0
    %1999 = vmatpush1.msra.mxu0 %v1806
    %2000 = vmatprep.subr.mxu0 0.0
    %2001 = vmatpush1.msra.mxu0 %v1811
    %2002 = vmatprep.subr.mxu0 0.0
    %2003 = vmatpush1.msra.mxu0 %v1816
    %2004 = vmatprep.subr.mxu0 0.0
    %2005 = vmatpush1.msra.mxu0 %v1988
    %2006 = vmatprep.subr.mxu0 0.0
    %2007 = vmatpush1.msra.mxu0 0.0
    %2008 = vmatprep.subr.mxu0 0.0
    %2009 = vmatpush1.msra.mxu0 0.0
    %2010 = vmatprep.subr.mxu0 0.0
    %2011 = vmatpush1.msra.mxu0 0.0
    %2012 = vmatprep.subr.mxu0 0.0
    %2013 = vmatpush1.msra.mxu0 0.0
    %2014 = vmatprep.subr.mxu0 0.0
    %2015 = vmatpush1.msra.mxu0 0.0
    %2016 = vmatprep.subr.mxu0 0.0
    %2017 = vmatpush1.msra.mxu0 0.0
    %2018 = vmatprep.subr.mxu0 0.0
    %2019 = vmatpush1.msra.mxu0 0.0
    %2020 = vmatprep.subr.mxu0 0.0
    %2021 = vmatpush1.msra.mxu0 0.0
    %2022 = vmatprep.subr.mxu0 0.0
    %2023 = vmatpush1.msra.mxu0 0.0
    %2024 = vmatprep.subr.mxu0 0.0
    %2025 = vmatpush1.msra.mxu0 0.0
    %2026 = vmatprep.subr.mxu0 0.0
    %2027 = vmatpush1.msra.mxu0 0.0
    %2028 = vmatprep.subr.mxu0 0.0
    %2029 = vmatpush1.msra.mxu0 0.0
    %2030 = vmatprep.subr.mxu0 0.0
    %2031 = vmatpush1.msra.mxu0 0.0
    %2032 = vmatprep.subr.mxu0 0.0
    %2033 = vmatpush1.msra.mxu0 0.0
    %2034 = vmatprep.subr.mxu0 0.0
    %2035 = vmatpush1.msra.mxu0 0.0
    %2036 = vmatprep.subr.mxu0 0.0
    %2037 = vmatpush1.msra.mxu0 0.0
    %2038 = vmatprep.subr.mxu0 0.0
    %2039 = vmatpush1.msra.mxu0 0.0
    %2040 = vmatprep.subr.mxu0 0.0
    %2041 = vmatpush1.msra.mxu0 0.0
    %2042 = vmatprep.subr.mxu0 0.0
    %2043 = vmatpush1.msra.mxu0 0.0
    %2044 = vmatprep.subr.mxu0 0.0
    %2045 = vmatpush1.msra.mxu0 0.0
    %2046 = vmatprep.subr.mxu0 0.0
    %2047 = vmatpush1.msra.mxu0 0.0
    %2048 = vmatprep.subr.mxu0 0.0
    %2049 = vmatpush1.msra.mxu0 0.0
    %2050 = vmatprep.subr.mxu0 0.0
    %2051 = vmatpush1.msra.mxu0 0.0
    %2052 = vmatprep.subr.mxu0 0.0
    %2053 = vmatpush1.msra.mxu0 0.0
    %2054 = vmatprep.mubr.f32.mxu0 0.0
    %2055 = vmatmul.mubr.f32.gmra.mrb[0].mxu0 %v1974
    %v2056 = vpop.f32.mrb[0].mxu0
    %v2057 = vadd.f32 %v1950, %v2056
    %v2058 = vpop.f32.mrb[0].mxu0
    %2059 = vmatprep.mubr.f32.mxu0 0.0
    %2060 = vmatmul.mubr.f32.gmra.mrb[0].mxu0 %v1977
    %v2061 = vpop.f32.mrb[0].mxu0
    %v2062 = vadd.f32 %v1955, %v2061
    %v2063 = vpop.f32.mrb[0].mxu0
    %2064 = vmatprep.mubr.f32.mxu0 0.0
    %2065 = vmatmul.mubr.f32.gmra.mrb[0].mxu0 %v1980
    %v2066 = vpop.f32.mrb[0].mxu0
    %v2067 = vadd.f32 %v1960, %v2066
    %v2068 = vpop.f32.mrb[0].mxu0
    %2069 = vmatprep.mubr.f32.mxu0 0.0
    %2070 = vmatmul.mubr.f32.gmra.mrb[0].mxu0 %v1983
    %v2071 = vpop.f32.mrb[0].mxu0
    %v2072 = vadd.f32 %v1965, %v2071
    %v2073 = vpop.f32.mrb[0].mxu0
    %2074 = vmatprep.mubr.f32.mxu0 0.0
    %2075 = vmatmul.mubr.f32.gmra.mrb[0].mxu0 %v1986
    %v2076 = vpop.f32.mrb[0].mxu0
    %v2077 = vadd.f32 %v1970, %v2076
    %v2078 = vpop.f32.mrb[0].mxu0
    %2079 = vdwg.mxu0
    %v2080 = vld [vmem:[%s0 + $0x378] sm:$0xff]
    %v2081 = vld [vmem:[%s0 + $0x380] sm:$0xff]
    %v2082 = vld [vmem:[%s0 + $0x388] sm:$0xff]
    %v2083 = vld [vmem:[%s0 + $0x390] sm:$0xff]
    %v2084 = vld [vmem:[%s0 + $0x398] sm:$0xff]
    %2085 = vrot.lane.b32.xlu0 %v1786, 126
    %v2086 = vpop.permute.xlu0 %2085
    %2087 = vrot.lane.b32.xlu0 %v1791, 126
    %v2088 = vpop.permute.xlu0 %2087
    %2089 = vrot.lane.b32.xlu0 %v1796, 126
    %v2090 = vpop.permute.xlu0 %2089
    %2091 = vrot.lane.b32.xlu0 %v1801, 126
    %v2092 = vpop.permute.xlu0 %2091
    %2093 = vrot.lane.b32.xlu0 %v1806, 126
    %v2094 = vpop.permute.xlu0 %2093
    %2095 = vrot.lane.b32.xlu0 %v1811, 126
    %v2096 = vpop.permute.xlu0 %2095
    %2097 = vrot.lane.b32.xlu0 %v1816, 126
    %v2098 = vpop.permute.xlu0 %2097
    %2099 = vrot.lane.b32.xlu0 %v1821, 126
    %v2100 = vpop.permute.xlu0 %2099
    %v2109 = vsel %vm1865, %v2080, 0
    %v2112 = vsel %vm1865, %v2081, 0
    %v2115 = vsel %vm1865, %v2082, 0
    %v2118 = vsel %vm1865, %v2083, 0
    %v2121 = vsel %vm1865, %v2084, 0
    %v2123 = vsel %vm139, %v2100, 0
    %2125 = vmatprep.subr.mxu0 0.0
    %2126 = vmatpush1.msra.mxu0 %v2086
    %2127 = vmatprep.subr.mxu0 0.0
    %2128 = vmatpush1.msra.mxu0 %v2088
    %2129 = vmatprep.subr.mxu0 0.0
    %2130 = vmatpush1.msra.mxu0 %v2090
    %2131 = vmatprep.subr.mxu0 0.0
    %2132 = vmatpush1.msra.mxu0 %v2092
    %2133 = vmatprep.subr.mxu0 0.0
    %2134 = vmatpush1.msra.mxu0 %v2094
    %2135 = vmatprep.subr.mxu0 0.0
    %2136 = vmatpush1.msra.mxu0 %v2096
    %2137 = vmatprep.subr.mxu0 0.0
    %2138 = vmatpush1.msra.mxu0 %v2098
    %2139 = vmatprep.subr.mxu0 0.0
    %2140 = vmatpush1.msra.mxu0 %v2123
    %2141 = vmatprep.subr.mxu0 0.0
    %2142 = vmatpush1.msra.mxu0 0.0
    %2143 = vmatprep.subr.mxu0 0.0
    %2144 = vmatpush1.msra.mxu0 0.0
    %2145 = vmatprep.subr.mxu0 0.0
    %2146 = vmatpush1.msra.mxu0 0.0
    %2147 = vmatprep.subr.mxu0 0.0
    %2148 = vmatpush1.msra.mxu0 0.0
    %2149 = vmatprep.subr.mxu0 0.0
    %2150 = vmatpush1.msra.mxu0 0.0
    %2151 = vmatprep.subr.mxu0 0.0
    %2152 = vmatpush1.msra.mxu0 0.0
    %2153 = vmatprep.subr.mxu0 0.0
    %2154 = vmatpush1.msra.mxu0 0.0
    %2155 = vmatprep.subr.mxu0 0.0
    %2156 = vmatpush1.msra.mxu0 0.0
    %2157 = vmatprep.subr.mxu0 0.0
    %2158 = vmatpush1.msra.mxu0 0.0
    %2159 = vmatprep.subr.mxu0 0.0
    %2160 = vmatpush1.msra.mxu0 0.0
    %2161 = vmatprep.subr.mxu0 0.0
    %2162 = vmatpush1.msra.mxu0 0.0
    %2163 = vmatprep.subr.mxu0 0.0
    %2164 = vmatpush1.msra.mxu0 0.0
    %2165 = vmatprep.subr.mxu0 0.0
    %2166 = vmatpush1.msra.mxu0 0.0
    %2167 = vmatprep.subr.mxu0 0.0
    %2168 = vmatpush1.msra.mxu0 0.0
    %2169 = vmatprep.subr.mxu0 0.0
    %2170 = vmatpush1.msra.mxu0 0.0
    %2171 = vmatprep.subr.mxu0 0.0
    %2172 = vmatpush1.msra.mxu0 0.0
    %2173 = vmatprep.subr.mxu0 0.0
    %2174 = vmatpush1.msra.mxu0 0.0
    %2175 = vmatprep.subr.mxu0 0.0
    %2176 = vmatpush1.msra.mxu0 0.0
    %2177 = vmatprep.subr.mxu0 0.0
    %2178 = vmatpush1.msra.mxu0 0.0
    %2179 = vmatprep.subr.mxu0 0.0
    %2180 = vmatpush1.msra.mxu0 0.0
    %2181 = vmatprep.subr.mxu0 0.0
    %2182 = vmatpush1.msra.mxu0 0.0
    %2183 = vmatprep.subr.mxu0 0.0
    %2184 = vmatpush1.msra.mxu0 0.0
    %2185 = vmatprep.subr.mxu0 0.0
    %2186 = vmatpush1.msra.mxu0 0.0
    %2187 = vmatprep.subr.mxu0 0.0
    %2188 = vmatpush1.msra.mxu0 0.0
    %2189 = vmatprep.mubr.f32.mxu0 0.0
    %2190 = vmatmul.mubr.f32.gmra.mrb[0].mxu0 %v2109
    %v2191 = vpop.f32.mrb[0].mxu0
    %v2192 = vadd.f32 0.0, %v2191
    %v2193 = vpop.f32.mrb[0].mxu0
    %2194 = vmatprep.mubr.f32.mxu0 0.0
    %2195 = vmatmul.mubr.f32.gmra.mrb[0].mxu0 %v2112
    %v2196 = vpop.f32.mrb[0].mxu0
    %v2197 = vadd.f32 0.0, %v2196
    %v2198 = vpop.f32.mrb[0].mxu0
    %2199 = vmatprep.mubr.f32.mxu0 0.0
    %2200 = vmatmul.mubr.f32.gmra.mrb[0].mxu0 %v2115
    %v2201 = vpop.f32.mrb[0].mxu0
    %v2202 = vadd.f32 0.0, %v2201
    %v2203 = vpop.f32.mrb[0].mxu0
    %2204 = vmatprep.mubr.f32.mxu0 0.0
    %2205 = vmatmul.mubr.f32.gmra.mrb[0].mxu0 %v2118
    %v2206 = vpop.f32.mrb[0].mxu0
    %v2207 = vadd.f32 0.0, %v2206
    %v2208 = vpop.f32.mrb[0].mxu0
    %2209 = vmatprep.mubr.f32.mxu0 0.0
    %2210 = vmatmul.mubr.f32.gmra.mrb[0].mxu0 %v2121
    %v2211 = vpop.f32.mrb[0].mxu0
    %v2212 = vadd.f32 0.0, %v2211
    %v2213 = vpop.f32.mrb[0].mxu0
    %2214 = vdwg.mxu0
    %v2215 = vadd.f32 %v2057, %v2192
    %v2216 = vadd.f32 %v2062, %v2197
    %v2217 = vadd.f32 %v2067, %v2202
    %v2218 = vadd.f32 %v2072, %v2207
    %v2219 = vadd.f32 %v2077, %v2212
    %v2220 = vld [vmem:[%s0 + $0x3a0] sm:$0xff]
    %v2221 = vld [vmem:[%s0 + $0x3a8] sm:$0xff]
    %v2222 = vld [vmem:[%s0 + $0x3b0] sm:$0xff]
    %v2223 = vld [vmem:[%s0 + $0x3b8] sm:$0xff]
    %v2224 = vld [vmem:[%s0 + $0x3c0] sm:$0xff]
    %2225 = vrot.lane.b32.xlu0 %v1786, 125
    %v2226 = vpop.permute.xlu0 %2225
    %2227 = vrot.lane.b32.xlu0 %v1791, 125
    %v2228 = vpop.permute.xlu0 %2227
    %2229 = vrot.lane.b32.xlu0 %v1796, 125
    %v2230 = vpop.permute.xlu0 %2229
    %2231 = vrot.lane.b32.xlu0 %v1801, 125
    %v2232 = vpop.permute.xlu0 %2231
    %2233 = vrot.lane.b32.xlu0 %v1806, 125
    %v2234 = vpop.permute.xlu0 %2233
    %2235 = vrot.lane.b32.xlu0 %v1811, 125
    %v2236 = vpop.permute.xlu0 %2235
    %2237 = vrot.lane.b32.xlu0 %v1816, 125
    %v2238 = vpop.permute.xlu0 %2237
    %2239 = vrot.lane.b32.xlu0 %v1821, 125
    %v2240 = vpop.permute.xlu0 %2239
    %v2249 = vsel %vm1865, %v2220, 0
    %v2252 = vsel %vm1865, %v2221, 0
    %v2255 = vsel %vm1865, %v2222, 0
    %v2258 = vsel %vm1865, %v2223, 0
    %v2261 = vsel %vm1865, %v2224, 0
    %v2263 = vsel %vm139, %v2240, 0
    %2265 = vmatprep.subr.mxu0 0.0
    %2266 = vmatpush1.msra.mxu0 %v2226
    %2267 = vmatprep.subr.mxu0 0.0
    %2268 = vmatpush1.msra.mxu0 %v2228
    %2269 = vmatprep.subr.mxu0 0.0
    %2270 = vmatpush1.msra.mxu0 %v2230
    %2271 = vmatprep.subr.mxu0 0.0
    %2272 = vmatpush1.msra.mxu0 %v2232
    %2273 = vmatprep.subr.mxu0 0.0
    %2274 = vmatpush1.msra.mxu0 %v2234
    %2275 = vmatprep.subr.mxu0 0.0
    %2276 = vmatpush1.msra.mxu0 %v2236
    %2277 = vmatprep.subr.mxu0 0.0
    %2278 = vmatpush1.msra.mxu0 %v2238
    %2279 = vmatprep.subr.mxu0 0.0
    %2280 = vmatpush1.msra.mxu0 %v2263
    %2281 = vmatprep.subr.mxu0 0.0
    %2282 = vmatpush1.msra.mxu0 0.0
    %2283 = vmatprep.subr.mxu0 0.0
    %2284 = vmatpush1.msra.mxu0 0.0
    %2285 = vmatprep.subr.mxu0 0.0
    %2286 = vmatpush1.msra.mxu0 0.0
    %2287 = vmatprep.subr.mxu0 0.0
    %2288 = vmatpush1.msra.mxu0 0.0
    %2289 = vmatprep.subr.mxu0 0.0
    %2290 = vmatpush1.msra.mxu0 0.0
    %2291 = vmatprep.subr.mxu0 0.0
    %2292 = vmatpush1.msra.mxu0 0.0
    %2293 = vmatprep.subr.mxu0 0.0
    %2294 = vmatpush1.msra.mxu0 0.0
    %2295 = vmatprep.subr.mxu0 0.0
    %2296 = vmatpush1.msra.mxu0 0.0
    %2297 = vmatprep.subr.mxu0 0.0
    %2298 = vmatpush1.msra.mxu0 0.0
    %2299 = vmatprep.subr.mxu0 0.0
    %2300 = vmatpush1.msra.mxu0 0.0
    %2301 = vmatprep.subr.mxu0 0.0
    %2302 = vmatpush1.msra.mxu0 0.0
    %2303 = vmatprep.subr.mxu0 0.0
    %2304 = vmatpush1.msra.mxu0 0.0
    %2305 = vmatprep.subr.mxu0 0.0
    %2306 = vmatpush1.msra.mxu0 0.0
    %2307 = vmatprep.subr.mxu0 0.0
    %2308 = vmatpush1.msra.mxu0 0.0
    %2309 = vmatprep.subr.mxu0 0.0
    %2310 = vmatpush1.msra.mxu0 0.0
    %2311 = vmatprep.subr.mxu0 0.0
    %2312 = vmatpush1.msra.mxu0 0.0
    %2313 = vmatprep.subr.mxu0 0.0
    %2314 = vmatpush1.msra.mxu0 0.0
    %2315 = vmatprep.subr.mxu0 0.0
    %2316 = vmatpush1.msra.mxu0 0.0
    %2317 = vmatprep.subr.mxu0 0.0
    %2318 = vmatpush1.msra.mxu0 0.0
    %2319 = vmatprep.subr.mxu0 0.0
    %2320 = vmatpush1.msra.mxu0 0.0
    %2321 = vmatprep.subr.mxu0 0.0
    %2322 = vmatpush1.msra.mxu0 0.0
    %2323 = vmatprep.subr.mxu0 0.0
    %2324 = vmatpush1.msra.mxu0 0.0
    %2325 = vmatprep.subr.mxu0 0.0
    %2326 = vmatpush1.msra.mxu0 0.0
    %2327 = vmatprep.subr.mxu0 0.0
    %2328 = vmatpush1.msra.mxu0 0.0
    %2329 = vmatprep.mubr.f32.mxu0 0.0
    %2330 = vmatmul.mubr.f32.gmra.mrb[0].mxu0 %v2249
    %v2331 = vpop.f32.mrb[0].mxu0
    %v2332 = vadd.f32 0.0, %v2331
    %v2333 = vpop.f32.mrb[0].mxu0
    %2334 = vmatprep.mubr.f32.mxu0 0.0
    %2335 = vmatmul.mubr.f32.gmra.mrb[0].mxu0 %v2252
    %v2336 = vpop.f32.mrb[0].mxu0
    %v2337 = vadd.f32 0.0, %v2336
    %v2338 = vpop.f32.mrb[0].mxu0
    %2339 = vmatprep.mubr.f32.mxu0 0.0
    %2340 = vmatmul.mubr.f32.gmra.mrb[0].mxu0 %v2255
    %v2341 = vpop.f32.mrb[0].mxu0
    %v2342 = vadd.f32 0.0, %v2341
    %v2343 = vpop.f32.mrb[0].mxu0
    %2344 = vmatprep.mubr.f32.mxu0 0.0
    %2345 = vmatmul.mubr.f32.gmra.mrb[0].mxu0 %v2258
    %v2346 = vpop.f32.mrb[0].mxu0
    %v2347 = vadd.f32 0.0, %v2346
    %v2348 = vpop.f32.mrb[0].mxu0
    %2349 = vmatprep.mubr.f32.mxu0 0.0
    %2350 = vmatmul.mubr.f32.gmra.mrb[0].mxu0 %v2261
    %v2351 = vpop.f32.mrb[0].mxu0
    %v2352 = vadd.f32 0.0, %v2351
    %v2353 = vpop.f32.mrb[0].mxu0
    %2354 = vdwg.mxu0
    %v2355 = vadd.f32 %v2215, %v2332
    %v2356 = vadd.f32 %v2216, %v2337
    %v2357 = vadd.f32 %v2217, %v2342
    %v2358 = vadd.f32 %v2218, %v2347
    %v2359 = vadd.f32 %v2219, %v2352
    %v2360 = vld [vmem:[%s0 + $0x3c8] sm:$0xff]
    %v2361 = vld [vmem:[%s0 + $0x3d0] sm:$0xff]
    %v2362 = vld [vmem:[%s0 + $0x3d8] sm:$0xff]
    %v2363 = vld [vmem:[%s0 + $0x3e0] sm:$0xff]
    %v2364 = vld [vmem:[%s0 + $0x3e8] sm:$0xff]
    %2365 = vrot.lane.b32.xlu0 %v1786, 124
    %v2366 = vpop.permute.xlu0 %2365
    %2367 = vrot.lane.b32.xlu0 %v1791, 124
    %v2368 = vpop.permute.xlu0 %2367
    %2369 = vrot.lane.b32.xlu0 %v1796, 124
    %v2370 = vpop.permute.xlu0 %2369
    %2371 = vrot.lane.b32.xlu0 %v1801, 124
    %v2372 = vpop.permute.xlu0 %2371
    %2373 = vrot.lane.b32.xlu0 %v1806, 124
    %v2374 = vpop.permute.xlu0 %2373
    %2375 = vrot.lane.b32.xlu0 %v1811, 124
    %v2376 = vpop.permute.xlu0 %2375
    %2377 = vrot.lane.b32.xlu0 %v1816, 124
    %v2378 = vpop.permute.xlu0 %2377
    %2379 = vrot.lane.b32.xlu0 %v1821, 124
    %v2380 = vpop.permute.xlu0 %2379
    %v2389 = vsel %vm1865, %v2360, 0
    %v2392 = vsel %vm1865, %v2361, 0
    %v2395 = vsel %vm1865, %v2362, 0
    %v2398 = vsel %vm1865, %v2363, 0
    %v2401 = vsel %vm1865, %v2364, 0
    %v2403 = vsel %vm139, %v2380, 0
    %2405 = vmatprep.subr.mxu0 0.0
    %2406 = vmatpush1.msra.mxu0 %v2366
    %2407 = vmatprep.subr.mxu0 0.0
    %2408 = vmatpush1.msra.mxu0 %v2368
    %2409 = vmatprep.subr.mxu0 0.0
    %2410 = vmatpush1.msra.mxu0 %v2370
    %2411 = vmatprep.subr.mxu0 0.0
    %2412 = vmatpush1.msra.mxu0 %v2372
    %2413 = vmatprep.subr.mxu0 0.0
    %2414 = vmatpush1.msra.mxu0 %v2374
    %2415 = vmatprep.subr.mxu0 0.0
    %2416 = vmatpush1.msra.mxu0 %v2376
    %2417 = vmatprep.subr.mxu0 0.0
    %2418 = vmatpush1.msra.mxu0 %v2378
    %2419 = vmatprep.subr.mxu0 0.0
    %2420 = vmatpush1.msra.mxu0 %v2403
    %2421 = vmatprep.subr.mxu0 0.0
    %2422 = vmatpush1.msra.mxu0 0.0
    %2423 = vmatprep.subr.mxu0 0.0
    %2424 = vmatpush1.msra.mxu0 0.0
    %2425 = vmatprep.subr.mxu0 0.0
    %2426 = vmatpush1.msra.mxu0 0.0
    %2427 = vmatprep.subr.mxu0 0.0
    %2428 = vmatpush1.msra.mxu0 0.0
    %2429 = vmatprep.subr.mxu0 0.0
    %2430 = vmatpush1.msra.mxu0 0.0
    %2431 = vmatprep.subr.mxu0 0.0
    %2432 = vmatpush1.msra.mxu0 0.0
    %2433 = vmatprep.subr.mxu0 0.0
    %2434 = vmatpush1.msra.mxu0 0.0
    %2435 = vmatprep.subr.mxu0 0.0
    %2436 = vmatpush1.msra.mxu0 0.0
    %2437 = vmatprep.subr.mxu0 0.0
    %2438 = vmatpush1.msra.mxu0 0.0
    %2439 = vmatprep.subr.mxu0 0.0
    %2440 = vmatpush1.msra.mxu0 0.0
    %2441 = vmatprep.subr.mxu0 0.0
    %2442 = vmatpush1.msra.mxu0 0.0
    %2443 = vmatprep.subr.mxu0 0.0
    %2444 = vmatpush1.msra.mxu0 0.0
    %2445 = vmatprep.subr.mxu0 0.0
    %2446 = vmatpush1.msra.mxu0 0.0
    %2447 = vmatprep.subr.mxu0 0.0
    %2448 = vmatpush1.msra.mxu0 0.0
    %2449 = vmatprep.subr.mxu0 0.0
    %2450 = vmatpush1.msra.mxu0 0.0
    %2451 = vmatprep.subr.mxu0 0.0
    %2452 = vmatpush1.msra.mxu0 0.0
    %2453 = vmatprep.subr.mxu0 0.0
    %2454 = vmatpush1.msra.mxu0 0.0
    %2455 = vmatprep.subr.mxu0 0.0
    %2456 = vmatpush1.msra.mxu0 0.0
    %2457 = vmatprep.subr.mxu0 0.0
    %2458 = vmatpush1.msra.mxu0 0.0
    %2459 = vmatprep.subr.mxu0 0.0
    %2460 = vmatpush1.msra.mxu0 0.0
    %2461 = vmatprep.subr.mxu0 0.0
    %2462 = vmatpush1.msra.mxu0 0.0
    %2463 = vmatprep.subr.mxu0 0.0
    %2464 = vmatpush1.msra.mxu0 0.0
    %2465 = vmatprep.subr.mxu0 0.0
    %2466 = vmatpush1.msra.mxu0 0.0
    %2467 = vmatprep.subr.mxu0 0.0
    %2468 = vmatpush1.msra.mxu0 0.0
    %2469 = vmatprep.mubr.f32.mxu0 0.0
    %2470 = vmatmul.mubr.f32.gmra.mrb[0].mxu0 %v2389
    %v2471 = vpop.f32.mrb[0].mxu0
    %v2472 = vadd.f32 0.0, %v2471
    %v2473 = vpop.f32.mrb[0].mxu0
    %2474 = vmatprep.mubr.f32.mxu0 0.0
    %2475 = vmatmul.mubr.f32.gmra.mrb[0].mxu0 %v2392
    %v2476 = vpop.f32.mrb[0].mxu0
    %v2477 = vadd.f32 0.0, %v2476
    %v2478 = vpop.f32.mrb[0].mxu0
    %2479 = vmatprep.mubr.f32.mxu0 0.0
    %2480 = vmatmul.mubr.f32.gmra.mrb[0].mxu0 %v2395
    %v2481 = vpop.f32.mrb[0].mxu0
    %v2482 = vadd.f32 0.0, %v2481
    %v2483 = vpop.f32.mrb[0].mxu0
    %2484 = vmatprep.mubr.f32.mxu0 0.0
    %2485 = vmatmul.mubr.f32.gmra.mrb[0].mxu0 %v2398
    %v2486 = vpop.f32.mrb[0].mxu0
    %v2487 = vadd.f32 0.0, %v2486
    %v2488 = vpop.f32.mrb[0].mxu0
    %2489 = vmatprep.mubr.f32.mxu0 0.0
    %2490 = vmatmul.mubr.f32.gmra.mrb[0].mxu0 %v2401
    %v2491 = vpop.f32.mrb[0].mxu0
    %v2492 = vadd.f32 0.0, %v2491
    %v2493 = vpop.f32.mrb[0].mxu0
    %2494 = vdwg.mxu0
    %v2495 = vadd.f32 %v2355, %v2472
    %v2496 = vadd.f32 %v2356, %v2477
    %v2497 = vadd.f32 %v2357, %v2482
    %v2498 = vadd.f32 %v2358, %v2487
    %v2499 = vadd.f32 %v2359, %v2492
    %v2500 = vld [vmem:[%s0 + $0x3f0] sm:$0xff]
    %v2501 = vld [vmem:[%s0 + $0x3f8] sm:$0xff]
    %v2502 = vld [vmem:[%s0 + $0x400] sm:$0xff]
    %v2503 = vld [vmem:[%s0 + $0x408] sm:$0xff]
    %v2504 = vld [vmem:[%s0 + $0x410] sm:$0xff]
    %2506 = vset.pattern.permute.xlu0 0
    %2507 = vperm.xlu0 %2506, %v2500
    %v2508 = vpop.permute.xlu0 %2507
    %2511 = vset.pattern.permute.xlu0 0
    %2512 = vperm.xlu0 %2511, %v2501
    %v2513 = vpop.permute.xlu0 %2512
    %2516 = vset.pattern.permute.xlu0 0
    %2517 = vperm.xlu0 %2516, %v2502
    %v2518 = vpop.permute.xlu0 %2517
    %2521 = vset.pattern.permute.xlu0 0
    %2522 = vperm.xlu0 %2521, %v2503
    %v2523 = vpop.permute.xlu0 %2522
    %2526 = vset.pattern.permute.xlu0 0
    %2527 = vperm.xlu0 %2526, %v2504
    %v2528 = vpop.permute.xlu0 %2527
    %v2530 = vadd.f32 %v2495, %v2508
    %v2531 = vadd.f32 %v2496, %v2513
    %v2532 = vadd.f32 %v2497, %v2518
    %v2533 = vadd.f32 %v2498, %v2523
    %v2534 = vadd.f32 %v2499, %v2528
    %v2535 = vmax.f32 %v2530, 0.0
    %v2536 = vmax.f32 %v2531, 0.0
    %v2537 = vmax.f32 %v2532, 0.0
    %v2538 = vmax.f32 %v2533, 0.0
    %v2539 = vmax.f32 %v2534, 0.0
    %2545 = vrot.lane.b32.xlu0 %v2535, 127
    %v2546 = vpop.permute.xlu0 %2545
    %2547 = vrot.lane.b32.xlu0 %v2536, 127
    %v2548 = vpop.permute.xlu0 %2547
    %2549 = vrot.lane.b32.xlu0 %v2537, 127
    %v2550 = vpop.permute.xlu0 %2549
    %2551 = vrot.lane.b32.xlu0 %v2538, 127
    %v2552 = vpop.permute.xlu0 %2551
    %2553 = vrot.lane.b32.xlu0 %v2539, 127
    %v2554 = vpop.permute.xlu0 %2553
    %v2560 = vmax.f32 %v2535, %v2546
    %v2561 = vmax.f32 %v2536, %v2548
    %v2562 = vmax.f32 %v2537, %v2550
    %v2563 = vmax.f32 %v2538, %v2552
    %v2564 = vmax.f32 %v2539, %v2554
    %v2565 = vld [vmem:[%s0 + $0x490] sm:$0xff]
    %v2566 = vld [vmem:[%s0 + $0x498] sm:$0xff]
    %v2567 = vld [vmem:[%s0 + $0x4a0] sm:$0x7]
    %vm2568 = vcmask 154624
    %v2570 = vsel %vm2568, %v2560, 0
    %v2573 = vsel %vm2568, %v2561, 0
    %v2576 = vsel %vm2568, %v2562, 0
    %v2579 = vsel %vm2568, %v2563, 0
    %v2582 = vsel %vm2568, %v2564, 0
    %v2585 = vsel %vm1464, %v2567, 0
    %2587 = vmatprep.subr.mxu0 0.0
    %2588 = vmatpush1.msra.mxu0 %v2565
    %2589 = vmatprep.subr.mxu0 0.0
    %2590 = vmatpush1.msra.mxu0 %v2566
    %2591 = vmatprep.subr.mxu0 0.0
    %2592 = vmatpush1.msra.mxu0 %v2585
    %2593 = vmatprep.subr.mxu0 0.0
    %2594 = vmatpush1.msra.mxu0 0.0
    %2595 = vmatprep.subr.mxu0 0.0
    %2596 = vmatpush1.msra.mxu0 0.0
    %2597 = vmatprep.subr.mxu0 0.0
    %2598 = vmatpush1.msra.mxu0 0.0
    %2599 = vmatprep.subr.mxu0 0.0
    %2600 = vmatpush1.msra.mxu0 0.0
    %2601 = vmatprep.subr.mxu0 0.0
    %2602 = vmatpush1.msra.mxu0 0.0
    %2603 = vmatprep.subr.mxu0 0.0
    %2604 = vmatpush1.msra.mxu0 0.0
    %2605 = vmatprep.subr.mxu0 0.0
    %2606 = vmatpush1.msra.mxu0 0.0
    %2607 = vmatprep.subr.mxu0 0.0
    %2608 = vmatpush1.msra.mxu0 0.0
    %2609 = vmatprep.subr.mxu0 0.0
    %2610 = vmatpush1.msra.mxu0 0.0
    %2611 = vmatprep.subr.mxu0 0.0
    %2612 = vmatpush1.msra.mxu0 0.0
    %2613 = vmatprep.subr.mxu0 0.0
    %2614 = vmatpush1.msra.mxu0 0.0
    %2615 = vmatprep.subr.mxu0 0.0
    %2616 = vmatpush1.msra.mxu0 0.0
    %2617 = vmatprep.subr.mxu0 0.0
    %2618 = vmatpush1.msra.mxu0 0.0
    %2619 = vmatprep.subr.mxu0 0.0
    %2620 = vmatpush1.msra.mxu0 0.0
    %2621 = vmatprep.subr.mxu0 0.0
    %2622 = vmatpush1.msra.mxu0 0.0
    %2623 = vmatprep.subr.mxu0 0.0
    %2624 = vmatpush1.msra.mxu0 0.0
    %2625 = vmatprep.subr.mxu0 0.0
    %2626 = vmatpush1.msra.mxu0 0.0
    %2627 = vmatprep.subr.mxu0 0.0
    %2628 = vmatpush1.msra.mxu0 0.0
    %2629 = vmatprep.subr.mxu0 0.0
    %2630 = vmatpush1.msra.mxu0 0.0
    %2631 = vmatprep.subr.mxu0 0.0
    %2632 = vmatpush1.msra.mxu0 0.0
    %2633 = vmatprep.subr.mxu0 0.0
    %2634 = vmatpush1.msra.mxu0 0.0
    %2635 = vmatprep.subr.mxu0 0.0
    %2636 = vmatpush1.msra.mxu0 0.0
    %2637 = vmatprep.subr.mxu0 0.0
    %2638 = vmatpush1.msra.mxu0 0.0
    %2639 = vmatprep.subr.mxu0 0.0
    %2640 = vmatpush1.msra.mxu0 0.0
    %2641 = vmatprep.subr.mxu0 0.0
    %2642 = vmatpush1.msra.mxu0 0.0
    %2643 = vmatprep.subr.mxu0 0.0
    %2644 = vmatpush1.msra.mxu0 0.0
    %2645 = vmatprep.subr.mxu0 0.0
    %2646 = vmatpush1.msra.mxu0 0.0
    %2647 = vmatprep.subr.mxu0 0.0
    %2648 = vmatpush1.msra.mxu0 0.0
    %2649 = vmatprep.subr.mxu0 0.0
    %2650 = vmatpush1.msra.mxu0 0.0
    %2651 = vmatprep.mubr.f32.mxu0 0.0
    %2652 = vmatmul.mubr.f32.gmra.mrb[0].mxu0 %v2570
    %v2653 = vpop.f32.mrb[0].mxu0
    %v2654 = vadd.f32 0.0, %v2653
    %v2655 = vpop.f32.mrb[0].mxu0
    %2656 = vmatprep.mubr.f32.mxu0 0.0
    %2657 = vmatmul.mubr.f32.gmra.mrb[0].mxu0 %v2573
    %v2658 = vpop.f32.mrb[0].mxu0
    %v2659 = vadd.f32 0.0, %v2658
    %v2660 = vpop.f32.mrb[0].mxu0
    %2661 = vmatprep.mubr.f32.mxu0 0.0
    %2662 = vmatmul.mubr.f32.gmra.mrb[0].mxu0 %v2576
    %v2663 = vpop.f32.mrb[0].mxu0
    %v2664 = vadd.f32 0.0, %v2663
    %v2665 = vpop.f32.mrb[0].mxu0
    %2666 = vmatprep.mubr.f32.mxu0 0.0
    %2667 = vmatmul.mubr.f32.gmra.mrb[0].mxu0 %v2579
    %v2668 = vpop.f32.mrb[0].mxu0
    %v2669 = vadd.f32 0.0, %v2668
    %v2670 = vpop.f32.mrb[0].mxu0
    %2671 = vmatprep.mubr.f32.mxu0 0.0
    %2672 = vmatmul.mubr.f32.gmra.mrb[0].mxu0 %v2582
    %v2673 = vpop.f32.mrb[0].mxu0
    %v2674 = vadd.f32 0.0, %v2673
    %v2675 = vpop.f32.mrb[0].mxu0
    %2676 = vdwg.mxu0
    %v2682 = vrot.slane %v2654, 1
    %v2683 = vrot.slane %v2659, 1
    %v2684 = vsel %vm1623, %v2682, %v2683
    %v2685 = vrot.slane %v2664, 1
    %v2686 = vsel %vm1623, %v2683, %v2685
    %v2687 = vrot.slane %v2669, 1
    %v2688 = vsel %vm1623, %v2685, %v2687
    %v2689 = vrot.slane %v2674, 1
    %v2690 = vsel %vm1623, %v2687, %v2689
    %v2696 = vmax.f32 %v2654, %v2684
    %v2697 = vmax.f32 %v2659, %v2686
    %v2698 = vmax.f32 %v2664, %v2688
    %v2699 = vmax.f32 %v2669, %v2690
    %v2700 = vmax.f32 %v2674, %v2689
    %v2701 = vld [vmem:[%s0 + $0x4a8] sm:$0xff]
    %v2702 = vld [vmem:[%s0 + $0x4b0] sm:$0xff]
    %v2703 = vld [vmem:[%s0 + $0x4b8] sm:$0xf]
    %vm2704 = vcmask 318464
    %v2706 = vsel %vm2704, %v2701, 0
    %v2709 = vsel %vm2704, %v2702, 0
    %v2712 = vsel %vm2704, %v2703, 0
    %v2715 = vsel %vm1623, %v2700, 0
    %2717 = vmatprep.subr.mxu0 0.0
    %2718 = vmatpush1.msra.mxu0 %v2696
    %2719 = vmatprep.subr.mxu0 0.0
    %2720 = vmatpush1.msra.mxu0 %v2697
    %2721 = vmatprep.subr.mxu0 0.0
    %2722 = vmatpush1.msra.mxu0 %v2698
    %2723 = vmatprep.subr.mxu0 0.0
    %2724 = vmatpush1.msra.mxu0 %v2699
    %2725 = vmatprep.subr.mxu0 0.0
    %2726 = vmatpush1.msra.mxu0 %v2715
    %2727 = vmatprep.subr.mxu0 0.0
    %2728 = vmatpush1.msra.mxu0 0.0
    %2729 = vmatprep.subr.mxu0 0.0
    %2730 = vmatpush1.msra.mxu0 0.0
    %2731 = vmatprep.subr.mxu0 0.0
    %2732 = vmatpush1.msra.mxu0 0.0
    %2733 = vmatprep.subr.mxu0 0.0
    %2734 = vmatpush1.msra.mxu0 0.0
    %2735 = vmatprep.subr.mxu0 0.0
    %2736 = vmatpush1.msra.mxu0 0.0
    %2737 = vmatprep.subr.mxu0 0.0
    %2738 = vmatpush1.msra.mxu0 0.0
    %2739 = vmatprep.subr.mxu0 0.0
    %2740 = vmatpush1.msra.mxu0 0.0
    %2741 = vmatprep.subr.mxu0 0.0
    %2742 = vmatpush1.msra.mxu0 0.0
    %2743 = vmatprep.subr.mxu0 0.0
    %2744 = vmatpush1.msra.mxu0 0.0
    %2745 = vmatprep.subr.mxu0 0.0
    %2746 = vmatpush1.msra.mxu0 0.0
    %2747 = vmatprep.subr.mxu0 0.0
    %2748 = vmatpush1.msra.mxu0 0.0
    %2749 = vmatprep.subr.mxu0 0.0
    %2750 = vmatpush1.msra.mxu0 0.0
    %2751 = vmatprep.subr.mxu0 0.0
    %2752 = vmatpush1.msra.mxu0 0.0
    %2753 = vmatprep.subr.mxu0 0.0
    %2754 = vmatpush1.msra.mxu0 0.0
    %2755 = vmatprep.subr.mxu0 0.0
    %2756 = vmatpush1.msra.mxu0 0.0
    %2757 = vmatprep.subr.mxu0 0.0
    %2758 = vmatpush1.msra.mxu0 0.0
    %2759 = vmatprep.subr.mxu0 0.0
    %2760 = vmatpush1.msra.mxu0 0.0
    %2761 = vmatprep.subr.mxu0 0.0
    %2762 = vmatpush1.msra.mxu0 0.0
    %2763 = vmatprep.subr.mxu0 0.0
    %2764 = vmatpush1.msra.mxu0 0.0
    %2765 = vmatprep.subr.mxu0 0.0
    %2766 = vmatpush1.msra.mxu0 0.0
    %2767 = vmatprep.subr.mxu0 0.0
    %2768 = vmatpush1.msra.mxu0 0.0
    %2769 = vmatprep.subr.mxu0 0.0
    %2770 = vmatpush1.msra.mxu0 0.0
    %2771 = vmatprep.subr.mxu0 0.0
    %2772 = vmatpush1.msra.mxu0 0.0
    %2773 = vmatprep.subr.mxu0 0.0
    %2774 = vmatpush1.msra.mxu0 0.0
    %2775 = vmatprep.subr.mxu0 0.0
    %2776 = vmatpush1.msra.mxu0 0.0
    %2777 = vmatprep.subr.mxu0 0.0
    %2778 = vmatpush1.msra.mxu0 0.0
    %2779 = vmatprep.subr.mxu0 0.0
    %2780 = vmatpush1.msra.mxu0 0.0
    %2781 = vmatprep.mubr.f32.mxu0 0.0
    %2782 = vmatmul.mubr.f32.gmra.mrb[0].mxu0 %v2706
    %v2783 = vpop.f32.mrb[0].mxu0
    %v2784 = vadd.f32 0.0, %v2783
    %v2785 = vpop.f32.mrb[0].mxu0
    %2786 = vmatprep.mubr.f32.mxu0 0.0
    %2787 = vmatmul.mubr.f32.gmra.mrb[0].mxu0 %v2709
    %v2788 = vpop.f32.mrb[0].mxu0
    %v2789 = vadd.f32 0.0, %v2788
    %v2790 = vpop.f32.mrb[0].mxu0
    %2791 = vmatprep.mubr.f32.mxu0 0.0
    %2792 = vmatmul.mubr.f32.gmra.mrb[0].mxu0 %v2712
    %v2793 = vpop.f32.mrb[0].mxu0
    %v2794 = vadd.f32 0.0, %v2793
    %v2795 = vpop.f32.mrb[0].mxu0
    %2796 = vdwg.mxu0
    %v2797 = vld [vmem:[%s0 + $0x4c0] sm:$0xff]
    %v2798 = vld [vmem:[%s0 + $0x4c8] sm:$0xff]
    %v2799 = vld [vmem:[%s0 + $0x4d0] sm:$0xf]
    %v2800 = vld [vmem:[%s0 + $0x4d8] sm:$0xff]
    %vm2801 = vcmask 64512
    %v2803 = vsel %vm2801, %v2784, 0
    %v2806 = vsel %vm2801, %v2789, 0
    %v2809 = vsel %vm2801, %v2794, 0
    %2811 = vmatprep.subr.mxu0 0.0
    %2812 = vmatpush1.msra.mxu0 %v2800
    %2813 = vmatprep.subr.mxu0 0.0
    %2814 = vmatpush1.msra.mxu0 0.0
    %2815 = vmatprep.subr.mxu0 0.0
    %2816 = vmatpush1.msra.mxu0 0.0
    %2817 = vmatprep.subr.mxu0 0.0
    %2818 = vmatpush1.msra.mxu0 0.0
    %2819 = vmatprep.subr.mxu0 0.0
    %2820 = vmatpush1.msra.mxu0 0.0
    %2821 = vmatprep.subr.mxu0 0.0
    %2822 = vmatpush1.msra.mxu0 0.0
    %2823 = vmatprep.subr.mxu0 0.0
    %2824 = vmatpush1.msra.mxu0 0.0
    %2825 = vmatprep.subr.mxu0 0.0
    %2826 = vmatpush1.msra.mxu0 0.0
    %2827 = vmatprep.subr.mxu0 0.0
    %2828 = vmatpush1.msra.mxu0 0.0
    %2829 = vmatprep.subr.mxu0 0.0
    %2830 = vmatpush1.msra.mxu0 0.0
    %2831 = vmatprep.subr.mxu0 0.0
    %2832 = vmatpush1.msra.mxu0 0.0
    %2833 = vmatprep.subr.mxu0 0.0
    %2834 = vmatpush1.msra.mxu0 0.0
    %2835 = vmatprep.subr.mxu0 0.0
    %2836 = vmatpush1.msra.mxu0 0.0
    %2837 = vmatprep.subr.mxu0 0.0
    %2838 = vmatpush1.msra.mxu0 0.0
    %2839 = vmatprep.subr.mxu0 0.0
    %2840 = vmatpush1.msra.mxu0 0.0
    %2841 = vmatprep.subr.mxu0 0.0
    %2842 = vmatpush1.msra.mxu0 0.0
    %2843 = vmatprep.subr.mxu0 0.0
    %2844 = vmatpush1.msra.mxu0 0.0
    %2845 = vmatprep.subr.mxu0 0.0
    %2846 = vmatpush1.msra.mxu0 0.0
    %2847 = vmatprep.subr.mxu0 0.0
    %2848 = vmatpush1.msra.mxu0 0.0
    %2849 = vmatprep.subr.mxu0 0.0
    %2850 = vmatpush1.msra.mxu0 0.0
    %2851 = vmatprep.subr.mxu0 0.0
    %2852 = vmatpush1.msra.mxu0 0.0
    %2853 = vmatprep.subr.mxu0 0.0
    %2854 = vmatpush1.msra.mxu0 0.0
    %2855 = vmatprep.subr.mxu0 0.0
    %2856 = vmatpush1.msra.mxu0 0.0
    %2857 = vmatprep.subr.mxu0 0.0
    %2858 = vmatpush1.msra.mxu0 0.0
    %2859 = vmatprep.subr.mxu0 0.0
    %2860 = vmatpush1.msra.mxu0 0.0
    %2861 = vmatprep.subr.mxu0 0.0
    %2862 = vmatpush1.msra.mxu0 0.0
    %2863 = vmatprep.subr.mxu0 0.0
    %2864 = vmatpush1.msra.mxu0 0.0
    %2865 = vmatprep.subr.mxu0 0.0
    %2866 = vmatpush1.msra.mxu0 0.0
    %2867 = vmatprep.subr.mxu0 0.0
    %2868 = vmatpush1.msra.mxu0 0.0
    %2869 = vmatprep.subr.mxu0 0.0
    %2870 = vmatpush1.msra.mxu0 0.0
    %2871 = vmatprep.subr.mxu0 0.0
    %2872 = vmatpush1.msra.mxu0 0.0
    %2873 = vmatprep.subr.mxu0 0.0
    %2874 = vmatpush1.msra.mxu0 0.0
    %2875 = vmatprep.mubr.f32.mxu0 0.0
    %2876 = vmatmul.mubr.f32.gmra.mrb[0].mxu0 %v2803
    %v2877 = vpop.f32.mrb[0].mxu0
    %v2878 = vadd.f32 0.0, %v2877
    %v2879 = vpop.f32.mrb[0].mxu0
    %2880 = vmatprep.mubr.f32.mxu0 0.0
    %2881 = vmatmul.mubr.f32.gmra.mrb[0].mxu0 %v2806
    %v2882 = vpop.f32.mrb[0].mxu0
    %v2883 = vadd.f32 0.0, %v2882
    %v2884 = vpop.f32.mrb[0].mxu0
    %2885 = vmatprep.mubr.f32.mxu0 0.0
    %2886 = vmatmul.mubr.f32.gmra.mrb[0].mxu0 %v2809
    %v2887 = vpop.f32.mrb[0].mxu0
    %v2888 = vadd.f32 0.0, %v2887
    %v2889 = vpop.f32.mrb[0].mxu0
    %2890 = vdwg.mxu0
    %v2891 = vld [vmem:[%s0 + $0x4e0] sm:$0xff]
    %v2892 = vld [vmem:[%s0 + $0x4e8] sm:$0xff]
    %v2893 = vld [vmem:[%s0 + $0x4f0] sm:$0xf]
    %v2894 = vld [vmem:[%s0 + $0x4f8] sm:$0xff]
    %2895 = vmatprep.subr.mxu0 0.0
    %2896 = vmatpush1.msra.mxu0 %v2894
    %2897 = vmatprep.subr.mxu0 0.0
    %2898 = vmatpush1.msra.mxu0 0.0
    %2899 = vmatprep.subr.mxu0 0.0
    %2900 = vmatpush1.msra.mxu0 0.0
    %2901 = vmatprep.subr.mxu0 0.0
    %2902 = vmatpush1.msra.mxu0 0.0
    %2903 = vmatprep.subr.mxu0 0.0
    %2904 = vmatpush1.msra.mxu0 0.0
    %2905 = vmatprep.subr.mxu0 0.0
    %2906 = vmatpush1.msra.mxu0 0.0
    %2907 = vmatprep.subr.mxu0 0.0
    %2908 = vmatpush1.msra.mxu0 0.0
    %2909 = vmatprep.subr.mxu0 0.0
    %2910 = vmatpush1.msra.mxu0 0.0
    %2911 = vmatprep.subr.mxu0 0.0
    %2912 = vmatpush1.msra.mxu0 0.0
    %2913 = vmatprep.subr.mxu0 0.0
    %2914 = vmatpush1.msra.mxu0 0.0
    %2915 = vmatprep.subr.mxu0 0.0
    %2916 = vmatpush1.msra.mxu0 0.0
    %2917 = vmatprep.subr.mxu0 0.0
    %2918 = vmatpush1.msra.mxu0 0.0
    %2919 = vmatprep.subr.mxu0 0.0
    %2920 = vmatpush1.msra.mxu0 0.0
    %2921 = vmatprep.subr.mxu0 0.0
    %2922 = vmatpush1.msra.mxu0 0.0
    %2923 = vmatprep.subr.mxu0 0.0
    %2924 = vmatpush1.msra.mxu0 0.0
    %2925 = vmatprep.subr.mxu0 0.0
    %2926 = vmatpush1.msra.mxu0 0.0
    %2927 = vmatprep.subr.mxu0 0.0
    %2928 = vmatpush1.msra.mxu0 0.0
    %2929 = vmatprep.subr.mxu0 0.0
    %2930 = vmatpush1.msra.mxu0 0.0
    %2931 = vmatprep.subr.mxu0 0.0
    %2932 = vmatpush1.msra.mxu0 0.0
    %2933 = vmatprep.subr.mxu0 0.0
    %2934 = vmatpush1.msra.mxu0 0.0
    %2935 = vmatprep.subr.mxu0 0.0
    %2936 = vmatpush1.msra.mxu0 0.0
    %2937 = vmatprep.subr.mxu0 0.0
    %2938 = vmatpush1.msra.mxu0 0.0
    %2939 = vmatprep.subr.mxu0 0.0
    %2940 = vmatpush1.msra.mxu0 0.0
    %2941 = vmatprep.subr.mxu0 0.0
    %2942 = vmatpush1.msra.mxu0 0.0
    %2943 = vmatprep.subr.mxu0 0.0
    %2944 = vmatpush1.msra.mxu0 0.0
    %2945 = vmatprep.subr.mxu0 0.0
    %2946 = vmatpush1.msra.mxu0 0.0
    %2947 = vmatprep.subr.mxu0 0.0
    %2948 = vmatpush1.msra.mxu0 0.0
    %2949 = vmatprep.subr.mxu0 0.0
    %2950 = vmatpush1.msra.mxu0 0.0
    %2951 = vmatprep.subr.mxu0 0.0
    %2952 = vmatpush1.msra.mxu0 0.0
    %2953 = vmatprep.subr.mxu0 0.0
    %2954 = vmatpush1.msra.mxu0 0.0
    %2955 = vmatprep.subr.mxu0 0.0
    %2956 = vmatpush1.msra.mxu0 0.0
    %2957 = vmatprep.subr.mxu0 0.0
    %2958 = vmatpush1.msra.mxu0 0.0
    %2959 = vmatprep.mubr.f32.mxu0 0.0
    %2960 = vmatmul.mubr.f32.gmra.mrb[0].mxu0 %v2803
    %v2961 = vpop.f32.mrb[0].mxu0
    %v2962 = vadd.f32 0.0, %v2961
    %v2963 = vpop.f32.mrb[0].mxu0
    %2964 = vmatprep.mubr.f32.mxu0 0.0
    %2965 = vmatmul.mubr.f32.gmra.mrb[0].mxu0 %v2806
    %v2966 = vpop.f32.mrb[0].mxu0
    %v2967 = vadd.f32 0.0, %v2966
    %v2968 = vpop.f32.mrb[0].mxu0
    %2969 = vmatprep.mubr.f32.mxu0 0.0
    %2970 = vmatmul.mubr.f32.gmra.mrb[0].mxu0 %v2809
    %v2971 = vpop.f32.mrb[0].mxu0
    %v2972 = vadd.f32 0.0, %v2971
    %v2973 = vpop.f32.mrb[0].mxu0
    %2974 = vdwg.mxu0
    %vm2975 = vcmask 162816
    %v2977 = vsel %vm2975, %v2891, 0
    %v2980 = vsel %vm2975, %v2892, 0
    %v2983 = vsel %vm2975, %v2893, 0
    %v2986 = vsel %vm139, %v2972, 0
    %2988 = vmatprep.subr.mxu0 0.0
    %2989 = vmatpush1.msra.mxu0 %v2962
    %2990 = vmatprep.subr.mxu0 0.0
    %2991 = vmatpush1.msra.mxu0 %v2967
    %2992 = vmatprep.subr.mxu0 0.0
    %2993 = vmatpush1.msra.mxu0 %v2986
    %2994 = vmatprep.subr.mxu0 0.0
    %2995 = vmatpush1.msra.mxu0 0.0
    %2996 = vmatprep.subr.mxu0 0.0
    %2997 = vmatpush1.msra.mxu0 0.0
    %2998 = vmatprep.subr.mxu0 0.0
    %2999 = vmatpush1.msra.mxu0 0.0
    %3000 = vmatprep.subr.mxu0 0.0
    %3001 = vmatpush1.msra.mxu0 0.0
    %3002 = vmatprep.subr.mxu0 0.0
    %3003 = vmatpush1.msra.mxu0 0.0
    %3004 = vmatprep.subr.mxu0 0.0
    %3005 = vmatpush1.msra.mxu0 0.0
    %3006 = vmatprep.subr.mxu0 0.0
    %3007 = vmatpush1.msra.mxu0 0.0
    %3008 = vmatprep.subr.mxu0 0.0
    %3009 = vmatpush1.msra.mxu0 0.0
    %3010 = vmatprep.subr.mxu0 0.0
    %3011 = vmatpush1.msra.mxu0 0.0
    %3012 = vmatprep.subr.mxu0 0.0
    %3013 = vmatpush1.msra.mxu0 0.0
    %3014 = vmatprep.subr.mxu0 0.0
    %3015 = vmatpush1.msra.mxu0 0.0
    %3016 = vmatprep.subr.mxu0 0.0
    %3017 = vmatpush1.msra.mxu0 0.0
    %3018 = vmatprep.subr.mxu0 0.0
    %3019 = vmatpush1.msra.mxu0 0.0
    %3020 = vmatprep.subr.mxu0 0.0
    %3021 = vmatpush1.msra.mxu0 0.0
    %3022 = vmatprep.subr.mxu0 0.0
    %3023 = vmatpush1.msra.mxu0 0.0
    %3024 = vmatprep.subr.mxu0 0.0
    %3025 = vmatpush1.msra.mxu0 0.0
    %3026 = vmatprep.subr.mxu0 0.0
    %3027 = vmatpush1.msra.mxu0 0.0
    %3028 = vmatprep.subr.mxu0 0.0
    %3029 = vmatpush1.msra.mxu0 0.0
    %3030 = vmatprep.subr.mxu0 0.0
    %3031 = vmatpush1.msra.mxu0 0.0
    %3032 = vmatprep.subr.mxu0 0.0
    %3033 = vmatpush1.msra.mxu0 0.0
    %3034 = vmatprep.subr.mxu0 0.0
    %3035 = vmatpush1.msra.mxu0 0.0
    %3036 = vmatprep.subr.mxu0 0.0
    %3037 = vmatpush1.msra.mxu0 0.0
    %3038 = vmatprep.subr.mxu0 0.0
    %3039 = vmatpush1.msra.mxu0 0.0
    %3040 = vmatprep.subr.mxu0 0.0
    %3041 = vmatpush1.msra.mxu0 0.0
    %3042 = vmatprep.subr.mxu0 0.0
    %3043 = vmatpush1.msra.mxu0 0.0
    %3044 = vmatprep.subr.mxu0 0.0
    %3045 = vmatpush1.msra.mxu0 0.0
    %3046 = vmatprep.subr.mxu0 0.0
    %3047 = vmatpush1.msra.mxu0 0.0
    %3048 = vmatprep.subr.mxu0 0.0
    %3049 = vmatpush1.msra.mxu0 0.0
    %3050 = vmatprep.subr.mxu0 0.0
    %3051 = vmatpush1.msra.mxu0 0.0
    %3052 = vmatprep.mubr.f32.mxu0 0.0
    %3053 = vmatmul.mubr.f32.gmra.mrb[0].mxu0 %v2977
    %v3054 = vpop.f32.mrb[0].mxu0
    %v3055 = vadd.f32 0.0, %v3054
    %v3056 = vpop.f32.mrb[0].mxu0
    %3057 = vmatprep.mubr.f32.mxu0 0.0
    %3058 = vmatmul.mubr.f32.gmra.mrb[0].mxu0 %v2980
    %v3059 = vpop.f32.mrb[0].mxu0
    %v3060 = vadd.f32 0.0, %v3059
    %v3061 = vpop.f32.mrb[0].mxu0
    %3062 = vmatprep.mubr.f32.mxu0 0.0
    %3063 = vmatmul.mubr.f32.gmra.mrb[0].mxu0 %v2983
    %v3064 = vpop.f32.mrb[0].mxu0
    %v3065 = vadd.f32 0.0, %v3064
    %v3066 = vpop.f32.mrb[0].mxu0
    %3067 = vdwg.mxu0
    %v3069 = vsel %vm2975, %v2797, 0
    %v3072 = vsel %vm2975, %v2798, 0
    %v3075 = vsel %vm2975, %v2799, 0
    %v3078 = vsel %vm139, %v2888, 0
    %3080 = vmatprep.subr.mxu0 0.0
    %3081 = vmatpush1.msra.mxu0 %v2878
    %3082 = vmatprep.subr.mxu0 0.0
    %3083 = vmatpush1.msra.mxu0 %v2883
    %3084 = vmatprep.subr.mxu0 0.0
    %3085 = vmatpush1.msra.mxu0 %v3078
    %3086 = vmatprep.subr.mxu0 0.0
    %3087 = vmatpush1.msra.mxu0 0.0
    %3088 = vmatprep.subr.mxu0 0.0
    %3089 = vmatpush1.msra.mxu0 0.0
    %3090 = vmatprep.subr.mxu0 0.0
    %3091 = vmatpush1.msra.mxu0 0.0
    %3092 = vmatprep.subr.mxu0 0.0
    %3093 = vmatpush1.msra.mxu0 0.0
    %3094 = vmatprep.subr.mxu0 0.0
    %3095 = vmatpush1.msra.mxu0 0.0
    %3096 = vmatprep.subr.mxu0 0.0
    %3097 = vmatpush1.msra.mxu0 0.0
    %3098 = vmatprep.subr.mxu0 0.0
    %3099 = vmatpush1.msra.mxu0 0.0
    %3100 = vmatprep.subr.mxu0 0.0
    %3101 = vmatpush1.msra.mxu0 0.0
    %3102 = vmatprep.subr.mxu0 0.0
    %3103 = vmatpush1.msra.mxu0 0.0
    %3104 = vmatprep.subr.mxu0 0.0
    %3105 = vmatpush1.msra.mxu0 0.0
    %3106 = vmatprep.subr.mxu0 0.0
    %3107 = vmatpush1.msra.mxu0 0.0
    %3108 = vmatprep.subr.mxu0 0.0
    %3109 = vmatpush1.msra.mxu0 0.0
    %3110 = vmatprep.subr.mxu0 0.0
    %3111 = vmatpush1.msra.mxu0 0.0
    %3112 = vmatprep.subr.mxu0 0.0
    %3113 = vmatpush1.msra.mxu0 0.0
    %3114 = vmatprep.subr.mxu0 0.0
    %3115 = vmatpush1.msra.mxu0 0.0
    %3116 = vmatprep.subr.mxu0 0.0
    %3117 = vmatpush1.msra.mxu0 0.0
    %3118 = vmatprep.subr.mxu0 0.0
    %3119 = vmatpush1.msra.mxu0 0.0
    %3120 = vmatprep.subr.mxu0 0.0
    %3121 = vmatpush1.msra.mxu0 0.0
    %3122 = vmatprep.subr.mxu0 0.0
    %3123 = vmatpush1.msra.mxu0 0.0
    %3124 = vmatprep.subr.mxu0 0.0
    %3125 = vmatpush1.msra.mxu0 0.0
    %3126 = vmatprep.subr.mxu0 0.0
    %3127 = vmatpush1.msra.mxu0 0.0
    %3128 = vmatprep.subr.mxu0 0.0
    %3129 = vmatpush1.msra.mxu0 0.0
    %3130 = vmatprep.subr.mxu0 0.0
    %3131 = vmatpush1.msra.mxu0 0.0
    %3132 = vmatprep.subr.mxu0 0.0
    %3133 = vmatpush1.msra.mxu0 0.0
    %3134 = vmatprep.subr.mxu0 0.0
    %3135 = vmatpush1.msra.mxu0 0.0
    %3136 = vmatprep.subr.mxu0 0.0
    %3137 = vmatpush1.msra.mxu0 0.0
    %3138 = vmatprep.subr.mxu0 0.0
    %3139 = vmatpush1.msra.mxu0 0.0
    %3140 = vmatprep.subr.mxu0 0.0
    %3141 = vmatpush1.msra.mxu0 0.0
    %3142 = vmatprep.subr.mxu0 0.0
    %3143 = vmatpush1.msra.mxu0 0.0
    %3144 = vmatprep.mubr.f32.mxu0 0.0
    %3145 = vmatmul.mubr.f32.gmra.mrb[0].mxu0 %v3069
    %v3146 = vpop.f32.mrb[0].mxu0
    %v3147 = vadd.f32 %v3055, %v3146
    %v3148 = vpop.f32.mrb[0].mxu0
    %3149 = vmatprep.mubr.f32.mxu0 0.0
    %3150 = vmatmul.mubr.f32.gmra.mrb[0].mxu0 %v3072
    %v3151 = vpop.f32.mrb[0].mxu0
    %v3152 = vadd.f32 %v3060, %v3151
    %v3153 = vpop.f32.mrb[0].mxu0
    %3154 = vmatprep.mubr.f32.mxu0 0.0
    %3155 = vmatmul.mubr.f32.gmra.mrb[0].mxu0 %v3075
    %v3156 = vpop.f32.mrb[0].mxu0
    %v3157 = vadd.f32 %v3065, %v3156
    %v3158 = vpop.f32.mrb[0].mxu0
    %3159 = vdwg.mxu0
    %v3160 = vld [vmem:[%s0 + $0x500] sm:$0xff]
    %v3161 = vld [vmem:[%s0 + $0x508] sm:$0xff]
    %v3162 = vld [vmem:[%s0 + $0x510] sm:$0xf]
    %v3163 = vld [vmem:[%s0 + $0x518] sm:$0xff]
    %3164 = vmatprep.subr.mxu0 0.0
    %3165 = vmatpush1.msra.mxu0 %v3163
    %3166 = vmatprep.subr.mxu0 0.0
    %3167 = vmatpush1.msra.mxu0 0.0
    %3168 = vmatprep.subr.mxu0 0.0
    %3169 = vmatpush1.msra.mxu0 0.0
    %3170 = vmatprep.subr.mxu0 0.0
    %3171 = vmatpush1.msra.mxu0 0.0
    %3172 = vmatprep.subr.mxu0 0.0
    %3173 = vmatpush1.msra.mxu0 0.0
    %3174 = vmatprep.subr.mxu0 0.0
    %3175 = vmatpush1.msra.mxu0 0.0
    %3176 = vmatprep.subr.mxu0 0.0
    %3177 = vmatpush1.msra.mxu0 0.0
    %3178 = vmatprep.subr.mxu0 0.0
    %3179 = vmatpush1.msra.mxu0 0.0
    %3180 = vmatprep.subr.mxu0 0.0
    %3181 = vmatpush1.msra.mxu0 0.0
    %3182 = vmatprep.subr.mxu0 0.0
    %3183 = vmatpush1.msra.mxu0 0.0
    %3184 = vmatprep.subr.mxu0 0.0
    %3185 = vmatpush1.msra.mxu0 0.0
    %3186 = vmatprep.subr.mxu0 0.0
    %3187 = vmatpush1.msra.mxu0 0.0
    %3188 = vmatprep.subr.mxu0 0.0
    %3189 = vmatpush1.msra.mxu0 0.0
    %3190 = vmatprep.subr.mxu0 0.0
    %3191 = vmatpush1.msra.mxu0 0.0
    %3192 = vmatprep.subr.mxu0 0.0
    %3193 = vmatpush1.msra.mxu0 0.0
    %3194 = vmatprep.subr.mxu0 0.0
    %3195 = vmatpush1.msra.mxu0 0.0
    %3196 = vmatprep.subr.mxu0 0.0
    %3197 = vmatpush1.msra.mxu0 0.0
    %3198 = vmatprep.subr.mxu0 0.0
    %3199 = vmatpush1.msra.mxu0 0.0
    %3200 = vmatprep.subr.mxu0 0.0
    %3201 = vmatpush1.msra.mxu0 0.0
    %3202 = vmatprep.subr.mxu0 0.0
    %3203 = vmatpush1.msra.mxu0 0.0
    %3204 = vmatprep.subr.mxu0 0.0
    %3205 = vmatpush1.msra.mxu0 0.0
    %3206 = vmatprep.subr.mxu0 0.0
    %3207 = vmatpush1.msra.mxu0 0.0
    %3208 = vmatprep.subr.mxu0 0.0
    %3209 = vmatpush1.msra.mxu0 0.0
    %3210 = vmatprep.subr.mxu0 0.0
    %3211 = vmatpush1.msra.mxu0 0.0
    %3212 = vmatprep.subr.mxu0 0.0
    %3213 = vmatpush1.msra.mxu0 0.0
    %3214 = vmatprep.subr.mxu0 0.0
    %3215 = vmatpush1.msra.mxu0 0.0
    %3216 = vmatprep.subr.mxu0 0.0
    %3217 = vmatpush1.msra.mxu0 0.0
    %3218 = vmatprep.subr.mxu0 0.0
    %3219 = vmatpush1.msra.mxu0 0.0
    %3220 = vmatprep.subr.mxu0 0.0
    %3221 = vmatpush1.msra.mxu0 0.0
    %3222 = vmatprep.subr.mxu0 0.0
    %3223 = vmatpush1.msra.mxu0 0.0
    %3224 = vmatprep.subr.mxu0 0.0
    %3225 = vmatpush1.msra.mxu0 0.0
    %3226 = vmatprep.subr.mxu0 0.0
    %3227 = vmatpush1.msra.mxu0 0.0
    %3228 = vmatprep.mubr.f32.mxu0 0.0
    %3229 = vmatmul.mubr.f32.gmra.mrb[0].mxu0 %v2803
    %v3230 = vpop.f32.mrb[0].mxu0
    %v3231 = vadd.f32 0.0, %v3230
    %v3232 = vpop.f32.mrb[0].mxu0
    %3233 = vmatprep.mubr.f32.mxu0 0.0
    %3234 = vmatmul.mubr.f32.gmra.mrb[0].mxu0 %v2806
    %v3235 = vpop.f32.mrb[0].mxu0
    %v3236 = vadd.f32 0.0, %v3235
    %v3237 = vpop.f32.mrb[0].mxu0
    %3238 = vmatprep.mubr.f32.mxu0 0.0
    %3239 = vmatmul.mubr.f32.gmra.mrb[0].mxu0 %v2809
    %v3240 = vpop.f32.mrb[0].mxu0
    %v3241 = vadd.f32 0.0, %v3240
    %v3242 = vpop.f32.mrb[0].mxu0
    %3243 = vdwg.mxu0
    %v3245 = vsel %vm2975, %v3160, 0
    %v3248 = vsel %vm2975, %v3161, 0
    %v3251 = vsel %vm2975, %v3162, 0
    %v3254 = vsel %vm139, %v3241, 0
    %3256 = vmatprep.subr.mxu0 0.0
    %3257 = vmatpush1.msra.mxu0 %v3231
    %3258 = vmatprep.subr.mxu0 0.0
    %3259 = vmatpush1.msra.mxu0 %v3236
    %3260 = vmatprep.subr.mxu0 0.0
    %3261 = vmatpush1.msra.mxu0 %v3254
    %3262 = vmatprep.subr.mxu0 0.0
    %3263 = vmatpush1.msra.mxu0 0.0
    %3264 = vmatprep.subr.mxu0 0.0
    %3265 = vmatpush1.msra.mxu0 0.0
    %3266 = vmatprep.subr.mxu0 0.0
    %3267 = vmatpush1.msra.mxu0 0.0
    %3268 = vmatprep.subr.mxu0 0.0
    %3269 = vmatpush1.msra.mxu0 0.0
    %3270 = vmatprep.subr.mxu0 0.0
    %3271 = vmatpush1.msra.mxu0 0.0
    %3272 = vmatprep.subr.mxu0 0.0
    %3273 = vmatpush1.msra.mxu0 0.0
    %3274 = vmatprep.subr.mxu0 0.0
    %3275 = vmatpush1.msra.mxu0 0.0
    %3276 = vmatprep.subr.mxu0 0.0
    %3277 = vmatpush1.msra.mxu0 0.0
    %3278 = vmatprep.subr.mxu0 0.0
    %3279 = vmatpush1.msra.mxu0 0.0
    %3280 = vmatprep.subr.mxu0 0.0
    %3281 = vmatpush1.msra.mxu0 0.0
    %3282 = vmatprep.subr.mxu0 0.0
    %3283 = vmatpush1.msra.mxu0 0.0
    %3284 = vmatprep.subr.mxu0 0.0
    %3285 = vmatpush1.msra.mxu0 0.0
    %3286 = vmatprep.subr.mxu0 0.0
    %3287 = vmatpush1.msra.mxu0 0.0
    %3288 = vmatprep.subr.mxu0 0.0
    %3289 = vmatpush1.msra.mxu0 0.0
    %3290 = vmatprep.subr.mxu0 0.0
    %3291 = vmatpush1.msra.mxu0 0.0
    %3292 = vmatprep.subr.mxu0 0.0
    %3293 = vmatpush1.msra.mxu0 0.0
    %3294 = vmatprep.subr.mxu0 0.0
    %3295 = vmatpush1.msra.mxu0 0.0
    %3296 = vmatprep.subr.mxu0 0.0
    %3297 = vmatpush1.msra.mxu0 0.0
    %3298 = vmatprep.subr.mxu0 0.0
    %3299 = vmatpush1.msra.mxu0 0.0
    %3300 = vmatprep.subr.mxu0 0.0
    %3301 = vmatpush1.msra.mxu0 0.0
    %3302 = vmatprep.subr.mxu0 0.0
    %3303 = vmatpush1.msra.mxu0 0.0
    %3304 = vmatprep.subr.mxu0 0.0
    %3305 = vmatpush1.msra.mxu0 0.0
    %3306 = vmatprep.subr.mxu0 0.0
    %3307 = vmatpush1.msra.mxu0 0.0
    %3308 = vmatprep.subr.mxu0 0.0
    %3309 = vmatpush1.msra.mxu0 0.0
    %3310 = vmatprep.subr.mxu0 0.0
    %3311 = vmatpush1.msra.mxu0 0.0
    %3312 = vmatprep.subr.mxu0 0.0
    %3313 = vmatpush1.msra.mxu0 0.0
    %3314 = vmatprep.subr.mxu0 0.0
    %3315 = vmatpush1.msra.mxu0 0.0
    %3316 = vmatprep.subr.mxu0 0.0
    %3317 = vmatpush1.msra.mxu0 0.0
    %3318 = vmatprep.subr.mxu0 0.0
    %3319 = vmatpush1.msra.mxu0 0.0
    %3320 = vmatprep.mubr.f32.mxu0 0.0
    %3321 = vmatmul.mubr.f32.gmra.mrb[0].mxu0 %v3245
    %v3322 = vpop.f32.mrb[0].mxu0
    %v3323 = vadd.f32 0.0, %v3322
    %v3324 = vpop.f32.mrb[0].mxu0
    %3325 = vmatprep.mubr.f32.mxu0 0.0
    %3326 = vmatmul.mubr.f32.gmra.mrb[0].mxu0 %v3248
    %v3327 = vpop.f32.mrb[0].mxu0
    %v3328 = vadd.f32 0.0, %v3327
    %v3329 = vpop.f32.mrb[0].mxu0
    %3330 = vmatprep.mubr.f32.mxu0 0.0
    %3331 = vmatmul.mubr.f32.gmra.mrb[0].mxu0 %v3251
    %v3332 = vpop.f32.mrb[0].mxu0
    %v3333 = vadd.f32 0.0, %v3332
    %v3334 = vpop.f32.mrb[0].mxu0
    %3335 = vdwg.mxu0
    %v3336 = vadd.f32 %v3147, %v3323
    %v3337 = vadd.f32 %v3152, %v3328
    %v3338 = vadd.f32 %v3157, %v3333
    %v3339 = vld [vmem:[%s0 + $0x520] sm:$0xff]
    %v3340 = vld [vmem:[%s0 + $0x528] sm:$0xff]
    %v3341 = vld [vmem:[%s0 + $0x530] sm:$0xf]
    %v3342 = vld [vmem:[%s0 + $0x538] sm:$0xff]
    %3343 = vmatprep.subr.mxu0 0.0
    %3344 = vmatpush1.msra.mxu0 %v3342
    %3345 = vmatprep.subr.mxu0 0.0
    %3346 = vmatpush1.msra.mxu0 0.0
    %3347 = vmatprep.subr.mxu0 0.0
    %3348 = vmatpush1.msra.mxu0 0.0
    %3349 = vmatprep.subr.mxu0 0.0
    %3350 = vmatpush1.msra.mxu0 0.0
    %3351 = vmatprep.subr.mxu0 0.0
    %3352 = vmatpush1.msra.mxu0 0.0
    %3353 = vmatprep.subr.mxu0 0.0
    %3354 = vmatpush1.msra.mxu0 0.0
    %3355 = vmatprep.subr.mxu0 0.0
    %3356 = vmatpush1.msra.mxu0 0.0
    %3357 = vmatprep.subr.mxu0 0.0
    %3358 = vmatpush1.msra.mxu0 0.0
    %3359 = vmatprep.subr.mxu0 0.0
    %3360 = vmatpush1.msra.mxu0 0.0
    %3361 = vmatprep.subr.mxu0 0.0
    %3362 = vmatpush1.msra.mxu0 0.0
    %3363 = vmatprep.subr.mxu0 0.0
    %3364 = vmatpush1.msra.mxu0 0.0
    %3365 = vmatprep.subr.mxu0 0.0
    %3366 = vmatpush1.msra.mxu0 0.0
    %3367 = vmatprep.subr.mxu0 0.0
    %3368 = vmatpush1.msra.mxu0 0.0
    %3369 = vmatprep.subr.mxu0 0.0
    %3370 = vmatpush1.msra.mxu0 0.0
    %3371 = vmatprep.subr.mxu0 0.0
    %3372 = vmatpush1.msra.mxu0 0.0
    %3373 = vmatprep.subr.mxu0 0.0
    %3374 = vmatpush1.msra.mxu0 0.0
    %3375 = vmatprep.subr.mxu0 0.0
    %3376 = vmatpush1.msra.mxu0 0.0
    %3377 = vmatprep.subr.mxu0 0.0
    %3378 = vmatpush1.msra.mxu0 0.0
    %3379 = vmatprep.subr.mxu0 0.0
    %3380 = vmatpush1.msra.mxu0 0.0
    %3381 = vmatprep.subr.mxu0 0.0
    %3382 = vmatpush1.msra.mxu0 0.0
    %3383 = vmatprep.subr.mxu0 0.0
    %3384 = vmatpush1.msra.mxu0 0.0
    %3385 = vmatprep.subr.mxu0 0.0
    %3386 = vmatpush1.msra.mxu0 0.0
    %3387 = vmatprep.subr.mxu0 0.0
    %3388 = vmatpush1.msra.mxu0 0.0
    %3389 = vmatprep.subr.mxu0 0.0
    %3390 = vmatpush1.msra.mxu0 0.0
    %3391 = vmatprep.subr.mxu0 0.0
    %3392 = vmatpush1.msra.mxu0 0.0
    %3393 = vmatprep.subr.mxu0 0.0
    %3394 = vmatpush1.msra.mxu0 0.0
    %3395 = vmatprep.subr.mxu0 0.0
    %3396 = vmatpush1.msra.mxu0 0.0
    %3397 = vmatprep.subr.mxu0 0.0
    %3398 = vmatpush1.msra.mxu0 0.0
    %3399 = vmatprep.subr.mxu0 0.0
    %3400 = vmatpush1.msra.mxu0 0.0
    %3401 = vmatprep.subr.mxu0 0.0
    %3402 = vmatpush1.msra.mxu0 0.0
    %3403 = vmatprep.subr.mxu0 0.0
    %3404 = vmatpush1.msra.mxu0 0.0
    %3405 = vmatprep.subr.mxu0 0.0
    %3406 = vmatpush1.msra.mxu0 0.0
    %3407 = vmatprep.mubr.f32.mxu0 0.0
    %3408 = vmatmul.mubr.f32.gmra.mrb[0].mxu0 %v2803
    %v3409 = vpop.f32.mrb[0].mxu0
    %v3410 = vadd.f32 0.0, %v3409
    %v3411 = vpop.f32.mrb[0].mxu0
    %3412 = vmatprep.mubr.f32.mxu0 0.0
    %3413 = vmatmul.mubr.f32.gmra.mrb[0].mxu0 %v2806
    %v3414 = vpop.f32.mrb[0].mxu0
    %v3415 = vadd.f32 0.0, %v3414
    %v3416 = vpop.f32.mrb[0].mxu0
    %3417 = vmatprep.mubr.f32.mxu0 0.0
    %3418 = vmatmul.mubr.f32.gmra.mrb[0].mxu0 %v2809
    %v3419 = vpop.f32.mrb[0].mxu0
    %v3420 = vadd.f32 0.0, %v3419
    %v3421 = vpop.f32.mrb[0].mxu0
    %3422 = vdwg.mxu0
    %v3424 = vsel %vm2975, %v3339, 0
    %v3427 = vsel %vm2975, %v3340, 0
    %v3430 = vsel %vm2975, %v3341, 0
    %v3433 = vsel %vm139, %v3420, 0
    %3435 = vmatprep.subr.mxu0 0.0
    %3436 = vmatpush1.msra.mxu0 %v3410
    %3437 = vmatprep.subr.mxu0 0.0
    %3438 = vmatpush1.msra.mxu0 %v3415
    %3439 = vmatprep.subr.mxu0 0.0
    %3440 = vmatpush1.msra.mxu0 %v3433
    %3441 = vmatprep.subr.mxu0 0.0
    %3442 = vmatpush1.msra.mxu0 0.0
    %3443 = vmatprep.subr.mxu0 0.0
    %3444 = vmatpush1.msra.mxu0 0.0
    %3445 = vmatprep.subr.mxu0 0.0
    %3446 = vmatpush1.msra.mxu0 0.0
    %3447 = vmatprep.subr.mxu0 0.0
    %3448 = vmatpush1.msra.mxu0 0.0
    %3449 = vmatprep.subr.mxu0 0.0
    %3450 = vmatpush1.msra.mxu0 0.0
    %3451 = vmatprep.subr.mxu0 0.0
    %3452 = vmatpush1.msra.mxu0 0.0
    %3453 = vmatprep.subr.mxu0 0.0
    %3454 = vmatpush1.msra.mxu0 0.0
    %3455 = vmatprep.subr.mxu0 0.0
    %3456 = vmatpush1.msra.mxu0 0.0
    %3457 = vmatprep.subr.mxu0 0.0
    %3458 = vmatpush1.msra.mxu0 0.0
    %3459 = vmatprep.subr.mxu0 0.0
    %3460 = vmatpush1.msra.mxu0 0.0
    %3461 = vmatprep.subr.mxu0 0.0
    %3462 = vmatpush1.msra.mxu0 0.0
    %3463 = vmatprep.subr.mxu0 0.0
    %3464 = vmatpush1.msra.mxu0 0.0
    %3465 = vmatprep.subr.mxu0 0.0
    %3466 = vmatpush1.msra.mxu0 0.0
    %3467 = vmatprep.subr.mxu0 0.0
    %3468 = vmatpush1.msra.mxu0 0.0
    %3469 = vmatprep.subr.mxu0 0.0
    %3470 = vmatpush1.msra.mxu0 0.0
    %3471 = vmatprep.subr.mxu0 0.0
    %3472 = vmatpush1.msra.mxu0 0.0
    %3473 = vmatprep.subr.mxu0 0.0
    %3474 = vmatpush1.msra.mxu0 0.0
    %3475 = vmatprep.subr.mxu0 0.0
    %3476 = vmatpush1.msra.mxu0 0.0
    %3477 = vmatprep.subr.mxu0 0.0
    %3478 = vmatpush1.msra.mxu0 0.0
    %3479 = vmatprep.subr.mxu0 0.0
    %3480 = vmatpush1.msra.mxu0 0.0
    %3481 = vmatprep.subr.mxu0 0.0
    %3482 = vmatpush1.msra.mxu0 0.0
    %3483 = vmatprep.subr.mxu0 0.0
    %3484 = vmatpush1.msra.mxu0 0.0
    %3485 = vmatprep.subr.mxu0 0.0
    %3486 = vmatpush1.msra.mxu0 0.0
    %3487 = vmatprep.subr.mxu0 0.0
    %3488 = vmatpush1.msra.mxu0 0.0
    %3489 = vmatprep.subr.mxu0 0.0
    %3490 = vmatpush1.msra.mxu0 0.0
    %3491 = vmatprep.subr.mxu0 0.0
    %3492 = vmatpush1.msra.mxu0 0.0
    %3493 = vmatprep.subr.mxu0 0.0
    %3494 = vmatpush1.msra.mxu0 0.0
    %3495 = vmatprep.subr.mxu0 0.0
    %3496 = vmatpush1.msra.mxu0 0.0
    %3497 = vmatprep.subr.mxu0 0.0
    %3498 = vmatpush1.msra.mxu0 0.0
    %3499 = vmatprep.mubr.f32.mxu0 0.0
    %3500 = vmatmul.mubr.f32.gmra.mrb[0].mxu0 %v3424
    %v3501 = vpop.f32.mrb[0].mxu0
    %v3502 = vadd.f32 0.0, %v3501
    %v3503 = vpop.f32.mrb[0].mxu0
    %3504 = vmatprep.mubr.f32.mxu0 0.0
    %3505 = vmatmul.mubr.f32.gmra.mrb[0].mxu0 %v3427
    %v3506 = vpop.f32.mrb[0].mxu0
    %v3507 = vadd.f32 0.0, %v3506
    %v3508 = vpop.f32.mrb[0].mxu0
    %3509 = vmatprep.mubr.f32.mxu0 0.0
    %3510 = vmatmul.mubr.f32.gmra.mrb[0].mxu0 %v3430
    %v3511 = vpop.f32.mrb[0].mxu0
    %v3512 = vadd.f32 0.0, %v3511
    %v3513 = vpop.f32.mrb[0].mxu0
    %3514 = vdwg.mxu0
    %v3515 = vadd.f32 %v3336, %v3502
    %v3516 = vadd.f32 %v3337, %v3507
    %v3517 = vadd.f32 %v3338, %v3512
    %v3518 = vld [vmem:[%s0 + $0x540] sm:$0xff]
    %v3519 = vld [vmem:[%s0 + $0x548] sm:$0xff]
    %v3520 = vld [vmem:[%s0 + $0x550] sm:$0xf]
    %3522 = vset.pattern.permute.xlu0 0
    %3523 = vperm.xlu0 %3522, %v3518
    %v3524 = vpop.permute.xlu0 %3523
    %3527 = vset.pattern.permute.xlu0 0
    %3528 = vperm.xlu0 %3527, %v3519
    %v3529 = vpop.permute.xlu0 %3528
    %3532 = vset.pattern.permute.xlu0 0
    %3533 = vperm.xlu0 %3532, %v3520
    %v3534 = vpop.permute.xlu0 %3533
    %v3536 = vadd.f32 %v3515, %v3524
    %v3537 = vadd.f32 %v3516, %v3529
    %v3538 = vadd.f32 %v3517, %v3534
    %v3539 = vmax.f32 %v3536, 0.0
    %v3540 = vmax.f32 %v3537, 0.0
    %v3541 = vmax.f32 %v3538, 0.0
    %v3542 = vld [vmem:[%s0 + $0x558] sm:$0xff]
    %v3543 = vld [vmem:[%s0 + $0x560] sm:$0x3]
    %v3544 = vld [vmem:[%s0 + $0x568] sm:$0xff]
    %v3545 = vld [vmem:[%s0 + $0x570] sm:$0x3]
    %3547 = vset.pattern.permute.xlu0 0
    %3548 = vperm.xlu0 %3547, %v3544
    %v3549 = vpop.permute.xlu0 %3548
    %3552 = vset.pattern.permute.xlu0 0
    %3553 = vperm.xlu0 %3552, %v3545
    %v3554 = vpop.permute.xlu0 %3553
    %v3557 = vsel %vm2975, %v3542, 0
    %v3560 = vsel %vm2975, %v3543, 0
    %v3563 = vsel %vm139, %v3541, 0
    %3565 = vmatprep.subr.mxu0 0.0
    %3566 = vmatpush1.msra.mxu0 %v3539
    %3567 = vmatprep.subr.mxu0 0.0
    %3568 = vmatpush1.msra.mxu0 %v3540
    %3569 = vmatprep.subr.mxu0 0.0
    %3570 = vmatpush1.msra.mxu0 %v3563
    %3571 = vmatprep.subr.mxu0 0.0
    %3572 = vmatpush1.msra.mxu0 0.0
    %3573 = vmatprep.subr.mxu0 0.0
    %3574 = vmatpush1.msra.mxu0 0.0
    %3575 = vmatprep.subr.mxu0 0.0
    %3576 = vmatpush1.msra.mxu0 0.0
    %3577 = vmatprep.subr.mxu0 0.0
    %3578 = vmatpush1.msra.mxu0 0.0
    %3579 = vmatprep.subr.mxu0 0.0
    %3580 = vmatpush1.msra.mxu0 0.0
    %3581 = vmatprep.subr.mxu0 0.0
    %3582 = vmatpush1.msra.mxu0 0.0
    %3583 = vmatprep.subr.mxu0 0.0
    %3584 = vmatpush1.msra.mxu0 0.0
    %3585 = vmatprep.subr.mxu0 0.0
    %3586 = vmatpush1.msra.mxu0 0.0
    %3587 = vmatprep.subr.mxu0 0.0
    %3588 = vmatpush1.msra.mxu0 0.0
    %3589 = vmatprep.subr.mxu0 0.0
    %3590 = vmatpush1.msra.mxu0 0.0
    %3591 = vmatprep.subr.mxu0 0.0
    %3592 = vmatpush1.msra.mxu0 0.0
    %3593 = vmatprep.subr.mxu0 0.0
    %3594 = vmatpush1.msra.mxu0 0.0
    %3595 = vmatprep.subr.mxu0 0.0
    %3596 = vmatpush1.msra.mxu0 0.0
    %3597 = vmatprep.subr.mxu0 0.0
    %3598 = vmatpush1.msra.mxu0 0.0
    %3599 = vmatprep.subr.mxu0 0.0
    %3600 = vmatpush1.msra.mxu0 0.0
    %3601 = vmatprep.subr.mxu0 0.0
    %3602 = vmatpush1.msra.mxu0 0.0
    %3603 = vmatprep.subr.mxu0 0.0
    %3604 = vmatpush1.msra.mxu0 0.0
    %3605 = vmatprep.subr.mxu0 0.0
    %3606 = vmatpush1.msra.mxu0 0.0
    %3607 = vmatprep.subr.mxu0 0.0
    %3608 = vmatpush1.msra.mxu0 0.0
    %3609 = vmatprep.subr.mxu0 0.0
    %3610 = vmatpush1.msra.mxu0 0.0
    %3611 = vmatprep.subr.mxu0 0.0
    %3612 = vmatpush1.msra.mxu0 0.0
    %3613 = vmatprep.subr.mxu0 0.0
    %3614 = vmatpush1.msra.mxu0 0.0
    %3615 = vmatprep.subr.mxu0 0.0
    %3616 = vmatpush1.msra.mxu0 0.0
    %3617 = vmatprep.subr.mxu0 0.0
    %3618 = vmatpush1.msra.mxu0 0.0
    %3619 = vmatprep.subr.mxu0 0.0
    %3620 = vmatpush1.msra.mxu0 0.0
    %3621 = vmatprep.subr.mxu0 0.0
    %3622 = vmatpush1.msra.mxu0 0.0
    %3623 = vmatprep.subr.mxu0 0.0
    %3624 = vmatpush1.msra.mxu0 0.0
    %3625 = vmatprep.subr.mxu0 0.0
    %3626 = vmatpush1.msra.mxu0 0.0
    %3627 = vmatprep.subr.mxu0 0.0
    %3628 = vmatpush1.msra.mxu0 0.0
    %3629 = vmatprep.mubr.f32.mxu0 0.0
    %3630 = vmatmul.mubr.f32.gmra.mrb[0].mxu0 %v3557
    %v3631 = vpop.f32.mrb[0].mxu0
    %v3632 = vadd.f32 %v3549, %v3631
    %v3633 = vpop.f32.mrb[0].mxu0
    %3634 = vmatprep.mubr.f32.mxu0 0.0
    %3635 = vmatmul.mubr.f32.gmra.mrb[0].mxu0 %v3560
    %v3636 = vpop.f32.mrb[0].mxu0
    %v3637 = vadd.f32 %v3554, %v3636
    %v3638 = vpop.f32.mrb[0].mxu0
    %3639 = vdwg.mxu0
    %v3640 = vmax.f32 %v3632, 0.0
    %v3641 = vmax.f32 %v3637, 0.0
    %v3642 = vld [vmem:[%s0 + $0x578] sm:$0x3f]
    %v3643 = vld [vmem:[%s0 + $0x580] sm:$0x3f]
    %3645 = vset.pattern.permute.xlu0 0
    %3646 = vperm.xlu0 %3645, %v3643
    %v3647 = vpop.permute.xlu0 %3646
    %vm3649 = vcmask 80896
    %v3651 = vsel %vm3649, %v3642, 0
    %vm3653 = vcmask 1041408
    %v3655 = vsel %vm3653, %v3641, 0
    %3657 = vmatprep.subr.mxu0 0.0
    %3658 = vmatpush1.msra.mxu0 %v3640
    %3659 = vmatprep.subr.mxu0 0.0
    %3660 = vmatpush1.msra.mxu0 %v3655
    %3661 = vmatprep.subr.mxu0 0.0
    %3662 = vmatpush1.msra.mxu0 0.0
    %3663 = vmatprep.subr.mxu0 0.0
    %3664 = vmatpush1.msra.mxu0 0.0
    %3665 = vmatprep.subr.mxu0 0.0
    %3666 = vmatpush1.msra.mxu0 0.0
    %3667 = vmatprep.subr.mxu0 0.0
    %3668 = vmatpush1.msra.mxu0 0.0
    %3669 = vmatprep.subr.mxu0 0.0
    %3670 = vmatpush1.msra.mxu0 0.0
    %3671 = vmatprep.subr.mxu0 0.0
    %3672 = vmatpush1.msra.mxu0 0.0
    %3673 = vmatprep.subr.mxu0 0.0
    %3674 = vmatpush1.msra.mxu0 0.0
    %3675 = vmatprep.subr.mxu0 0.0
    %3676 = vmatpush1.msra.mxu0 0.0
    %3677 = vmatprep.subr.mxu0 0.0
    %3678 = vmatpush1.msra.mxu0 0.0
    %3679 = vmatprep.subr.mxu0 0.0
    %3680 = vmatpush1.msra.mxu0 0.0
    %3681 = vmatprep.subr.mxu0 0.0
    %3682 = vmatpush1.msra.mxu0 0.0
    %3683 = vmatprep.subr.mxu0 0.0
    %3684 = vmatpush1.msra.mxu0 0.0
    %3685 = vmatprep.subr.mxu0 0.0
    %3686 = vmatpush1.msra.mxu0 0.0
    %3687 = vmatprep.subr.mxu0 0.0
    %3688 = vmatpush1.msra.mxu0 0.0
    %3689 = vmatprep.subr.mxu0 0.0
    %3690 = vmatpush1.msra.mxu0 0.0
    %3691 = vmatprep.subr.mxu0 0.0
    %3692 = vmatpush1.msra.mxu0 0.0
    %3693 = vmatprep.subr.mxu0 0.0
    %3694 = vmatpush1.msra.mxu0 0.0
    %3695 = vmatprep.subr.mxu0 0.0
    %3696 = vmatpush1.msra.mxu0 0.0
    %3697 = vmatprep.subr.mxu0 0.0
    %3698 = vmatpush1.msra.mxu0 0.0
    %3699 = vmatprep.subr.mxu0 0.0
    %3700 = vmatpush1.msra.mxu0 0.0
    %3701 = vmatprep.subr.mxu0 0.0
    %3702 = vmatpush1.msra.mxu0 0.0
    %3703 = vmatprep.subr.mxu0 0.0
    %3704 = vmatpush1.msra.mxu0 0.0
    %3705 = vmatprep.subr.mxu0 0.0
    %3706 = vmatpush1.msra.mxu0 0.0
    %3707 = vmatprep.subr.mxu0 0.0
    %3708 = vmatpush1.msra.mxu0 0.0
    %3709 = vmatprep.subr.mxu0 0.0
    %3710 = vmatpush1.msra.mxu0 0.0
    %3711 = vmatprep.subr.mxu0 0.0
    %3712 = vmatpush1.msra.mxu0 0.0
    %3713 = vmatprep.subr.mxu0 0.0
    %3714 = vmatpush1.msra.mxu0 0.0
    %3715 = vmatprep.subr.mxu0 0.0
    %3716 = vmatpush1.msra.mxu0 0.0
    %3717 = vmatprep.subr.mxu0 0.0
    %3718 = vmatpush1.msra.mxu0 0.0
    %3719 = vmatprep.subr.mxu0 0.0
    %3720 = vmatpush1.msra.mxu0 0.0
    %3721 = vmatprep.mubr.f32.mxu0 0.0
    %3722 = vmatmul.mubr.f32.gmra.mrb[0].mxu0 %v3651
    %v3723 = vpop.f32.mrb[0].mxu0
    %v3724 = vadd.f32 %v3647, %v3723
    %v3725 = vpop.f32.mrb[0].mxu0
    %3726 = vdwg.mxu0
    %v3727 = vld [vmem:[%s0 + $0x728] sm:$0x7f]
    %v3728 = vld [vmem:[%s0 + $0x730] sm:$0x7f]
    %v3729 = vld [vmem:[%s0 + $0x588] sm:$0xff]
    %v3730 = vld [vmem:[%s0 + $0x590] sm:$0xff]
    %v3731 = vld [vmem:[%s0 + $0x598] sm:$0xff]
    %v3732 = vld [vmem:[%s0 + $0x5a0] sm:$0x3f]
    %v3733 = vld [vmem:[%s0 + $0x5a8] sm:$0xff]
    %v3734 = vld [vmem:[%s0 + $0x5b0] sm:$0xff]
    %v3735 = vld [vmem:[%s0 + $0x5b8] sm:$0xff]
    %v3736 = vld [vmem:[%s0 + $0x5c0] sm:$0x3f]
    %vm3737 = vcmask 56320
    %v3739 = vsel %vm3737, %v3733, 0
    %v3742 = vsel %vm3737, %v3734, 0
    %v3745 = vsel %vm3737, %v3735, 0
    %v3748 = vsel %vm3737, %v3736, 0
    %v3751 = vsel %vm1623, %v3727, 0
    %3753 = vmatprep.subr.mxu0 0.0
    %3754 = vmatpush1.msra.mxu0 %v3751
    %3755 = vmatprep.subr.mxu0 0.0
    %3756 = vmatpush1.msra.mxu0 0.0
    %3757 = vmatprep.subr.mxu0 0.0
    %3758 = vmatpush1.msra.mxu0 0.0
    %3759 = vmatprep.subr.mxu0 0.0
    %3760 = vmatpush1.msra.mxu0 0.0
    %3761 = vmatprep.subr.mxu0 0.0
    %3762 = vmatpush1.msra.mxu0 0.0
    %3763 = vmatprep.subr.mxu0 0.0
    %3764 = vmatpush1.msra.mxu0 0.0
    %3765 = vmatprep.subr.mxu0 0.0
    %3766 = vmatpush1.msra.mxu0 0.0
    %3767 = vmatprep.subr.mxu0 0.0
    %3768 = vmatpush1.msra.mxu0 0.0
    %3769 = vmatprep.subr.mxu0 0.0
    %3770 = vmatpush1.msra.mxu0 0.0
    %3771 = vmatprep.subr.mxu0 0.0
    %3772 = vmatpush1.msra.mxu0 0.0
    %3773 = vmatprep.subr.mxu0 0.0
    %3774 = vmatpush1.msra.mxu0 0.0
    %3775 = vmatprep.subr.mxu0 0.0
    %3776 = vmatpush1.msra.mxu0 0.0
    %3777 = vmatprep.subr.mxu0 0.0
    %3778 = vmatpush1.msra.mxu0 0.0
    %3779 = vmatprep.subr.mxu0 0.0
    %3780 = vmatpush1.msra.mxu0 0.0
    %3781 = vmatprep.subr.mxu0 0.0
    %3782 = vmatpush1.msra.mxu0 0.0
    %3783 = vmatprep.subr.mxu0 0.0
    %3784 = vmatpush1.msra.mxu0 0.0
    %3785 = vmatprep.subr.mxu0 0.0
    %3786 = vmatpush1.msra.mxu0 0.0
    %3787 = vmatprep.subr.mxu0 0.0
    %3788 = vmatpush1.msra.mxu0 0.0
    %3789 = vmatprep.subr.mxu0 0.0
    %3790 = vmatpush1.msra.mxu0 0.0
    %3791 = vmatprep.subr.mxu0 0.0
    %3792 = vmatpush1.msra.mxu0 0.0
    %3793 = vmatprep.subr.mxu0 0.0
    %3794 = vmatpush1.msra.mxu0 0.0
    %3795 = vmatprep.subr.mxu0 0.0
    %3796 = vmatpush1.msra.mxu0 0.0
    %3797 = vmatprep.subr.mxu0 0.0
    %3798 = vmatpush1.msra.mxu0 0.0
    %3799 = vmatprep.subr.mxu0 0.0
    %3800 = vmatpush1.msra.mxu0 0.0
    %3801 = vmatprep.subr.mxu0 0.0
    %3802 = vmatpush1.msra.mxu0 0.0
    %3803 = vmatprep.subr.mxu0 0.0
    %3804 = vmatpush1.msra.mxu0 0.0
    %3805 = vmatprep.subr.mxu0 0.0
    %3806 = vmatpush1.msra.mxu0 0.0
    %3807 = vmatprep.subr.mxu0 0.0
    %3808 = vmatpush1.msra.mxu0 0.0
    %3809 = vmatprep.subr.mxu0 0.0
    %3810 = vmatpush1.msra.mxu0 0.0
    %3811 = vmatprep.subr.mxu0 0.0
    %3812 = vmatpush1.msra.mxu0 0.0
    %3813 = vmatprep.subr.mxu0 0.0
    %3814 = vmatpush1.msra.mxu0 0.0
    %3815 = vmatprep.subr.mxu0 0.0
    %3816 = vmatpush1.msra.mxu0 0.0
    %3817 = vmatprep.mubr.f32.mxu0 0.0
    %3818 = vmatmul.mubr.f32.gmra.mrb[0].mxu0 %v3739
    %v3819 = vpop.f32.mrb[0].mxu0
    %v3820 = vadd.f32 0.0, %v3819
    %v3821 = vpop.f32.mrb[0].mxu0
    %3822 = vmatprep.mubr.f32.mxu0 0.0
    %3823 = vmatmul.mubr.f32.gmra.mrb[0].mxu0 %v3742
    %v3824 = vpop.f32.mrb[0].mxu0
    %v3825 = vadd.f32 0.0, %v3824
    %v3826 = vpop.f32.mrb[0].mxu0
    %3827 = vmatprep.mubr.f32.mxu0 0.0
    %3828 = vmatmul.mubr.f32.gmra.mrb[0].mxu0 %v3745
    %v3829 = vpop.f32.mrb[0].mxu0
    %v3830 = vadd.f32 0.0, %v3829
    %v3831 = vpop.f32.mrb[0].mxu0
    %3832 = vmatprep.mubr.f32.mxu0 0.0
    %3833 = vmatmul.mubr.f32.gmra.mrb[0].mxu0 %v3748
    %v3834 = vpop.f32.mrb[0].mxu0
    %v3835 = vadd.f32 0.0, %v3834
    %v3836 = vpop.f32.mrb[0].mxu0
    %3837 = vdwg.mxu0
    %vm3838 = vcmask 48128
    %v3840 = vsel %vm3838, %v3729, 0
    %v3843 = vsel %vm3838, %v3730, 0
    %v3846 = vsel %vm3838, %v3731, 0
    %v3849 = vsel %vm3838, %v3732, 0
    %vm3851 = vcmask 1045504
    %v3853 = vsel %vm3851, %v3724, 0
    %3855 = vmatprep.subr.mxu0 0.0
    %3856 = vmatpush1.msra.mxu0 %v3853
    %3857 = vmatprep.subr.mxu0 0.0
    %3858 = vmatpush1.msra.mxu0 0.0
    %3859 = vmatprep.subr.mxu0 0.0
    %3860 = vmatpush1.msra.mxu0 0.0
    %3861 = vmatprep.subr.mxu0 0.0
    %3862 = vmatpush1.msra.mxu0 0.0
    %3863 = vmatprep.subr.mxu0 0.0
    %3864 = vmatpush1.msra.mxu0 0.0
    %3865 = vmatprep.subr.mxu0 0.0
    %3866 = vmatpush1.msra.mxu0 0.0
    %3867 = vmatprep.subr.mxu0 0.0
    %3868 = vmatpush1.msra.mxu0 0.0
    %3869 = vmatprep.subr.mxu0 0.0
    %3870 = vmatpush1.msra.mxu0 0.0
    %3871 = vmatprep.subr.mxu0 0.0
    %3872 = vmatpush1.msra.mxu0 0.0
    %3873 = vmatprep.subr.mxu0 0.0
    %3874 = vmatpush1.msra.mxu0 0.0
    %3875 = vmatprep.subr.mxu0 0.0
    %3876 = vmatpush1.msra.mxu0 0.0
    %3877 = vmatprep.subr.mxu0 0.0
    %3878 = vmatpush1.msra.mxu0 0.0
    %3879 = vmatprep.subr.mxu0 0.0
    %3880 = vmatpush1.msra.mxu0 0.0
    %3881 = vmatprep.subr.mxu0 0.0
    %3882 = vmatpush1.msra.mxu0 0.0
    %3883 = vmatprep.subr.mxu0 0.0
    %3884 = vmatpush1.msra.mxu0 0.0
    %3885 = vmatprep.subr.mxu0 0.0
    %3886 = vmatpush1.msra.mxu0 0.0
    %3887 = vmatprep.subr.mxu0 0.0
    %3888 = vmatpush1.msra.mxu0 0.0
    %3889 = vmatprep.subr.mxu0 0.0
    %3890 = vmatpush1.msra.mxu0 0.0
    %3891 = vmatprep.subr.mxu0 0.0
    %3892 = vmatpush1.msra.mxu0 0.0
    %3893 = vmatprep.subr.mxu0 0.0
    %3894 = vmatpush1.msra.mxu0 0.0
    %3895 = vmatprep.subr.mxu0 0.0
    %3896 = vmatpush1.msra.mxu0 0.0
    %3897 = vmatprep.subr.mxu0 0.0
    %3898 = vmatpush1.msra.mxu0 0.0
    %3899 = vmatprep.subr.mxu0 0.0
    %3900 = vmatpush1.msra.mxu0 0.0
    %3901 = vmatprep.subr.mxu0 0.0
    %3902 = vmatpush1.msra.mxu0 0.0
    %3903 = vmatprep.subr.mxu0 0.0
    %3904 = vmatpush1.msra.mxu0 0.0
    %3905 = vmatprep.subr.mxu0 0.0
    %3906 = vmatpush1.msra.mxu0 0.0
    %3907 = vmatprep.subr.mxu0 0.0
    %3908 = vmatpush1.msra.mxu0 0.0
    %3909 = vmatprep.subr.mxu0 0.0
    %3910 = vmatpush1.msra.mxu0 0.0
    %3911 = vmatprep.subr.mxu0 0.0
    %3912 = vmatpush1.msra.mxu0 0.0
    %3913 = vmatprep.subr.mxu0 0.0
    %3914 = vmatpush1.msra.mxu0 0.0
    %3915 = vmatprep.subr.mxu0 0.0
    %3916 = vmatpush1.msra.mxu0 0.0
    %3917 = vmatprep.subr.mxu0 0.0
    %3918 = vmatpush1.msra.mxu0 0.0
    %3919 = vmatprep.mubr.f32.mxu0 0.0
    %3920 = vmatmul.mubr.f32.gmra.mrb[0].mxu0 %v3840
    %v3921 = vpop.f32.mrb[0].mxu0
    %v3922 = vadd.f32 %v3820, %v3921
    %v3923 = vpop.f32.mrb[0].mxu0
    %3924 = vmatprep.mubr.f32.mxu0 0.0
    %3925 = vmatmul.mubr.f32.gmra.mrb[0].mxu0 %v3843
    %v3926 = vpop.f32.mrb[0].mxu0
    %v3927 = vadd.f32 %v3825, %v3926
    %v3928 = vpop.f32.mrb[0].mxu0
    %3929 = vmatprep.mubr.f32.mxu0 0.0
    %3930 = vmatmul.mubr.f32.gmra.mrb[0].mxu0 %v3846
    %v3931 = vpop.f32.mrb[0].mxu0
    %v3932 = vadd.f32 %v3830, %v3931
    %v3933 = vpop.f32.mrb[0].mxu0
    %3934 = vmatprep.mubr.f32.mxu0 0.0
    %3935 = vmatmul.mubr.f32.gmra.mrb[0].mxu0 %v3849
    %v3936 = vpop.f32.mrb[0].mxu0
    %v3937 = vadd.f32 %v3835, %v3936
    %v3938 = vpop.f32.mrb[0].mxu0
    %3939 = vdwg.mxu0
    %v3940 = vld [vmem:[%s0 + $0x5c8] sm:$0xff]
    %v3941 = vld [vmem:[%s0 + $0x5d0] sm:$0xff]
    %v3942 = vld [vmem:[%s0 + $0x5d8] sm:$0xff]
    %v3943 = vld [vmem:[%s0 + $0x5e0] sm:$0x3f]
    %v3945 = vsel %vm3737, %v3940, 0
    %v3948 = vsel %vm3737, %v3941, 0
    %v3951 = vsel %vm3737, %v3942, 0
    %v3954 = vsel %vm3737, %v3943, 0
    %v3957 = vsel %vm1623, %v3728, 0
    %3959 = vmatprep.subr.mxu0 0.0
    %3960 = vmatpush1.msra.mxu0 %v3957
    %3961 = vmatprep.subr.mxu0 0.0
    %3962 = vmatpush1.msra.mxu0 0.0
    %3963 = vmatprep.subr.mxu0 0.0
    %3964 = vmatpush1.msra.mxu0 0.0
    %3965 = vmatprep.subr.mxu0 0.0
    %3966 = vmatpush1.msra.mxu0 0.0
    %3967 = vmatprep.subr.mxu0 0.0
    %3968 = vmatpush1.msra.mxu0 0.0
    %3969 = vmatprep.subr.mxu0 0.0
    %3970 = vmatpush1.msra.mxu0 0.0
    %3971 = vmatprep.subr.mxu0 0.0
    %3972 = vmatpush1.msra.mxu0 0.0
    %3973 = vmatprep.subr.mxu0 0.0
    %3974 = vmatpush1.msra.mxu0 0.0
    %3975 = vmatprep.subr.mxu0 0.0
    %3976 = vmatpush1.msra.mxu0 0.0
    %3977 = vmatprep.subr.mxu0 0.0
    %3978 = vmatpush1.msra.mxu0 0.0
    %3979 = vmatprep.subr.mxu0 0.0
    %3980 = vmatpush1.msra.mxu0 0.0
    %3981 = vmatprep.subr.mxu0 0.0
    %3982 = vmatpush1.msra.mxu0 0.0
    %3983 = vmatprep.subr.mxu0 0.0
    %3984 = vmatpush1.msra.mxu0 0.0
    %3985 = vmatprep.subr.mxu0 0.0
    %3986 = vmatpush1.msra.mxu0 0.0
    %3987 = vmatprep.subr.mxu0 0.0
    %3988 = vmatpush1.msra.mxu0 0.0
    %3989 = vmatprep.subr.mxu0 0.0
    %3990 = vmatpush1.msra.mxu0 0.0
    %3991 = vmatprep.subr.mxu0 0.0
    %3992 = vmatpush1.msra.mxu0 0.0
    %3993 = vmatprep.subr.mxu0 0.0
    %3994 = vmatpush1.msra.mxu0 0.0
    %3995 = vmatprep.subr.mxu0 0.0
    %3996 = vmatpush1.msra.mxu0 0.0
    %3997 = vmatprep.subr.mxu0 0.0
    %3998 = vmatpush1.msra.mxu0 0.0
    %3999 = vmatprep.subr.mxu0 0.0
    %4000 = vmatpush1.msra.mxu0 0.0
    %4001 = vmatprep.subr.mxu0 0.0
    %4002 = vmatpush1.msra.mxu0 0.0
    %4003 = vmatprep.subr.mxu0 0.0
    %4004 = vmatpush1.msra.mxu0 0.0
    %4005 = vmatprep.subr.mxu0 0.0
    %4006 = vmatpush1.msra.mxu0 0.0
    %4007 = vmatprep.subr.mxu0 0.0
    %4008 = vmatpush1.msra.mxu0 0.0
    %4009 = vmatprep.subr.mxu0 0.0
    %4010 = vmatpush1.msra.mxu0 0.0
    %4011 = vmatprep.subr.mxu0 0.0
    %4012 = vmatpush1.msra.mxu0 0.0
    %4013 = vmatprep.subr.mxu0 0.0
    %4014 = vmatpush1.msra.mxu0 0.0
    %4015 = vmatprep.subr.mxu0 0.0
    %4016 = vmatpush1.msra.mxu0 0.0
    %4017 = vmatprep.subr.mxu0 0.0
    %4018 = vmatpush1.msra.mxu0 0.0
    %4019 = vmatprep.subr.mxu0 0.0
    %4020 = vmatpush1.msra.mxu0 0.0
    %4021 = vmatprep.subr.mxu0 0.0
    %4022 = vmatpush1.msra.mxu0 0.0
    %4023 = vmatprep.mubr.f32.mxu0 0.0
    %4024 = vmatmul.mubr.f32.gmra.mrb[0].mxu0 %v3945
    %v4025 = vpop.f32.mrb[0].mxu0
    %v4026 = vadd.f32 0.0, %v4025
    %v4027 = vpop.f32.mrb[0].mxu0
    %4028 = vmatprep.mubr.f32.mxu0 0.0
    %4029 = vmatmul.mubr.f32.gmra.mrb[0].mxu0 %v3948
    %v4030 = vpop.f32.mrb[0].mxu0
    %v4031 = vadd.f32 0.0, %v4030
    %v4032 = vpop.f32.mrb[0].mxu0
    %4033 = vmatprep.mubr.f32.mxu0 0.0
    %4034 = vmatmul.mubr.f32.gmra.mrb[0].mxu0 %v3951
    %v4035 = vpop.f32.mrb[0].mxu0
    %v4036 = vadd.f32 0.0, %v4035
    %v4037 = vpop.f32.mrb[0].mxu0
    %4038 = vmatprep.mubr.f32.mxu0 0.0
    %4039 = vmatmul.mubr.f32.gmra.mrb[0].mxu0 %v3954
    %v4040 = vpop.f32.mrb[0].mxu0
    %v4041 = vadd.f32 0.0, %v4040
    %v4042 = vpop.f32.mrb[0].mxu0
    %4043 = vdwg.mxu0
    %v4044 = vadd.f32 %v3922, %v4026
    %v4045 = vadd.f32 %v3927, %v4031
    %v4046 = vadd.f32 %v3932, %v4036
    %v4047 = vadd.f32 %v3937, %v4041
    %v4048 = vld [vmem:[%s0 + $0x5e8] sm:$0xff]
    %v4049 = vld [vmem:[%s0 + $0x5f0] sm:$0xff]
    %v4050 = vld [vmem:[%s0 + $0x5f8] sm:$0xff]
    %v4051 = vld [vmem:[%s0 + $0x600] sm:$0x3f]
    %4053 = vset.pattern.permute.xlu0 0
    %4054 = vperm.xlu0 %4053, %v4048
    %v4055 = vpop.permute.xlu0 %4054
    %4058 = vset.pattern.permute.xlu0 0
    %4059 = vperm.xlu0 %4058, %v4049
    %v4060 = vpop.permute.xlu0 %4059
    %4063 = vset.pattern.permute.xlu0 0
    %4064 = vperm.xlu0 %4063, %v4050
    %v4065 = vpop.permute.xlu0 %4064
    %4068 = vset.pattern.permute.xlu0 0
    %4069 = vperm.xlu0 %4068, %v4051
    %v4070 = vpop.permute.xlu0 %4069
    %v4072 = vadd.f32 %v4044, %v4055
    %v4073 = vadd.f32 %v4045, %v4060
    %v4074 = vadd.f32 %v4046, %v4065
    %v4075 = vadd.f32 %v4047, %v4070
    %v4076 = vtanh.pop %v4072
    %v4077 = vtanh.pop %v4073
    %v4078 = vtanh.pop %v4074
    %v4079 = vtanh.pop %v4075
    %v4080 = vld [vmem:[%s0 + $0x608] sm:$0xff]
    %v4081 = vld [vmem:[%s0 + $0x610] sm:$0xff]
    %v4082 = vld [vmem:[%s0 + $0x618] sm:$0xff]
    %v4083 = vld [vmem:[%s0 + $0x620] sm:$0x3f]
    %v4084 = vld [vmem:[%s0 + $0x628] sm:$0xff]
    %v4085 = vld [vmem:[%s0 + $0x630] sm:$0xff]
    %v4086 = vld [vmem:[%s0 + $0x638] sm:$0xff]
    %v4087 = vld [vmem:[%s0 + $0x640] sm:$0x3f]
    %4089 = vset.pattern.permute.xlu0 0
    %4090 = vperm.xlu0 %4089, %v4084
    %v4091 = vpop.permute.xlu0 %4090
    %4094 = vset.pattern.permute.xlu0 0
    %4095 = vperm.xlu0 %4094, %v4085
    %v4096 = vpop.permute.xlu0 %4095
    %4099 = vset.pattern.permute.xlu0 0
    %4100 = vperm.xlu0 %4099, %v4086
    %v4101 = vpop.permute.xlu0 %4100
    %4104 = vset.pattern.permute.xlu0 0
    %4105 = vperm.xlu0 %4104, %v4087
    %v4106 = vpop.permute.xlu0 %4105
    %vm4108 = vcmask 244736
    %v4110 = vsel %vm4108, %v4080, 0
    %v4113 = vsel %vm4108, %v4081, 0
    %v4116 = vsel %vm4108, %v4082, 0
    %v4119 = vsel %vm4108, %v4083, 0
    %v4122 = vsel %vm3851, %v4079, 0
    %4124 = vmatprep.subr.mxu0 0.0
    %4125 = vmatpush1.msra.mxu0 %v4076
    %4126 = vmatprep.subr.mxu0 0.0
    %4127 = vmatpush1.msra.mxu0 %v4077
    %4128 = vmatprep.subr.mxu0 0.0
    %4129 = vmatpush1.msra.mxu0 %v4078
    %4130 = vmatprep.subr.mxu0 0.0
    %4131 = vmatpush1.msra.mxu0 %v4122
    %4132 = vmatprep.subr.mxu0 0.0
    %4133 = vmatpush1.msra.mxu0 0.0
    %4134 = vmatprep.subr.mxu0 0.0
    %4135 = vmatpush1.msra.mxu0 0.0
    %4136 = vmatprep.subr.mxu0 0.0
    %4137 = vmatpush1.msra.mxu0 0.0
    %4138 = vmatprep.subr.mxu0 0.0
    %4139 = vmatpush1.msra.mxu0 0.0
    %4140 = vmatprep.subr.mxu0 0.0
    %4141 = vmatpush1.msra.mxu0 0.0
    %4142 = vmatprep.subr.mxu0 0.0
    %4143 = vmatpush1.msra.mxu0 0.0
    %4144 = vmatprep.subr.mxu0 0.0
    %4145 = vmatpush1.msra.mxu0 0.0
    %4146 = vmatprep.subr.mxu0 0.0
    %4147 = vmatpush1.msra.mxu0 0.0
    %4148 = vmatprep.subr.mxu0 0.0
    %4149 = vmatpush1.msra.mxu0 0.0
    %4150 = vmatprep.subr.mxu0 0.0
    %4151 = vmatpush1.msra.mxu0 0.0
    %4152 = vmatprep.subr.mxu0 0.0
    %4153 = vmatpush1.msra.mxu0 0.0
    %4154 = vmatprep.subr.mxu0 0.0
    %4155 = vmatpush1.msra.mxu0 0.0
    %4156 = vmatprep.subr.mxu0 0.0
    %4157 = vmatpush1.msra.mxu0 0.0
    %4158 = vmatprep.subr.mxu0 0.0
    %4159 = vmatpush1.msra.mxu0 0.0
    %4160 = vmatprep.subr.mxu0 0.0
    %4161 = vmatpush1.msra.mxu0 0.0
    %4162 = vmatprep.subr.mxu0 0.0
    %4163 = vmatpush1.msra.mxu0 0.0
    %4164 = vmatprep.subr.mxu0 0.0
    %4165 = vmatpush1.msra.mxu0 0.0
    %4166 = vmatprep.subr.mxu0 0.0
    %4167 = vmatpush1.msra.mxu0 0.0
    %4168 = vmatprep.subr.mxu0 0.0
    %4169 = vmatpush1.msra.mxu0 0.0
    %4170 = vmatprep.subr.mxu0 0.0
    %4171 = vmatpush1.msra.mxu0 0.0
    %4172 = vmatprep.subr.mxu0 0.0
    %4173 = vmatpush1.msra.mxu0 0.0
    %4174 = vmatprep.subr.mxu0 0.0
    %4175 = vmatpush1.msra.mxu0 0.0
    %4176 = vmatprep.subr.mxu0 0.0
    %4177 = vmatpush1.msra.mxu0 0.0
    %4178 = vmatprep.subr.mxu0 0.0
    %4179 = vmatpush1.msra.mxu0 0.0
    %4180 = vmatprep.subr.mxu0 0.0
    %4181 = vmatpush1.msra.mxu0 0.0
    %4182 = vmatprep.subr.mxu0 0.0
    %4183 = vmatpush1.msra.mxu0 0.0
    %4184 = vmatprep.subr.mxu0 0.0
    %4185 = vmatpush1.msra.mxu0 0.0
    %4186 = vmatprep.subr.mxu0 0.0
    %4187 = vmatpush1.msra.mxu0 0.0
    %4188 = vmatprep.mubr.f32.mxu0 0.0
    %4189 = vmatmul.mubr.f32.gmra.mrb[0].mxu0 %v4110
    %v4190 = vpop.f32.mrb[0].mxu0
    %v4191 = vadd.f32 %v4091, %v4190
    %v4192 = vpop.f32.mrb[0].mxu0
    %4193 = vmatprep.mubr.f32.mxu0 0.0
    %4194 = vmatmul.mubr.f32.gmra.mrb[0].mxu0 %v4113
    %v4195 = vpop.f32.mrb[0].mxu0
    %v4196 = vadd.f32 %v4096, %v4195
    %v4197 = vpop.f32.mrb[0].mxu0
    %4198 = vmatprep.mubr.f32.mxu0 0.0
    %4199 = vmatmul.mubr.f32.gmra.mrb[0].mxu0 %v4116
    %v4200 = vpop.f32.mrb[0].mxu0
    %v4201 = vadd.f32 %v4101, %v4200
    %v4202 = vpop.f32.mrb[0].mxu0
    %4203 = vmatprep.mubr.f32.mxu0 0.0
    %4204 = vmatmul.mubr.f32.gmra.mrb[0].mxu0 %v4119
    %v4205 = vpop.f32.mrb[0].mxu0
    %v4206 = vadd.f32 %v4106, %v4205
    %v4207 = vpop.f32.mrb[0].mxu0
    %4208 = vdwg.mxu0
    %v4209 = vtanh.pop %v4191
    %v4210 = vtanh.pop %v4196
    %v4211 = vtanh.pop %v4201
    %v4212 = vtanh.pop %v4206
    %v4213 = vld [vmem:[%s0 + $0x648] sm:$0x1]
    %v4214 = vld [vmem:[%s0 + $0x650] sm:$0x1]
    %4216 = vset.pattern.permute.xlu0 0
    %4217 = vperm.xlu0 %4216, %v4214
    %v4218 = vpop.permute.xlu0 %4217
    %v4221 = vsel %vm4108, %v4213, 0
    %v4224 = vsel %vm3851, %v4212, 0
    %4226 = vmatprep.subr.mxu0 0.0
    %4227 = vmatpush1.msra.mxu0 %v4209
    %4228 = vmatprep.subr.mxu0 0.0
    %4229 = vmatpush1.msra.mxu0 %v4210
    %4230 = vmatprep.subr.mxu0 0.0
    %4231 = vmatpush1.msra.mxu0 %v4211
    %4232 = vmatprep.subr.mxu0 0.0
    %4233 = vmatpush1.msra.mxu0 %v4224
    %4234 = vmatprep.subr.mxu0 0.0
    %4235 = vmatpush1.msra.mxu0 0.0
    %4236 = vmatprep.subr.mxu0 0.0
    %4237 = vmatpush1.msra.mxu0 0.0
    %4238 = vmatprep.subr.mxu0 0.0
    %4239 = vmatpush1.msra.mxu0 0.0
    %4240 = vmatprep.subr.mxu0 0.0
    %4241 = vmatpush1.msra.mxu0 0.0
    %4242 = vmatprep.subr.mxu0 0.0
    %4243 = vmatpush1.msra.mxu0 0.0
    %4244 = vmatprep.subr.mxu0 0.0
    %4245 = vmatpush1.msra.mxu0 0.0
    %4246 = vmatprep.subr.mxu0 0.0
    %4247 = vmatpush1.msra.mxu0 0.0
    %4248 = vmatprep.subr.mxu0 0.0
    %4249 = vmatpush1.msra.mxu0 0.0
    %4250 = vmatprep.subr.mxu0 0.0
    %4251 = vmatpush1.msra.mxu0 0.0
    %4252 = vmatprep.subr.mxu0 0.0
    %4253 = vmatpush1.msra.mxu0 0.0
    %4254 = vmatprep.subr.mxu0 0.0
    %4255 = vmatpush1.msra.mxu0 0.0
    %4256 = vmatprep.subr.mxu0 0.0
    %4257 = vmatpush1.msra.mxu0 0.0
    %4258 = vmatprep.subr.mxu0 0.0
    %4259 = vmatpush1.msra.mxu0 0.0
    %4260 = vmatprep.subr.mxu0 0.0
    %4261 = vmatpush1.msra.mxu0 0.0
    %4262 = vmatprep.subr.mxu0 0.0
    %4263 = vmatpush1.msra.mxu0 0.0
    %4264 = vmatprep.subr.mxu0 0.0
    %4265 = vmatpush1.msra.mxu0 0.0
    %4266 = vmatprep.subr.mxu0 0.0
    %4267 = vmatpush1.msra.mxu0 0.0
    %4268 = vmatprep.subr.mxu0 0.0
    %4269 = vmatpush1.msra.mxu0 0.0
    %4270 = vmatprep.subr.mxu0 0.0
    %4271 = vmatpush1.msra.mxu0 0.0
    %4272 = vmatprep.subr.mxu0 0.0
    %4273 = vmatpush1.msra.mxu0 0.0
    %4274 = vmatprep.subr.mxu0 0.0
    %4275 = vmatpush1.msra.mxu0 0.0
    %4276 = vmatprep.subr.mxu0 0.0
    %4277 = vmatpush1.msra.mxu0 0.0
    %4278 = vmatprep.subr.mxu0 0.0
    %4279 = vmatpush1.msra.mxu0 0.0
    %4280 = vmatprep.subr.mxu0 0.0
    %4281 = vmatpush1.msra.mxu0 0.0
    %4282 = vmatprep.subr.mxu0 0.0
    %4283 = vmatpush1.msra.mxu0 0.0
    %4284 = vmatprep.subr.mxu0 0.0
    %4285 = vmatpush1.msra.mxu0 0.0
    %4286 = vmatprep.subr.mxu0 0.0
    %4287 = vmatpush1.msra.mxu0 0.0
    %4288 = vmatprep.subr.mxu0 0.0
    %4289 = vmatpush1.msra.mxu0 0.0
    %4290 = vmatprep.mubr.f32.mxu0 0.0
    %4291 = vmatmul.mubr.f32.gmra.mrb[0].mxu0 %v4221
    %v4292 = vpop.f32.mrb[0].mxu0
    %v4293 = vadd.f32 %v4218, %v4292
    %v4294 = vpop.f32.mrb[0].mxu0
    %4295 = vdwg.mxu0
    %v4296 = vld [vmem:[%s0 + $0x658] sm:$0xff]
    %v4297 = vld [vmem:[%s0 + $0x660] sm:$0xff]
    %v4298 = vld [vmem:[%s0 + $0x668] sm:$0xff]
    %v4299 = vld [vmem:[%s0 + $0x670] sm:$0x3f]
    %v4300 = vld [vmem:[%s0 + $0x678] sm:$0xff]
    %v4301 = vld [vmem:[%s0 + $0x680] sm:$0xff]
    %v4302 = vld [vmem:[%s0 + $0x688] sm:$0xff]
    %v4303 = vld [vmem:[%s0 + $0x690] sm:$0x3f]
    %v4305 = vsel %vm3737, %v4300, 0
    %v4308 = vsel %vm3737, %v4301, 0
    %v4311 = vsel %vm3737, %v4302, 0
    %v4314 = vsel %vm3737, %v4303, 0
    %4316 = vmatprep.subr.mxu0 0.0
    %4317 = vmatpush1.msra.mxu0 %v3751
    %4318 = vmatprep.subr.mxu0 0.0
    %4319 = vmatpush1.msra.mxu0 0.0
    %4320 = vmatprep.subr.mxu0 0.0
    %4321 = vmatpush1.msra.mxu0 0.0
    %4322 = vmatprep.subr.mxu0 0.0
    %4323 = vmatpush1.msra.mxu0 0.0
    %4324 = vmatprep.subr.mxu0 0.0
    %4325 = vmatpush1.msra.mxu0 0.0
    %4326 = vmatprep.subr.mxu0 0.0
    %4327 = vmatpush1.msra.mxu0 0.0
    %4328 = vmatprep.subr.mxu0 0.0
    %4329 = vmatpush1.msra.mxu0 0.0
    %4330 = vmatprep.subr.mxu0 0.0
    %4331 = vmatpush1.msra.mxu0 0.0
    %4332 = vmatprep.subr.mxu0 0.0
    %4333 = vmatpush1.msra.mxu0 0.0
    %4334 = vmatprep.subr.mxu0 0.0
    %4335 = vmatpush1.msra.mxu0 0.0
    %4336 = vmatprep.subr.mxu0 0.0
    %4337 = vmatpush1.msra.mxu0 0.0
    %4338 = vmatprep.subr.mxu0 0.0
    %4339 = vmatpush1.msra.mxu0 0.0
    %4340 = vmatprep.subr.mxu0 0.0
    %4341 = vmatpush1.msra.mxu0 0.0
    %4342 = vmatprep.subr.mxu0 0.0
    %4343 = vmatpush1.msra.mxu0 0.0
    %4344 = vmatprep.subr.mxu0 0.0
    %4345 = vmatpush1.msra.mxu0 0.0
    %4346 = vmatprep.subr.mxu0 0.0
    %4347 = vmatpush1.msra.mxu0 0.0
    %4348 = vmatprep.subr.mxu0 0.0
    %4349 = vmatpush1.msra.mxu0 0.0
    %4350 = vmatprep.subr.mxu0 0.0
    %4351 = vmatpush1.msra.mxu0 0.0
    %4352 = vmatprep.subr.mxu0 0.0
    %4353 = vmatpush1.msra.mxu0 0.0
    %4354 = vmatprep.subr.mxu0 0.0
    %4355 = vmatpush1.msra.mxu0 0.0
    %4356 = vmatprep.subr.mxu0 0.0
    %4357 = vmatpush1.msra.mxu0 0.0
    %4358 = vmatprep.subr.mxu0 0.0
    %4359 = vmatpush1.msra.mxu0 0.0
    %4360 = vmatprep.subr.mxu0 0.0
    %4361 = vmatpush1.msra.mxu0 0.0
    %4362 = vmatprep.subr.mxu0 0.0
    %4363 = vmatpush1.msra.mxu0 0.0
    %4364 = vmatprep.subr.mxu0 0.0
    %4365 = vmatpush1.msra.mxu0 0.0
    %4366 = vmatprep.subr.mxu0 0.0
    %4367 = vmatpush1.msra.mxu0 0.0
    %4368 = vmatprep.subr.mxu0 0.0
    %4369 = vmatpush1.msra.mxu0 0.0
    %4370 = vmatprep.subr.mxu0 0.0
    %4371 = vmatpush1.msra.mxu0 0.0
    %4372 = vmatprep.subr.mxu0 0.0
    %4373 = vmatpush1.msra.mxu0 0.0
    %4374 = vmatprep.subr.mxu0 0.0
    %4375 = vmatpush1.msra.mxu0 0.0
    %4376 = vmatprep.subr.mxu0 0.0
    %4377 = vmatpush1.msra.mxu0 0.0
    %4378 = vmatprep.subr.mxu0 0.0
    %4379 = vmatpush1.msra.mxu0 0.0
    %4380 = vmatprep.mubr.f32.mxu0 0.0
    %4381 = vmatmul.mubr.f32.gmra.mrb[0].mxu0 %v4305
    %v4382 = vpop.f32.mrb[0].mxu0
    %v4383 = vadd.f32 0.0, %v4382
    %v4384 = vpop.f32.mrb[0].mxu0
    %4385 = vmatprep.mubr.f32.mxu0 0.0
    %4386 = vmatmul.mubr.f32.gmra.mrb[0].mxu0 %v4308
    %v4387 = vpop.f32.mrb[0].mxu0
    %v4388 = vadd.f32 0.0, %v4387
    %v4389 = vpop.f32.mrb[0].mxu0
    %4390 = vmatprep.mubr.f32.mxu0 0.0
    %4391 = vmatmul.mubr.f32.gmra.mrb[0].mxu0 %v4311
    %v4392 = vpop.f32.mrb[0].mxu0
    %v4393 = vadd.f32 0.0, %v4392
    %v4394 = vpop.f32.mrb[0].mxu0
    %4395 = vmatprep.mubr.f32.mxu0 0.0
    %4396 = vmatmul.mubr.f32.gmra.mrb[0].mxu0 %v4314
    %v4397 = vpop.f32.mrb[0].mxu0
    %v4398 = vadd.f32 0.0, %v4397
    %v4399 = vpop.f32.mrb[0].mxu0
    %4400 = vdwg.mxu0
    %v4402 = vsel %vm3838, %v4296, 0
    %v4405 = vsel %vm3838, %v4297, 0
    %v4408 = vsel %vm3838, %v4298, 0
    %v4411 = vsel %vm3838, %v4299, 0
    %4413 = vmatprep.subr.mxu0 0.0
    %4414 = vmatpush1.msra.mxu0 %v3853
    %4415 = vmatprep.subr.mxu0 0.0
    %4416 = vmatpush1.msra.mxu0 0.0
    %4417 = vmatprep.subr.mxu0 0.0
    %4418 = vmatpush1.msra.mxu0 0.0
    %4419 = vmatprep.subr.mxu0 0.0
    %4420 = vmatpush1.msra.mxu0 0.0
    %4421 = vmatprep.subr.mxu0 0.0
    %4422 = vmatpush1.msra.mxu0 0.0
    %4423 = vmatprep.subr.mxu0 0.0
    %4424 = vmatpush1.msra.mxu0 0.0
    %4425 = vmatprep.subr.mxu0 0.0
    %4426 = vmatpush1.msra.mxu0 0.0
    %4427 = vmatprep.subr.mxu0 0.0
    %4428 = vmatpush1.msra.mxu0 0.0
    %4429 = vmatprep.subr.mxu0 0.0
    %4430 = vmatpush1.msra.mxu0 0.0
    %4431 = vmatprep.subr.mxu0 0.0
    %4432 = vmatpush1.msra.mxu0 0.0
    %4433 = vmatprep.subr.mxu0 0.0
    %4434 = vmatpush1.msra.mxu0 0.0
    %4435 = vmatprep.subr.mxu0 0.0
    %4436 = vmatpush1.msra.mxu0 0.0
    %4437 = vmatprep.subr.mxu0 0.0
    %4438 = vmatpush1.msra.mxu0 0.0
    %4439 = vmatprep.subr.mxu0 0.0
    %4440 = vmatpush1.msra.mxu0 0.0
    %4441 = vmatprep.subr.mxu0 0.0
    %4442 = vmatpush1.msra.mxu0 0.0
    %4443 = vmatprep.subr.mxu0 0.0
    %4444 = vmatpush1.msra.mxu0 0.0
    %4445 = vmatprep.subr.mxu0 0.0
    %4446 = vmatpush1.msra.mxu0 0.0
    %4447 = vmatprep.subr.mxu0 0.0
    %4448 = vmatpush1.msra.mxu0 0.0
    %4449 = vmatprep.subr.mxu0 0.0
    %4450 = vmatpush1.msra.mxu0 0.0
    %4451 = vmatprep.subr.mxu0 0.0
    %4452 = vmatpush1.msra.mxu0 0.0
    %4453 = vmatprep.subr.mxu0 0.0
    %4454 = vmatpush1.msra.mxu0 0.0
    %4455 = vmatprep.subr.mxu0 0.0
    %4456 = vmatpush1.msra.mxu0 0.0
    %4457 = vmatprep.subr.mxu0 0.0
    %4458 = vmatpush1.msra.mxu0 0.0
    %4459 = vmatprep.subr.mxu0 0.0
    %4460 = vmatpush1.msra.mxu0 0.0
    %4461 = vmatprep.subr.mxu0 0.0
    %4462 = vmatpush1.msra.mxu0 0.0
    %4463 = vmatprep.subr.mxu0 0.0
    %4464 = vmatpush1.msra.mxu0 0.0
    %4465 = vmatprep.subr.mxu0 0.0
    %4466 = vmatpush1.msra.mxu0 0.0
    %4467 = vmatprep.subr.mxu0 0.0
    %4468 = vmatpush1.msra.mxu0 0.0
    %4469 = vmatprep.subr.mxu0 0.0
    %4470 = vmatpush1.msra.mxu0 0.0
    %4471 = vmatprep.subr.mxu0 0.0
    %4472 = vmatpush1.msra.mxu0 0.0
    %4473 = vmatprep.subr.mxu0 0.0
    %4474 = vmatpush1.msra.mxu0 0.0
    %4475 = vmatprep.subr.mxu0 0.0
    %4476 = vmatpush1.msra.mxu0 0.0
    %4477 = vmatprep.mubr.f32.mxu0 0.0
    %4478 = vmatmul.mubr.f32.gmra.mrb[0].mxu0 %v4402
    %v4479 = vpop.f32.mrb[0].mxu0
    %v4480 = vadd.f32 %v4383, %v4479
    %v4481 = vpop.f32.mrb[0].mxu0
    %4482 = vmatprep.mubr.f32.mxu0 0.0
    %4483 = vmatmul.mubr.f32.gmra.mrb[0].mxu0 %v4405
    %v4484 = vpop.f32.mrb[0].mxu0
    %v4485 = vadd.f32 %v4388, %v4484
    %v4486 = vpop.f32.mrb[0].mxu0
    %4487 = vmatprep.mubr.f32.mxu0 0.0
    %4488 = vmatmul.mubr.f32.gmra.mrb[0].mxu0 %v4408
    %v4489 = vpop.f32.mrb[0].mxu0
    %v4490 = vadd.f32 %v4393, %v4489
    %v4491 = vpop.f32.mrb[0].mxu0
    %4492 = vmatprep.mubr.f32.mxu0 0.0
    %4493 = vmatmul.mubr.f32.gmra.mrb[0].mxu0 %v4411
    %v4494 = vpop.f32.mrb[0].mxu0
    %v4495 = vadd.f32 %v4398, %v4494
    %v4496 = vpop.f32.mrb[0].mxu0
    %4497 = vdwg.mxu0
    %v4498 = vld [vmem:[%s0 + $0x698] sm:$0xff]
    %v4499 = vld [vmem:[%s0 + $0x6a0] sm:$0xff]
    %v4500 = vld [vmem:[%s0 + $0x6a8] sm:$0xff]
    %v4501 = vld [vmem:[%s0 + $0x6b0] sm:$0x3f]
    %4503 = vset.pattern.permute.xlu0 0
    %4504 = vperm.xlu0 %4503, %v4498
    %v4505 = vpop.permute.xlu0 %4504
    %4508 = vset.pattern.permute.xlu0 0
    %4509 = vperm.xlu0 %4508, %v4499
    %v4510 = vpop.permute.xlu0 %4509
    %4513 = vset.pattern.permute.xlu0 0
    %4514 = vperm.xlu0 %4513, %v4500
    %v4515 = vpop.permute.xlu0 %4514
    %4518 = vset.pattern.permute.xlu0 0
    %4519 = vperm.xlu0 %4518, %v4501
    %v4520 = vpop.permute.xlu0 %4519
    %v4522 = vlaneseq
    %v4523 = vshrl.u32 %v4522, 7
    %v4524 = vsub.s32 0, %v4523
    %v4525 = vrot.slane %v4293, %v4524
    %v4526 = vmul.f32 %v4505, %v4525
    %v4527 = vmul.f32 %v4510, %v4525
    %v4528 = vmul.f32 %v4515, %v4525
    %v4529 = vmul.f32 %v4520, %v4525
    %v4530 = vadd.f32 %v4480, %v4526
    %v4531 = vadd.f32 %v4485, %v4527
    %v4532 = vadd.f32 %v4490, %v4528
    %v4533 = vadd.f32 %v4495, %v4529
    %v4534 = vld [vmem:[%s0 + $0x6b8] sm:$0xff]
    %v4535 = vld [vmem:[%s0 + $0x6c0] sm:$0xff]
    %v4536 = vld [vmem:[%s0 + $0x6c8] sm:$0xff]
    %v4537 = vld [vmem:[%s0 + $0x6d0] sm:$0x3f]
    %4539 = vset.pattern.permute.xlu0 0
    %4540 = vperm.xlu0 %4539, %v4534
    %v4541 = vpop.permute.xlu0 %4540
    %4544 = vset.pattern.permute.xlu0 0
    %4545 = vperm.xlu0 %4544, %v4535
    %v4546 = vpop.permute.xlu0 %4545
    %4549 = vset.pattern.permute.xlu0 0
    %4550 = vperm.xlu0 %4549, %v4536
    %v4551 = vpop.permute.xlu0 %4550
    %4554 = vset.pattern.permute.xlu0 0
    %4555 = vperm.xlu0 %4554, %v4537
    %v4556 = vpop.permute.xlu0 %4555
    %v4558 = vadd.f32 %v4530, %v4541
    %v4559 = vadd.f32 %v4531, %v4546
    %v4560 = vadd.f32 %v4532, %v4551
    %v4561 = vadd.f32 %v4533, %v4556
    %v4562 = vtanh.pop %v4558
    %v4563 = vtanh.pop %v4559
    %v4564 = vtanh.pop %v4560
    %v4565 = vtanh.pop %v4561
    %v4566 = vld [vmem:[%s0 + $0x6d8] sm:$0xff]
    %v4567 = vld [vmem:[%s0 + $0x6e0] sm:$0xff]
    %v4568 = vld [vmem:[%s0 + $0x6e8] sm:$0xff]
    %v4569 = vld [vmem:[%s0 + $0x6f0] sm:$0x3f]
    %v4570 = vld [vmem:[%s0 + $0x6f8] sm:$0xff]
    %v4571 = vld [vmem:[%s0 + $0x700] sm:$0xff]
    %v4572 = vld [vmem:[%s0 + $0x708] sm:$0xff]
    %v4573 = vld [vmem:[%s0 + $0x710] sm:$0x3f]
    %4575 = vset.pattern.permute.xlu0 0
    %4576 = vperm.xlu0 %4575, %v4570
    %v4577 = vpop.permute.xlu0 %4576
    %4580 = vset.pattern.permute.xlu0 0
    %4581 = vperm.xlu0 %4580, %v4571
    %v4582 = vpop.permute.xlu0 %4581
    %4585 = vset.pattern.permute.xlu0 0
    %4586 = vperm.xlu0 %4585, %v4572
    %v4587 = vpop.permute.xlu0 %4586
    %4590 = vset.pattern.permute.xlu0 0
    %4591 = vperm.xlu0 %4590, %v4573
    %v4592 = vpop.permute.xlu0 %4591
    %v4595 = vsel %vm4108, %v4566, 0
    %v4598 = vsel %vm4108, %v4567, 0
    %v4601 = vsel %vm4108, %v4568, 0
    %v4604 = vsel %vm4108, %v4569, 0
    %v4607 = vsel %vm3851, %v4565, 0
    %4609 = vmatprep.subr.mxu0 0.0
    %4610 = vmatpush1.msra.mxu0 %v4562
    %4611 = vmatprep.subr.mxu0 0.0
    %4612 = vmatpush1.msra.mxu0 %v4563
    %4613 = vmatprep.subr.mxu0 0.0
    %4614 = vmatpush1.msra.mxu0 %v4564
    %4615 = vmatprep.subr.mxu0 0.0
    %4616 = vmatpush1.msra.mxu0 %v4607
    %4617 = vmatprep.subr.mxu0 0.0
    %4618 = vmatpush1.msra.mxu0 0.0
    %4619 = vmatprep.subr.mxu0 0.0
    %4620 = vmatpush1.msra.mxu0 0.0
    %4621 = vmatprep.subr.mxu0 0.0
    %4622 = vmatpush1.msra.mxu0 0.0
    %4623 = vmatprep.subr.mxu0 0.0
    %4624 = vmatpush1.msra.mxu0 0.0
    %4625 = vmatprep.subr.mxu0 0.0
    %4626 = vmatpush1.msra.mxu0 0.0
    %4627 = vmatprep.subr.mxu0 0.0
    %4628 = vmatpush1.msra.mxu0 0.0
    %4629 = vmatprep.subr.mxu0 0.0
    %4630 = vmatpush1.msra.mxu0 0.0
    %4631 = vmatprep.subr.mxu0 0.0
    %4632 = vmatpush1.msra.mxu0 0.0
    %4633 = vmatprep.subr.mxu0 0.0
    %4634 = vmatpush1.msra.mxu0 0.0
    %4635 = vmatprep.subr.mxu0 0.0
    %4636 = vmatpush1.msra.mxu0 0.0
    %4637 = vmatprep.subr.mxu0 0.0
    %4638 = vmatpush1.msra.mxu0 0.0
    %4639 = vmatprep.subr.mxu0 0.0
    %4640 = vmatpush1.msra.mxu0 0.0
    %4641 = vmatprep.subr.mxu0 0.0
    %4642 = vmatpush1.msra.mxu0 0.0
    %4643 = vmatprep.subr.mxu0 0.0
    %4644 = vmatpush1.msra.mxu0 0.0
    %4645 = vmatprep.subr.mxu0 0.0
    %4646 = vmatpush1.msra.mxu0 0.0
    %4647 = vmatprep.subr.mxu0 0.0
    %4648 = vmatpush1.msra.mxu0 0.0
    %4649 = vmatprep.subr.mxu0 0.0
    %4650 = vmatpush1.msra.mxu0 0.0
    %4651 = vmatprep.subr.mxu0 0.0
    %4652 = vmatpush1.msra.mxu0 0.0
    %4653 = vmatprep.subr.mxu0 0.0
    %4654 = vmatpush1.msra.mxu0 0.0
    %4655 = vmatprep.subr.mxu0 0.0
    %4656 = vmatpush1.msra.mxu0 0.0
    %4657 = vmatprep.subr.mxu0 0.0
    %4658 = vmatpush1.msra.mxu0 0.0
    %4659 = vmatprep.subr.mxu0 0.0
    %4660 = vmatpush1.msra.mxu0 0.0
    %4661 = vmatprep.subr.mxu0 0.0
    %4662 = vmatpush1.msra.mxu0 0.0
    %4663 = vmatprep.subr.mxu0 0.0
    %4664 = vmatpush1.msra.mxu0 0.0
    %4665 = vmatprep.subr.mxu0 0.0
    %4666 = vmatpush1.msra.mxu0 0.0
    %4667 = vmatprep.subr.mxu0 0.0
    %4668 = vmatpush1.msra.mxu0 0.0
    %4669 = vmatprep.subr.mxu0 0.0
    %4670 = vmatpush1.msra.mxu0 0.0
    %4671 = vmatprep.subr.mxu0 0.0
    %4672 = vmatpush1.msra.mxu0 0.0
    %4673 = vmatprep.mubr.f32.mxu0 0.0
    %4674 = vmatmul.mubr.f32.gmra.mrb[0].mxu0 %v4595
    %v4675 = vpop.f32.mrb[0].mxu0
    %v4676 = vadd.f32 %v4577, %v4675
    %v4677 = vpop.f32.mrb[0].mxu0
    %4678 = vmatprep.mubr.f32.mxu0 0.0
    %4679 = vmatmul.mubr.f32.gmra.mrb[0].mxu0 %v4598
    %v4680 = vpop.f32.mrb[0].mxu0
    %v4681 = vadd.f32 %v4582, %v4680
    %v4682 = vpop.f32.mrb[0].mxu0
    %4683 = vmatprep.mubr.f32.mxu0 0.0
    %4684 = vmatmul.mubr.f32.gmra.mrb[0].mxu0 %v4601
    %v4685 = vpop.f32.mrb[0].mxu0
    %v4686 = vadd.f32 %v4587, %v4685
    %v4687 = vpop.f32.mrb[0].mxu0
    %4688 = vmatprep.mubr.f32.mxu0 0.0
    %4689 = vmatmul.mubr.f32.gmra.mrb[0].mxu0 %v4604
    %v4690 = vpop.f32.mrb[0].mxu0
    %v4691 = vadd.f32 %v4592, %v4690
    %v4692 = vpop.f32.mrb[0].mxu0
    %4693 = vdwg.mxu0
    %v4694 = vtanh.pop %v4676
    %v4695 = vtanh.pop %v4681
    %v4696 = vtanh.pop %v4686
    %v4697 = vtanh.pop %v4691
    %v4698 = vld [vmem:[%s0 + $0x718] sm:$0x7f]
    %v4699 = vld [vmem:[%s0 + $0x720] sm:$0x7f]
    %4701 = vset.pattern.permute.xlu0 0
    %4702 = vperm.xlu0 %4701, %v4699
    %v4703 = vpop.permute.xlu0 %4702
    %v4706 = vsel %vm4108, %v4698, 0
    %v4709 = vsel %vm3851, %v4697, 0
    %4711 = vmatprep.subr.mxu0 0.0
    %4712 = vmatpush1.msra.mxu0 %v4694
    %4713 = vmatprep.subr.mxu0 0.0
    %4714 = vmatpush1.msra.mxu0 %v4695
    %4715 = vmatprep.subr.mxu0 0.0
    %4716 = vmatpush1.msra.mxu0 %v4696
    %4717 = vmatprep.subr.mxu0 0.0
    %4718 = vmatpush1.msra.mxu0 %v4709
    %4719 = vmatprep.subr.mxu0 0.0
    %4720 = vmatpush1.msra.mxu0 0.0
    %4721 = vmatprep.subr.mxu0 0.0
    %4722 = vmatpush1.msra.mxu0 0.0
    %4723 = vmatprep.subr.mxu0 0.0
    %4724 = vmatpush1.msra.mxu0 0.0
    %4725 = vmatprep.subr.mxu0 0.0
    %4726 = vmatpush1.msra.mxu0 0.0
    %4727 = vmatprep.subr.mxu0 0.0
    %4728 = vmatpush1.msra.mxu0 0.0
    %4729 = vmatprep.subr.mxu0 0.0
    %4730 = vmatpush1.msra.mxu0 0.0
    %4731 = vmatprep.subr.mxu0 0.0
    %4732 = vmatpush1.msra.mxu0 0.0
    %4733 = vmatprep.subr.mxu0 0.0
    %4734 = vmatpush1.msra.mxu0 0.0
    %4735 = vmatprep.subr.mxu0 0.0
    %4736 = vmatpush1.msra.mxu0 0.0
    %4737 = vmatprep.subr.mxu0 0.0
    %4738 = vmatpush1.msra.mxu0 0.0
    %4739 = vmatprep.subr.mxu0 0.0
    %4740 = vmatpush1.msra.mxu0 0.0
    %4741 = vmatprep.subr.mxu0 0.0
    %4742 = vmatpush1.msra.mxu0 0.0
    %4743 = vmatprep.subr.mxu0 0.0
    %4744 = vmatpush1.msra.mxu0 0.0
    %4745 = vmatprep.subr.mxu0 0.0
    %4746 = vmatpush1.msra.mxu0 0.0
    %4747 = vmatprep.subr.mxu0 0.0
    %4748 = vmatpush1.msra.mxu0 0.0
    %4749 = vmatprep.subr.mxu0 0.0
    %4750 = vmatpush1.msra.mxu0 0.0
    %4751 = vmatprep.subr.mxu0 0.0
    %4752 = vmatpush1.msra.mxu0 0.0
    %4753 = vmatprep.subr.mxu0 0.0
    %4754 = vmatpush1.msra.mxu0 0.0
    %4755 = vmatprep.subr.mxu0 0.0
    %4756 = vmatpush1.msra.mxu0 0.0
    %4757 = vmatprep.subr.mxu0 0.0
    %4758 = vmatpush1.msra.mxu0 0.0
    %4759 = vmatprep.subr.mxu0 0.0
    %4760 = vmatpush1.msra.mxu0 0.0
    %4761 = vmatprep.subr.mxu0 0.0
    %4762 = vmatpush1.msra.mxu0 0.0
    %4763 = vmatprep.subr.mxu0 0.0
    %4764 = vmatpush1.msra.mxu0 0.0
    %4765 = vmatprep.subr.mxu0 0.0
    %4766 = vmatpush1.msra.mxu0 0.0
    %4767 = vmatprep.subr.mxu0 0.0
    %4768 = vmatpush1.msra.mxu0 0.0
    %4769 = vmatprep.subr.mxu0 0.0
    %4770 = vmatpush1.msra.mxu0 0.0
    %4771 = vmatprep.subr.mxu0 0.0
    %4772 = vmatpush1.msra.mxu0 0.0
    %4773 = vmatprep.subr.mxu0 0.0
    %4774 = vmatpush1.msra.mxu0 0.0
    %4775 = vmatprep.mubr.f32.mxu0 0.0
    %4776 = vmatmul.mubr.f32.gmra.mrb[0].mxu0 %v4706
    %v4777 = vpop.f32.mrb[0].mxu0
    %v4778 = vadd.f32 %v4703, %v4777
    %v4779 = vpop.f32.mrb[0].mxu0
    %4780 = vdwg.mxu0
    %v4781 = vsub.f32 %v4778, %v3728
    %v4782 = vmul.f32 %v4781, %v4781
    %vm4783 = vcmask 14336
    %v4784 = vsel %vm4783, %v4782, 0.0
    %4785 = vadd.xlane.f32.xlu0 %v4784
    %v4786 = vpop.xlane.xlu0 %4785
    %v4787 = vsel %vm1623, %v4786, 0.0
    %v4788 = vrot.slane %v4787, 4
    %v4789 = vadd.f32 %v4787, %v4788
    %v4790 = vrot.slane %v4789, 2
    %v4791 = vadd.f32 %v4789, %v4790
    %v4792 = vrot.slane %v4791, 1
    %v4793 = vadd.f32 %v4791, %v4792
    %v4794 = vmul.f32 %v4793, 0.071428575
    %vm4795 = vcmask 0
    %4796 = vst.msk [vmem:[#allocation2] sm:$0x1] %vm4795, %v4794
    // Predicated region
    $region6: #{cae_forward.1} parent=1 // pred_check
      _
    $region7: #{cae_forward.1} parent=1 // pred_check_branch
      %4798 = sbr.rel (0) target = $region9
    $region8: #{cae_forward.1} parent=1 // pred_region
      %s4800 = ssub.s32 16, 16
      %4801 = vsyncadd [#allocation3], %s4800
      %s4803 = sshll.u32 [#allocation2], 4
      %s4804 = int_to_ptr.vmem [resolvable:$true] %s4803
      %4806 = dma.vmem_to_hbm [thread:$0]  %s4804, 16, %s1, [#allocation3]
    $region9: #{cae_forward.1} parent=1 // pred_fallthru
      _
    // Predicated region
    $region10: #{cae_forward.1} parent=1 // pred_check
      _
    $region11: #{cae_forward.1} parent=1 // pred_check_branch
      %4808 = sbr.rel (0) target = $region13
    $region12: #{cae_forward.1} parent=1 // pred_region
      %4809 = dma.done [#allocation3], 16
    $region13: #{cae_forward.1} parent=1 // pred_fallthru
      _
    %4810 = vsyncpa [#allocation3], 1

</llo_original>
